<compile_context>
chip_gen: v7x
topology: tpu7x:2x2x1
jax: 0.10.0
libtpu: 0.0.40
codegen_flags: <defaults>
</compile_context>

<pallas_src>
import jax
import jax.numpy as jnp
from jax import lax
from jax.experimental import pallas as pl
from jax.experimental.pallas import tpu as pltpu


def _round_up(x, m):
    return (x + m - 1) // m * m


def _make_kernel(tile_h, Wp, C1p, C2p, n_row_tiles):
    TH = tile_h
    ROWS_IN = TH + 2          # input rows per output row-tile (1-row halo each side)
    FLAT = (TH + 3) * Wp      # flattened scratch rows (one spare raster row)

    def kernel(x_hbm, w_ref, b_ref, o_ref, buf, sem):
        n = pl.program_id(0)
        i = pl.program_id(1)
        slot = i % 2

        def fetch(row_tile, dst_slot):
            pltpu.make_async_copy(
                x_hbm.at[n, pl.ds(row_tile * TH, ROWS_IN)],
                buf.at[dst_slot, pl.ds(0, ROWS_IN)],
                sem.at[dst_slot],
            ).start()

        # Prime the pipeline at the first row tile of each image and give the
        # spare raster row (only ever feeds discarded columns) defined values.
        @pl.when(i == 0)
        def _():
            fetch(0, 0)
            buf[0, ROWS_IN, :, :] = jnp.zeros((Wp, C1p), dtype=buf.dtype)
            buf[1, ROWS_IN, :, :] = jnp.zeros((Wp, C1p), dtype=buf.dtype)

        # Wait for this tile's halo window.
        pltpu.make_async_copy(
            x_hbm.at[n, pl.ds(0, ROWS_IN)],
            buf.at[slot, pl.ds(0, ROWS_IN)],
            sem.at[slot],
        ).wait()

        # Prefetch the next row tile of the same image while we compute.
        @pl.when(i + 1 < n_row_tiles)
        def _():
            fetch(i + 1, 1 - slot)

        # Flatten (rows, width, Cin) -> (rows*width, Cin); Wp is a multiple of
        # 16 so this is layout-friendly.  Tap (dy,dx) of the 3x3 conv is then a
        # constant flat row offset dy*Wp+dx.
        x0 = buf[slot].reshape(FLAT, C1p)

        acc = jnp.zeros((TH * Wp, C2p), dtype=jnp.float32)
        for dy in range(3):
            for dx in range(3):
                off = dy * Wp + dx
                acc += jnp.dot(x0[off:off + TH * Wp, :],
                               w_ref[dy * 3 + dx],
                               preferred_element_type=jnp.float32)

        acc = acc + b_ref[...]                 # combined folded-BN bias, (1, C2p)
        y = acc * jax.nn.sigmoid(acc)          # SiLU
        o_ref[...] = y.reshape(1, TH, Wp, C2p).astype(o_ref.dtype)

    return kernel


def _fold_bn(weight_oihw, gamma, beta, mean, var, eps=1e-5):
    """Fold eval-mode BatchNorm into conv weight/bias.  weight: (O, I, kh, kw)."""
    std = jnp.sqrt(var + eps)
    scale = gamma / std
    w = weight_oihw * scale[:, None, None, None]
    b = beta - mean * scale
    return w, b


def repconv_forward(x_nchw, params, tile_h=8):
    """RepConv forward (k=3, s=1, p=1, g=1, d=1, act=SiLU, bn=False).

    x_nchw: (N, C1, H, W) float32 -> (N, C2, H, W) float32.
    """
    (w3, g3, b3, m3, v3), (w1, g1, b1, m1, v1) = params
    N, C1, H, W = x_nchw.shape
    C2 = w3.shape[0]
    assert w3.shape == (C2, C1, 3, 3) and w1.shape == (C2, C1, 1, 1)
    # TODO(synk): groups>1, stride>1 and the bn=True identity branch of RepConv
    # are not handled by this kernel (defaults of the module are covered).

    # ---- fold BN, then fold the 1x1 branch into the 3x3 centre tap (exact) ----
    w3f, bias3 = _fold_bn(w3, g3, b3, m3, v3)
    w1f, bias1 = _fold_bn(w1, g1, b1, m1, v1)
    w3f = w3f.at[:, :, 1, 1].add(w1f[:, :, 0, 0])
    bias = bias3 + bias1

    # ---- lane-friendly padded sizes ----
    TH = max(1, min(tile_h, H))
    Hp = _round_up(H, TH)             # padded output height (row tiles)
    n_row = Hp // TH
    Wp = _round_up(W + 2, 16)         # raster width: 1+1 halo cols + bf16 sublane pack
    C1p = _round_up(C1, 128)          # MXU K depth / lane-dense loads
    C2p = _round_up(C2, 128)          # lane-dense (unmasked) output stores

    # weights: (O,I,3,3) -> tap-major (9, C1p, C2p) bf16; combined bias (1, C2p) f32
    wk = jnp.transpose(w3f, (2, 3, 1, 0)).reshape(9, C1, C2)
    wk = jnp.pad(wk, ((0, 0), (0, C1p - C1), (0, C2p - C2))).astype(jnp.bfloat16)
    bk = jnp.pad(bias, (0, C2p - C2)).reshape(1, C2p).astype(jnp.float32)

    # input: NCHW -> NHWC, zero halo + alignment padding, bf16 (halves DMA bytes)
    x_nhwc = jnp.transpose(x_nchw, (0, 2, 3, 1))
    x_pad = jnp.pad(
        x_nhwc,
        ((0, 0), (1, Hp - H + 1), (1, Wp - W - 1), (0, C1p - C1)),
    ).astype(jnp.bfloat16)
    # TODO(synk): keeping the surrounding model NHWC end-to-end would remove
    # these boundary transpose/pad HBM round trips entirely.

    kernel = _make_kernel(TH, Wp, C1p, C2p, n_row)

    out = pl.pallas_call(
        kernel,
        out_shape=jax.ShapeDtypeStruct((N, Hp, Wp, C2p), jnp.float32),
        grid_spec=pltpu.PrefetchScalarGridSpec(
            num_scalar_prefetch=0,
            grid=(N, n_row),
            in_specs=[
                pl.BlockSpec(memory_space=pl.ANY),                   # x stays in HBM
                pl.BlockSpec((9, C1p, C2p), lambda n, i: (0, 0, 0)),  # folded weights
                pl.BlockSpec((1, C2p), lambda n, i: (0, 0)),          # combined bias
            ],
            out_specs=pl.BlockSpec((1, TH, Wp, C2p), lambda n, i: (n, i, 0, 0)),
            scratch_shapes=[
                pltpu.VMEM((2, TH + 3, Wp, C1p), jnp.bfloat16),  # double-buffered halo window
                pltpu.SemaphoreType.DMA((2,)),
            ],
        ),
        compiler_params=pltpu.CompilerParams(
            dimension_semantics=("parallel", "arbitrary"),
        ),
    )(x_pad, wk, bk)

    # strip alignment/channel padding, back to PyTorch NCHW convention
    return jnp.transpose(out[:, :H, :W, :C2], (0, 3, 1, 2))


def repconv_reference(x_nchw, params, eps=1e-5):
    """Pure-JAX reference matching RepConv.forward (bn=False, eval-mode BN)."""
    (w3, g3, b3, m3, v3), (w1, g1, b1, m1, v1) = params

    def bn(y, g, b, m, v):
        scale = (g / jnp.sqrt(v + eps))[None, :, None, None]
        return (y - m[None, :, None, None]) * scale + b[None, :, None, None]

    y3 = lax.conv_general_dilated(x_nchw, w3, (1, 1), ((1, 1), (1, 1)),
                                  dimension_numbers=("NCHW", "OIHW", "NCHW"))
    y1 = lax.conv_general_dilated(x_nchw, w1, (1, 1), ((0, 0), (0, 0)),
                                  dimension_numbers=("NCHW", "OIHW", "NCHW"))
    s = bn(y3, g3, b3, m3, v3) + bn(y1, g1, b1, m1, v1)
    return s * jax.nn.sigmoid(s)


def init_repconv_params(key, c1, c2):
    """Deterministic parameter init matching RepConv.__init__ shapes (bn=False)."""
    keys = jax.random.split(key, 10)
    w3 = jax.random.normal(keys[0], (c2, c1, 3, 3), jnp.float32) * 0.1
    g3 = 1.0 + 0.1 * jax.random.normal(keys[1], (c2,), jnp.float32)
    b3 = 0.1 * jax.random.normal(keys[2], (c2,), jnp.float32)
    m3 = 0.05 * jax.random.normal(keys[3], (c2,), jnp.float32)
    v3 = 1.0 + 0.1 * jax.random.uniform(keys[4], (c2,), jnp.float32)
    w1 = jax.random.normal(keys[5], (c2, c1, 1, 1), jnp.float32) * 0.1
    g1 = 1.0 + 0.1 * jax.random.normal(keys[6], (c2,), jnp.float32)
    b1 = 0.1 * jax.random.normal(keys[7], (c2,), jnp.float32)
    m1 = 0.05 * jax.random.normal(keys[8], (c2,), jnp.float32)
    v1 = 1.0 + 0.1 * jax.random.uniform(keys[9], (c2,), jnp.float32)
    return (w3, g3, b3, m3, v3), (w1, g1, b1, m1, v1)


if __name__ == "__main__":
    key = jax.random.PRNGKey(0)
    k_x, k_p = jax.random.split(key)

    N, C1, C2, H, W = 2, 4, 8, 16, 16
    x = jax.random.normal(k_x, (N, C1, H, W), jnp.float32)   # NCHW, PyTorch convention
    params = init_repconv_params(k_p, C1, C2)

    y = repconv_forward(x, params)
    jax.block_until_ready(y)

    assert y.shape == (N, C2, H, W)
    assert bool(jnp.all(jnp.isfinite(y)))

    # Loose tolerance: kernel uses bf16 matmul operands with f32 accumulation.
    y_ref = repconv_reference(x, params)
    err = float(jnp.max(jnp.abs(y - y_ref)))
    assert err < 0.1, f"max abs error vs reference: {err}"

    print("KERNEL_OK")
</pallas_src>

<mosaic_0001>
module attributes {stable_mosaic.version = 11 : i64} {
  func.func @kernel(%arg0: i32, %arg1: i32, %arg2: memref<2x18x32x128xbf16, #tpu.memory_space<any>>, %arg3: memref<9x128x128xbf16, #tpu.memory_space<vmem>>, %arg4: memref<1x128xf32, #tpu.memory_space<vmem>>, %arg5: memref<1x8x32x128xf32, #tpu.memory_space<vmem>>, %arg6: memref<2x11x32x128xbf16, #tpu.memory_space<vmem>>, %arg7: memref<2x!tpu.dma_semaphore, #tpu.memory_space<semaphore_mem>>) attributes {dimension_semantics = [#tpu.dimension_semantics<parallel>, #tpu.dimension_semantics<arbitrary>], iteration_bounds = array<i64: 2, 2>, scalar_prefetch = 0 : i64, scratch_operands = 2 : i64, tpu.core_type = #tpu.core_type<tc>, window_params = [{}, {pipeline_mode = #tpu.pipeline_mode<synchronous>, transform_indices = @transform_1, window_bounds = array<i64: 9, 128, 128>}, {pipeline_mode = #tpu.pipeline_mode<synchronous>, transform_indices = @transform_2, window_bounds = array<i64: 1, 128>}, {transform_indices = @transform_3, window_bounds = array<i64: 1, 8, 32, 128>}]} {
    %c2_i32 = arith.constant 2 : i32
    %c0_i32 = arith.constant 0 : i32
    %0 = arith.cmpi eq, %c2_i32, %c0_i32 : i32
    %c1_i32 = arith.constant 1 : i32
    %1 = arith.select %0, %c1_i32, %c2_i32 : i32
    %2 = arith.remsi %arg1, %1 : i32
    %c0_i32_0 = arith.constant 0 : i32
    %3 = arith.cmpi ne, %2, %c0_i32_0 : i32
    %c0_i32_1 = arith.constant 0 : i32
    %4 = arith.cmpi slt, %2, %c0_i32_1 : i32
    %c0_i32_2 = arith.constant 0 : i32
    %5 = arith.cmpi slt, %1, %c0_i32_2 : i32
    %6 = arith.xori %4, %5 : i1
    %7 = arith.andi %6, %3 : i1
    %8 = arith.addi %2, %1 : i32
    %9 = arith.select %7, %8, %2 : i32
    %c0_i32_3 = arith.constant 0 : i32
    %10 = arith.cmpi eq, %arg1, %c0_i32_3 : i32
    %11 = arith.extui %10 : i1 to i32
    %c0_i32_4 = arith.constant 0 : i32
    %12 = arith.cmpi ne, %11, %c0_i32_4 : i32
    scf.if %12 {
      %c0_i32_51 = arith.constant 0 : i32
      %c0_i32_52 = arith.constant 0 : i32
      %c0_i32_53 = arith.constant 0 : i32
      %c0_i32_54 = arith.constant 0 : i32
      %c0_i32_55 = arith.constant 0 : i32
      %84 = tpu.memref_slice %arg2[%arg0, %c0_i32_53, %c0_i32_54, %c0_i32_55] : memref<2x18x32x128xbf16, #tpu.memory_space<any>> -> memref<1x10x32x128xbf16, #tpu.memory_space<any>>
      %85 = tpu.memref_squeeze %84 : memref<1x10x32x128xbf16, #tpu.memory_space<any>> -> memref<10x32x128xbf16, #tpu.memory_space<any>>
      %c0_i32_56 = arith.constant 0 : i32
      %c0_i32_57 = arith.constant 0 : i32
      %c0_i32_58 = arith.constant 0 : i32
      %86 = tpu.memref_slice %arg6[%c0_i32_51, %c0_i32_56, %c0_i32_57, %c0_i32_58] : memref<2x11x32x128xbf16, #tpu.memory_space<vmem>> -> memref<1x10x32x128xbf16, #tpu.memory_space<vmem>>
      %87 = tpu.memref_squeeze %86 : memref<1x10x32x128xbf16, #tpu.memory_space<vmem>> -> memref<10x32x128xbf16, #tpu.memory_space<vmem>>
      %88 = tpu.memref_slice %arg7[%c0_i32_52] : memref<2x!tpu.dma_semaphore, #tpu.memory_space<semaphore_mem>> -> memref<1x!tpu.dma_semaphore, #tpu.memory_space<semaphore_mem>>
      %89 = tpu.memref_squeeze %88 : memref<1x!tpu.dma_semaphore, #tpu.memory_space<semaphore_mem>> -> memref<!tpu.dma_semaphore, #tpu.memory_space<semaphore_mem>>
      tpu.enqueue_dma source(%85 : memref<10x32x128xbf16, #tpu.memory_space<any>>) target(%87 : memref<10x32x128xbf16, #tpu.memory_space<vmem>>) target_semaphore(%89 : memref<!tpu.dma_semaphore, #tpu.memory_space<semaphore_mem>>)
      %cst_59 = arith.constant 0.000000e+00 : bf16
      %90 = vector.broadcast %cst_59 : bf16 to vector<32x128xbf16>
      %c0_60 = arith.constant 0 : index
      %c10 = arith.constant 10 : index
      %c0_61 = arith.constant 0 : index
      %c0_62 = arith.constant 0 : index
      %91 = vector.load %arg6[%c0_60, %c10, %c0_61, %c0_62] : memref<2x11x32x128xbf16, #tpu.memory_space<vmem>>, vector<1x1x32x128xbf16>
      %92 = vector.shape_cast %91 : vector<1x1x32x128xbf16> to vector<32x128xbf16>
      %93 = vector.shape_cast %90 : vector<32x128xbf16> to vector<1x1x32x128xbf16>
      tpu.vector_store %arg6[%c0_60, %c10, %c0_61, %c0_62], %93 {strides = array<i32>} : memref<2x11x32x128xbf16, #tpu.memory_space<vmem>>, vector<1x1x32x128xbf16>,
      %cst_63 = arith.constant 0.000000e+00 : bf16
      %94 = vector.broadcast %cst_63 : bf16 to vector<32x128xbf16>
      %c1_64 = arith.constant 1 : index
      %c10_65 = arith.constant 10 : index
      %c0_66 = arith.constant 0 : index
      %c0_67 = arith.constant 0 : index
      %95 = vector.load %arg6[%c1_64, %c10_65, %c0_66, %c0_67] : memref<2x11x32x128xbf16, #tpu.memory_space<vmem>>, vector<1x1x32x128xbf16>
      %96 = vector.shape_cast %95 : vector<1x1x32x128xbf16> to vector<32x128xbf16>
      %97 = vector.shape_cast %94 : vector<32x128xbf16> to vector<1x1x32x128xbf16>
      tpu.vector_store %arg6[%c1_64, %c10_65, %c0_66, %c0_67], %97 {strides = array<i32>} : memref<2x11x32x128xbf16, #tpu.memory_space<vmem>>, vector<1x1x32x128xbf16>,
    } else {
    }
    %c0_i32_5 = arith.constant 0 : i32
    %c0_i32_6 = arith.constant 0 : i32
    %c0_i32_7 = arith.constant 0 : i32
    %13 = tpu.memref_slice %arg2[%arg0, %c0_i32_5, %c0_i32_6, %c0_i32_7] : memref<2x18x32x128xbf16, #tpu.memory_space<any>> -> memref<1x10x32x128xbf16, #tpu.memory_space<any>>
    %14 = tpu.memref_squeeze %13 : memref<1x10x32x128xbf16, #tpu.memory_space<any>> -> memref<10x32x128xbf16, #tpu.memory_space<any>>
    %c0_i32_8 = arith.constant 0 : i32
    %c0_i32_9 = arith.constant 0 : i32
    %c0_i32_10 = arith.constant 0 : i32
    %15 = tpu.memref_slice %arg6[%9, %c0_i32_8, %c0_i32_9, %c0_i32_10] : memref<2x11x32x128xbf16, #tpu.memory_space<vmem>> -> memref<1x10x32x128xbf16, #tpu.memory_space<vmem>>
    %16 = tpu.memref_squeeze %15 : memref<1x10x32x128xbf16, #tpu.memory_space<vmem>> -> memref<10x32x128xbf16, #tpu.memory_space<vmem>>
    %17 = tpu.memref_slice %arg7[%9] : memref<2x!tpu.dma_semaphore, #tpu.memory_space<semaphore_mem>> -> memref<1x!tpu.dma_semaphore, #tpu.memory_space<semaphore_mem>>
    %18 = tpu.memref_squeeze %17 : memref<1x!tpu.dma_semaphore, #tpu.memory_space<semaphore_mem>> -> memref<!tpu.dma_semaphore, #tpu.memory_space<semaphore_mem>>
    tpu.wait_dma2 semaphore(%18 : memref<!tpu.dma_semaphore, #tpu.memory_space<semaphore_mem>>) src(%14 : memref<10x32x128xbf16, #tpu.memory_space<any>>) dst(%16 : memref<10x32x128xbf16, #tpu.memory_space<vmem>>)
    %c1_i32_11 = arith.constant 1 : i32
    %19 = arith.addi %arg1, %c1_i32_11 : i32
    %c2_i32_12 = arith.constant 2 : i32
    %20 = arith.cmpi slt, %19, %c2_i32_12 : i32
    %21 = arith.extui %20 : i1 to i32
    %c0_i32_13 = arith.constant 0 : i32
    %22 = arith.cmpi ne, %21, %c0_i32_13 : i32
    scf.if %22 {
      %c1_i32_51 = arith.constant 1 : i32
      %84 = arith.addi %arg1, %c1_i32_51 : i32
      %c1_i32_52 = arith.constant 1 : i32
      %85 = arith.subi %c1_i32_52, %9 : i32
      %c8_i32 = arith.constant 8 : i32
      %86 = arith.muli %84, %c8_i32 : i32
      %c0_i32_53 = arith.constant 0 : i32
      %c0_i32_54 = arith.constant 0 : i32
      %87 = tpu.memref_slice %arg2[%arg0, %86, %c0_i32_53, %c0_i32_54] : memref<2x18x32x128xbf16, #tpu.memory_space<any>> -> memref<1x10x32x128xbf16, #tpu.memory_space<any>>
      %88 = tpu.memref_squeeze %87 : memref<1x10x32x128xbf16, #tpu.memory_space<any>> -> memref<10x32x128xbf16, #tpu.memory_space<any>>
      %c0_i32_55 = arith.constant 0 : i32
      %c0_i32_56 = arith.constant 0 : i32
      %c0_i32_57 = arith.constant 0 : i32
      %89 = tpu.memref_slice %arg6[%85, %c0_i32_55, %c0_i32_56, %c0_i32_57] : memref<2x11x32x128xbf16, #tpu.memory_space<vmem>> -> memref<1x10x32x128xbf16, #tpu.memory_space<vmem>>
      %90 = tpu.memref_squeeze %89 : memref<1x10x32x128xbf16, #tpu.memory_space<vmem>> -> memref<10x32x128xbf16, #tpu.memory_space<vmem>>
      %91 = tpu.memref_slice %arg7[%85] : memref<2x!tpu.dma_semaphore, #tpu.memory_space<semaphore_mem>> -> memref<1x!tpu.dma_semaphore, #tpu.memory_space<semaphore_mem>>
      %92 = tpu.memref_squeeze %91 : memref<1x!tpu.dma_semaphore, #tpu.memory_space<semaphore_mem>> -> memref<!tpu.dma_semaphore, #tpu.memory_space<semaphore_mem>>
      tpu.enqueue_dma source(%88 : memref<10x32x128xbf16, #tpu.memory_space<any>>) target(%90 : memref<10x32x128xbf16, #tpu.memory_space<vmem>>) target_semaphore(%92 : memref<!tpu.dma_semaphore, #tpu.memory_space<semaphore_mem>>)
    } else {
    }
    %23 = arith.index_cast %9 : i32 to index
    %c0 = arith.constant 0 : index
    %c0_14 = arith.constant 0 : index
    %c0_15 = arith.constant 0 : index
    %24 = vector.load %arg6[%23, %c0, %c0_14, %c0_15] : memref<2x11x32x128xbf16, #tpu.memory_space<vmem>>, vector<1x11x32x128xbf16>
    %25 = vector.shape_cast %24 : vector<1x11x32x128xbf16> to vector<11x32x128xbf16>
    %26 = vector.shape_cast %25 : vector<11x32x128xbf16> to vector<352x128xbf16>
    %cst = arith.constant 0.000000e+00 : f32
    %27 = vector.broadcast %cst : f32 to vector<256x128xf32>
    %28 = vector.extract_strided_slice %26 {offsets = [0, 0], sizes = [256, 128], strides = [1, 1]} : vector<352x128xbf16> to vector<256x128xbf16>
    %c0_16 = arith.constant 0 : index
    %c0_17 = arith.constant 0 : index
    %c0_18 = arith.constant 0 : index
    %29 = vector.load %arg3[%c0_16, %c0_17, %c0_18] : memref<9x128x128xbf16, #tpu.memory_space<vmem>>, vector<1x128x128xbf16>
    %30 = vector.shape_cast %29 : vector<1x128x128xbf16> to vector<128x128xbf16>
    %cst_19 = arith.constant dense<0.000000e+00> : vector<256x128xf32>
    %31 = tpu.matmul %28, %30, %cst_19 {dimension_numbers = #tpu.dot_dimension_numbers<[1], [0], [0], [1], [0, 0, 1, 1], [], []>} : vector<256x128xbf16>, vector<128x128xbf16>, vector<256x128xf32> -> vector<256x128xf32>
    %32 = arith.addf %27, %31 : vector<256x128xf32>
    %33 = vector.extract_strided_slice %26 {offsets = [1, 0], sizes = [256, 128], strides = [1, 1]} : vector<352x128xbf16> to vector<256x128xbf16>
    %c1 = arith.constant 1 : index
    %c0_20 = arith.constant 0 : index
    %c0_21 = arith.constant 0 : index
    %34 = vector.load %arg3[%c1, %c0_20, %c0_21] : memref<9x128x128xbf16, #tpu.memory_space<vmem>>, vector<1x128x128xbf16>
    %35 = vector.shape_cast %34 : vector<1x128x128xbf16> to vector<128x128xbf16>
    %cst_22 = arith.constant dense<0.000000e+00> : vector<256x128xf32>
    %36 = tpu.matmul %33, %35, %cst_22 {dimension_numbers = #tpu.dot_dimension_numbers<[1], [0], [0], [1], [0, 0, 1, 1], [], []>} : vector<256x128xbf16>, vector<128x128xbf16>, vector<256x128xf32> -> vector<256x128xf32>
    %37 = arith.addf %32, %36 : vector<256x128xf32>
    %38 = vector.extract_strided_slice %26 {offsets = [2, 0], sizes = [256, 128], strides = [1, 1]} : vector<352x128xbf16> to vector<256x128xbf16>
    %c2 = arith.constant 2 : index
    %c0_23 = arith.constant 0 : index
    %c0_24 = arith.constant 0 : index
    %39 = vector.load %arg3[%c2, %c0_23, %c0_24] : memref<9x128x128xbf16, #tpu.memory_space<vmem>>, vector<1x128x128xbf16>
    %40 = vector.shape_cast %39 : vector<1x128x128xbf16> to vector<128x128xbf16>
    %cst_25 = arith.constant dense<0.000000e+00> : vector<256x128xf32>
    %41 = tpu.matmul %38, %40, %cst_25 {dimension_numbers = #tpu.dot_dimension_numbers<[1], [0], [0], [1], [0, 0, 1, 1], [], []>} : vector<256x128xbf16>, vector<128x128xbf16>, vector<256x128xf32> -> vector<256x128xf32>
    %42 = arith.addf %37, %41 : vector<256x128xf32>
    %43 = vector.extract_strided_slice %26 {offsets = [32, 0], sizes = [256, 128], strides = [1, 1]} : vector<352x128xbf16> to vector<256x128xbf16>
    %c3 = arith.constant 3 : index
    %c0_26 = arith.constant 0 : index
    %c0_27 = arith.constant 0 : index
    %44 = vector.load %arg3[%c3, %c0_26, %c0_27] : memref<9x128x128xbf16, #tpu.memory_space<vmem>>, vector<1x128x128xbf16>
    %45 = vector.shape_cast %44 : vector<1x128x128xbf16> to vector<128x128xbf16>
    %cst_28 = arith.constant dense<0.000000e+00> : vector<256x128xf32>
    %46 = tpu.matmul %43, %45, %cst_28 {dimension_numbers = #tpu.dot_dimension_numbers<[1], [0], [0], [1], [0, 0, 1, 1], [], []>} : vector<256x128xbf16>, vector<128x128xbf16>, vector<256x128xf32> -> vector<256x128xf32>
    %47 = arith.addf %42, %46 : vector<256x128xf32>
    %48 = vector.extract_strided_slice %26 {offsets = [33, 0], sizes = [256, 128], strides = [1, 1]} : vector<352x128xbf16> to vector<256x128xbf16>
    %c4 = arith.constant 4 : index
    %c0_29 = arith.constant 0 : index
    %c0_30 = arith.constant 0 : index
    %49 = vector.load %arg3[%c4, %c0_29, %c0_30] : memref<9x128x128xbf16, #tpu.memory_space<vmem>>, vector<1x128x128xbf16>
    %50 = vector.shape_cast %49 : vector<1x128x128xbf16> to vector<128x128xbf16>
    %cst_31 = arith.constant dense<0.000000e+00> : vector<256x128xf32>
    %51 = tpu.matmul %48, %50, %cst_31 {dimension_numbers = #tpu.dot_dimension_numbers<[1], [0], [0], [1], [0, 0, 1, 1], [], []>} : vector<256x128xbf16>, vector<128x128xbf16>, vector<256x128xf32> -> vector<256x128xf32>
    %52 = arith.addf %47, %51 : vector<256x128xf32>
    %53 = vector.extract_strided_slice %26 {offsets = [34, 0], sizes = [256, 128], strides = [1, 1]} : vector<352x128xbf16> to vector<256x128xbf16>
    %c5 = arith.constant 5 : index
    %c0_32 = arith.constant 0 : index
    %c0_33 = arith.constant 0 : index
    %54 = vector.load %arg3[%c5, %c0_32, %c0_33] : memref<9x128x128xbf16, #tpu.memory_space<vmem>>, vector<1x128x128xbf16>
    %55 = vector.shape_cast %54 : vector<1x128x128xbf16> to vector<128x128xbf16>
    %cst_34 = arith.constant dense<0.000000e+00> : vector<256x128xf32>
    %56 = tpu.matmul %53, %55, %cst_34 {dimension_numbers = #tpu.dot_dimension_numbers<[1], [0], [0], [1], [0, 0, 1, 1], [], []>} : vector<256x128xbf16>, vector<128x128xbf16>, vector<256x128xf32> -> vector<256x128xf32>
    %57 = arith.addf %52, %56 : vector<256x128xf32>
    %58 = vector.extract_strided_slice %26 {offsets = [64, 0], sizes = [256, 128], strides = [1, 1]} : vector<352x128xbf16> to vector<256x128xbf16>
    %c6 = arith.constant 6 : index
    %c0_35 = arith.constant 0 : index
    %c0_36 = arith.constant 0 : index
    %59 = vector.load %arg3[%c6, %c0_35, %c0_36] : memref<9x128x128xbf16, #tpu.memory_space<vmem>>, vector<1x128x128xbf16>
    %60 = vector.shape_cast %59 : vector<1x128x128xbf16> to vector<128x128xbf16>
    %cst_37 = arith.constant dense<0.000000e+00> : vector<256x128xf32>
    %61 = tpu.matmul %58, %60, %cst_37 {dimension_numbers = #tpu.dot_dimension_numbers<[1], [0], [0], [1], [0, 0, 1, 1], [], []>} : vector<256x128xbf16>, vector<128x128xbf16>, vector<256x128xf32> -> vector<256x128xf32>
    %62 = arith.addf %57, %61 : vector<256x128xf32>
    %63 = vector.extract_strided_slice %26 {offsets = [65, 0], sizes = [256, 128], strides = [1, 1]} : vector<352x128xbf16> to vector<256x128xbf16>
    %c7 = arith.constant 7 : index
    %c0_38 = arith.constant 0 : index
    %c0_39 = arith.constant 0 : index
    %64 = vector.load %arg3[%c7, %c0_38, %c0_39] : memref<9x128x128xbf16, #tpu.memory_space<vmem>>, vector<1x128x128xbf16>
    %65 = vector.shape_cast %64 : vector<1x128x128xbf16> to vector<128x128xbf16>
    %cst_40 = arith.constant dense<0.000000e+00> : vector<256x128xf32>
    %66 = tpu.matmul %63, %65, %cst_40 {dimension_numbers = #tpu.dot_dimension_numbers<[1], [0], [0], [1], [0, 0, 1, 1], [], []>} : vector<256x128xbf16>, vector<128x128xbf16>, vector<256x128xf32> -> vector<256x128xf32>
    %67 = arith.addf %62, %66 : vector<256x128xf32>
    %68 = vector.extract_strided_slice %26 {offsets = [66, 0], sizes = [256, 128], strides = [1, 1]} : vector<352x128xbf16> to vector<256x128xbf16>
    %c8 = arith.constant 8 : index
    %c0_41 = arith.constant 0 : index
    %c0_42 = arith.constant 0 : index
    %69 = vector.load %arg3[%c8, %c0_41, %c0_42] : memref<9x128x128xbf16, #tpu.memory_space<vmem>>, vector<1x128x128xbf16>
    %70 = vector.shape_cast %69 : vector<1x128x128xbf16> to vector<128x128xbf16>
    %cst_43 = arith.constant dense<0.000000e+00> : vector<256x128xf32>
    %71 = tpu.matmul %68, %70, %cst_43 {dimension_numbers = #tpu.dot_dimension_numbers<[1], [0], [0], [1], [0, 0, 1, 1], [], []>} : vector<256x128xbf16>, vector<128x128xbf16>, vector<256x128xf32> -> vector<256x128xf32>
    %72 = arith.addf %67, %71 : vector<256x128xf32>
    %c0_44 = arith.constant 0 : index
    %c0_45 = arith.constant 0 : index
    %73 = vector.load %arg4[%c0_44, %c0_45] : memref<1x128xf32, #tpu.memory_space<vmem>>, vector<1x128xf32>
    %74 = vector.broadcast %73 : vector<1x128xf32> to vector<256x128xf32>
    %75 = arith.addf %72, %74 : vector<256x128xf32>
    %76 = arith.negf %75 : vector<256x128xf32>
    %77 = math.exp %76 : vector<256x128xf32>
    %cst_46 = arith.constant 1.000000e+00 : f32
    %78 = vector.broadcast %cst_46 : f32 to vector<256x128xf32>
    %79 = arith.addf %78, %77 : vector<256x128xf32>
    %80 = arith.divf %78, %79 : vector<256x128xf32>
    %81 = arith.mulf %75, %80 : vector<256x128xf32>
    %82 = vector.shape_cast %81 : vector<256x128xf32> to vector<1x8x32x128xf32>
    %c0_47 = arith.constant 0 : index
    %c0_48 = arith.constant 0 : index
    %c0_49 = arith.constant 0 : index
    %c0_50 = arith.constant 0 : index
    %83 = vector.load %arg5[%c0_47, %c0_48, %c0_49, %c0_50] : memref<1x8x32x128xf32, #tpu.memory_space<vmem>>, vector<1x8x32x128xf32>
    tpu.vector_store %arg5[%c0_47, %c0_48, %c0_49, %c0_50], %82 {strides = array<i32>} : memref<1x8x32x128xf32, #tpu.memory_space<vmem>>, vector<1x8x32x128xf32>,
    return
  }
  func.func @transform_1(%arg0: i32, %arg1: i32) -> (i32, i32, i32) {
    %c0_i32 = arith.constant 0 : i32
    %c0_i32_0 = arith.constant 0 : i32
    %c0_i32_1 = arith.constant 0 : i32
    %c0_i32_2 = arith.constant 0 : i32
    return %c0_i32, %c0_i32_0, %c0_i32_1 : i32, i32, i32
  }
  func.func @transform_2(%arg0: i32, %arg1: i32) -> (i32, i32) {
    %c0_i32 = arith.constant 0 : i32
    %c0_i32_0 = arith.constant 0 : i32
    %c0_i32_1 = arith.constant 0 : i32
    return %c0_i32, %c0_i32_0 : i32, i32
  }
  func.func @transform_3(%arg0: i32, %arg1: i32) -> (i32, i32, i32, i32) {
    %c0_i32 = arith.constant 0 : i32
    %c0_i32_0 = arith.constant 0 : i32
    %c0_i32_1 = arith.constant 0 : i32
    return %arg0, %arg1, %c0_i32, %c0_i32_0 : i32, i32, i32, i32
  }
}

</mosaic_0001>

<llo_original>
// kernel: tpu_custom_call.1
$region0: #{tpu_custom_call.1}
  #allocation0 [shape = 'u32[]', space=smem, size = 0x4, offset = 0x4, fixed_abs, tag = 'smem constant byte address 0x4 - core index']
  #allocation1 [shape = 'u32[144,128]{1,0:T(1,128)}', space=vmem, size = 0x12000, scoped, tag = 'internal scratch']
  #allocation2 [shape = 'bf16[2,11,32,128]{3,2,1,0:T(16,128)(2,1)}', space=vmem, size = 0x2c000, scoped, tag = 'scratch operand']
  #allocation3 [shape = 's32[2]{0}', space=sflag, size = 0x8, scoped, tag = 'scratch operand']
  #allocation8 [shape = 's32[]', space=sflag, size = 0x4, offset = 0, fixed_abs, tag = 'sflag constant byte address 0x0 - dummy sync flag']
  #allocation9 [shape = 's32[]', space=sflag, size = 0x4, offset = 0, fixed_abs, tag = 'sflag constant byte address 0x0 - dummy sync flag']
  #allocation10 [shape = 'u32[]', space=smem, size = 0x4, offset = 0x44, fixed_abs, tag = 'smem constant byte address 0x44 - assertion arg 0']
  #allocation11 [shape = 'u32[]', space=smem, size = 0x4, offset = 0x48, fixed_abs, tag = 'smem constant byte address 0x48 - assertion arg 1']
  #allocation12 [shape = 's32[]', space=sflag, size = 0x4, offset = 0, fixed_abs, tag = 'sflag constant byte address 0x0 - dummy sync flag']
  #allocation13 [shape = 's32[]', space=sflag, size = 0x4, offset = 0, fixed_abs, tag = 'sflag constant byte address 0x0 - dummy sync flag']
  %s0 = inlined_call_operand.hbm [shape: bf16[2,18,32,128], index: 0, kind: input, shape index: {}]
  %s1 = inlined_call_operand.hbm [shape: bf16[9,128,128], index: 1, kind: input, shape index: {}]
  %s2 = inlined_call_operand.vmem [shape: f32[1,128], index: 2, kind: input, shape index: {}]
  %s3 = inlined_call_operand.hbm [shape: f32[2,16,32,128], index: 3, kind: output, shape index: {}]
  %s4 = sld [smem:[#allocation0]]
  $region61: #{tpu_custom_call.1} parent=0
    _
  %s6 = ssub.s32 1, %s4
  %s7 = scalar_select 0, %s6, %s4
  $region1: #{tpu_custom_call.1} parent=0
    #allocation4 [shape = 'u8[294912]{0}', space=vmem, size = 0x48000, scoped, tag = 'input window, operand 1, single buffered']
    #allocation5 [shape = 's32[2]{0}', space=sflag, size = 0x8, scoped, tag = 'scoped memory for tpu_custom_call.1']
    #allocation6 [shape = 's32[2]{0}', space=sflag, size = 0x8, scoped, tag = 'scoped memory for tpu_custom_call.1']
    #allocation7 [shape = 'u8[262144]{0}', space=vmem, size = 0x40000, scoped, tag = 'output window, operand 0']
    %8 = vsyncpa [#allocation5], 0
    %9 = vsyncpa [#allocation6], 0
    %s10 = scalar_lea.sflag [#allocation6], 1
    %11 = vsyncpa %s10, 0
    loop: start=0, step=1, limit=6
    $region2: #{tpu_custom_call.1} parent=1 // loop_pre_header
      _
    $region3: #{tpu_custom_call.1} parent=1 // loop_header
      %s13 = sphi 0, %s17
      %p14 = scmp.ge.s32.totalorder %s13, 6
      %s20 = sphi 0, %s32
      %s21 = sphi 0, %s28
      %s22 = sphi 0, %s20
      %s23 = sphi 0, %s21
      %s24 = sphi 0, %s22
      %s25 = sphi 0, %s23
      %s33 = sphi 0, %s33
      %s35 = sphi 0, %s33
      %s36 = sphi 0, %s35
      %s50 = sphi 0, %s36
      %s54 = sphi 0, %s54
      %s56 = sphi 0, %s54
      %s57 = sphi 0, %s56
      %s71 = sphi 0, %s57
      %s79 = sphi 0, %s81
      %s82 = sphi 0, %s79
      %s83 = sphi 0, %s82
      %s99 = sphi 0, %s83
    $region4: #{tpu_custom_call.1} parent=1 // loop_header_branch
      %16 = sbr.rel (%p14) target = $region8
    $region5: #{tpu_custom_call.1} parent=1 // loop_body
      %s18 = ssub.s32 %s13, 1
      %s19 = ssub.s32 %s13, 2
      %s26 = sadd.s32 1, %s21
      %p27 = scmp.ge.s32.totalorder %s26, 2
      %s28 = scalar_select %p27, 0, %s26
      %s29 = sadd.s32 1, %s20
      %s30 = scalar_select %p27, %s29, %s20
      %p31 = scmp.ge.s32.totalorder %s30, 2
      %s32 = scalar_select %p31, 0, %s30
      %s34 = sadd.s32 %s33, 1
      %p37 = scmp.eq.s32.totalorder %s13, 3
      %p38 = scmp.ne.s32.totalorder %s33, %s35
      %p39 = scmp.eq.s32.totalorder %s13, 0
      %p40 = por %p38, %p39
      %p41 = scmp.ne.s32.totalorder %s33, %s35
      %p42 = scmp.eq.s32.totalorder %s18, 3
      %p43 = por %p41, %p42
      %p44 = scmp.ne.s32.totalorder %s35, %s36
      %p45 = scmp.eq.s32.totalorder %s18, 0
      %p46 = por %p44, %p45
      %p47 = scmp.ne.s32.totalorder %s35, %s36
      %p48 = scmp.eq.s32.totalorder %s19, 3
      %p49 = por %p47, %p48
      %p51 = scmp.ne.s32.totalorder %s36, %s50
      %p52 = scmp.eq.s32.totalorder %s19, 0
      %p53 = por %p51, %p52
      %s55 = sadd.s32 %s54, 1
      %p58 = scmp.eq.s32.totalorder %s13, 3
      %p59 = scmp.ne.s32.totalorder %s54, %s56
      %p60 = scmp.eq.s32.totalorder %s13, 0
      %p61 = por %p59, %p60
      %p62 = scmp.ne.s32.totalorder %s54, %s56
      %p63 = scmp.eq.s32.totalorder %s18, 3
      %p64 = por %p62, %p63
      %p65 = scmp.ne.s32.totalorder %s56, %s57
      %p66 = scmp.eq.s32.totalorder %s18, 0
      %p67 = por %p65, %p66
      %p68 = scmp.ne.s32.totalorder %s56, %s57
      %p69 = scmp.eq.s32.totalorder %s19, 3
      %p70 = por %p68, %p69
      %p72 = scmp.ne.s32.totalorder %s57, %s71
      %p73 = scmp.eq.s32.totalorder %s19, 0
      %p74 = por %p72, %p73
      %s75 = ssub.s32 %s20, %s32
      %s76 = ssub.s32 %s21, %s28
      %s77 = sor.u32 %s75, %s76
      %p78 = scmp.eq.s32.totalorder %s77, 0
      %s80 = sadd.s32 %s79, 1
      %s81 = scalar_select %p78, %s79, %s80
      %p84 = pneg %p78
      %p85 = scmp.eq.s32.totalorder %s13, 3
      %p86 = por %p84, %p85
      %p87 = scmp.ne.s32.totalorder %s79, %s82
      %p88 = scmp.eq.s32.totalorder %s13, 0
      %p89 = por %p87, %p88
      %p90 = scmp.ne.s32.totalorder %s79, %s82
      %p91 = scmp.eq.s32.totalorder %s18, 3
      %p92 = por %p90, %p91
      %p93 = scmp.ne.s32.totalorder %s82, %s83
      %p94 = scmp.eq.s32.totalorder %s18, 0
      %p95 = por %p93, %p94
      %p96 = scmp.ne.s32.totalorder %s82, %s83
      %p97 = scmp.eq.s32.totalorder %s19, 3
      %p98 = por %p96, %p97
      %p100 = scmp.ne.s32.totalorder %s83, %s99
      %p101 = scmp.eq.s32.totalorder %s19, 0
      %p102 = por %p100, %p101
      %p103 = scmp.le.s32.totalorder 1, %s13
      %p104 = scmp.lt.s32.totalorder %s13, 5
      %p105 = pnand %p103, %p104
      %p106 = pneg %p105
      // Predicated region
      $region9: #{tpu_custom_call.1} parent=5 // pred_check
        _
      $region10: #{tpu_custom_call.1} parent=5 // pred_check_branch
        %108 = sbr.rel (%p105) target = $region12
      $region11: #{tpu_custom_call.1} parent=5 // pred_region
        %s109 = ssub.s32 %s13, 1
        // Predicated region
        $region13: #{tpu_custom_call.1} parent=11 // pred_check
          %p110 = pneg %p46
        $region14: #{tpu_custom_call.1} parent=11 // pred_check_branch
          %112 = sbr.rel (%p110) target = $region16
        $region15: #{tpu_custom_call.1} parent=11 // pred_region
          %s114 = ssub.s32 9216, 9216
          %115 = vsyncadd [#allocation5], %s114
          %s116 = sshll.u32 [#allocation4], 4
          %s117 = int_to_ptr.vmem [resolvable:$true] %s116
          %122 = dma.hbm_to_vmem [thread:$0]  %s1, 9216, %s117, [#allocation5], 64, 64, 4
        $region16: #{tpu_custom_call.1} parent=11 // pred_fallthru
          _
        // Predicated region
        $region17: #{tpu_custom_call.1} parent=11 // pred_check
          %p123 = pneg %p67
        $region18: #{tpu_custom_call.1} parent=11 // pred_check_branch
          %125 = sbr.rel (%p123) target = $region20
        $region19: #{tpu_custom_call.1} parent=11 // pred_region
          _
        $region20: #{tpu_custom_call.1} parent=11 // pred_fallthru
          _
      $region12: #{tpu_custom_call.1} parent=5 // pred_fallthru
        _
      %p126 = scmp.lt.s32.totalorder %s13, 4
      // Predicated region
      $region21: #{tpu_custom_call.1} parent=5 // pred_check
        %p127 = pneg %p126
      $region22: #{tpu_custom_call.1} parent=5 // pred_check_branch
        %129 = sbr.rel (%p127) target = $region24
      $region23: #{tpu_custom_call.1} parent=5 // pred_region
        _
      $region24: #{tpu_custom_call.1} parent=5 // pred_fallthru
        _
      %p130 = scmp.le.s32.totalorder 1, %s13
      %p131 = scmp.lt.s32.totalorder %s13, 5
      %p132 = pnand %p130, %p131
      %p133 = pneg %p132
      // Predicated region
      $region25: #{tpu_custom_call.1} parent=5 // pred_check
        _
      $region26: #{tpu_custom_call.1} parent=5 // pred_check_branch
        %135 = sbr.rel (%p132) target = $region28
      $region27: #{tpu_custom_call.1} parent=5 // pred_region
        %s136 = ssub.s32 %s13, 1
        // Predicated region
        $region29: #{tpu_custom_call.1} parent=27 // pred_check
          %p137 = pneg %p46
        $region30: #{tpu_custom_call.1} parent=27 // pred_check_branch
          %139 = sbr.rel (%p137) target = $region32
        $region31: #{tpu_custom_call.1} parent=27 // pred_region
          %140 = dma.done [#allocation5], 9216
        $region32: #{tpu_custom_call.1} parent=27 // pred_fallthru
          _
        %p141 = pneg %p46
        %p142 = pneg %p43
        %p143 = pneg %p67
        %p144 = pneg %p64
        %p145 = pneg %p95
        %p146 = pneg %p92
        %s147 = sand.u32 %s82, 1
        %s148 = scalar_lea.sflag [#allocation6], %s147
        %s149 = sand.u32 %s82, 1
        %s150 = smul.addr %s149, 256
        %s151 = scalar_lea.vmem [#allocation7], %s150
        %s152 = smul.u32 8, %s23
        %p154 = scmp.lt.s32.totalorder %s23, 0
        %s155 = ssub.s32 0, %s23
        %s156 = scalar_select %p154, %s155, %s23
        %s157 = sand.u32 %s156, 1
        %s158 = ssub.s32 0, %s157
        %s159 = scalar_select %p154, %s158, %s157
        %p160 = scmp.ne.s32.totalorder %s159, 0
        %p161 = scmp.lt.s32.totalorder %s159, 0
        %p162 = pnand %p161, %p160
        %p163 = pneg %p162
        %s164 = sadd.s32 %s159, 2
        %s165 = scalar_select %p163, %s164, %s159
        %p166 = scmp.eq.s32.totalorder %s23, 0
        // Predicated region
        $region33: #{tpu_custom_call.1} parent=27 // pred_check
          %p167 = pneg %p166
        $region34: #{tpu_custom_call.1} parent=27 // pred_check_branch
          %169 = sbr.rel (%p167) target = $region36
        $region35: #{tpu_custom_call.1} parent=27 // pred_region
          %s170 = smul.u32 %s22, 72
          %s171 = smul.addr %s170, 64
          %s172 = scalar_lea.hbm %s0, %s171
          // Predicated region
          $region37: #{tpu_custom_call.1} parent=35 // pred_check
            _
          $region38: #{tpu_custom_call.1} parent=35 // pred_check_branch
            %174 = sbr.rel target = $region40
          $region39: #{tpu_custom_call.1} parent=35 // pred_region
            %175 = sst [smem:[#allocation10]] [#allocation9]
            %176 = sst [smem:[#allocation11]] [#allocation8]
          $region40: #{tpu_custom_call.1} parent=35 // pred_fallthru
            _
          %178 = shalt.err (0)
          %s180 = sshll.u32 [#allocation2], 4
          %s181 = int_to_ptr.vmem [resolvable:$true] %s180
          %183 = dma.hbm_to_vmem [thread:$0]  %s172, 2560, %s181, [#allocation3]
          %s184 = scalar_lea.vmem [#allocation2], 160
          %185 = vst [vmem:[%s184] sm:$0xff] 0
          %186 = vst [vmem:[%s184 + $0x8] sm:$0xff] 0
          %s187 = scalar_lea.vmem [#allocation2], 336
          %188 = vst [vmem:[%s187] sm:$0xff] 0
          %189 = vst [vmem:[%s187 + $0x8] sm:$0xff] 0
        $region36: #{tpu_custom_call.1} parent=27 // pred_fallthru
          _
        %s190 = scalar_lea.sflag [#allocation3], %s165
        %s191 = smul.u32 4, 10
        %s192 = smul.u32 %s191, 4
        %s193 = smul.u32 %s192, 1
        %s194 = sshll.u32 %s193, 4
        %195 = dma.done %s190, %s194
        %s196 = sadd.s32 %s23, 1
        %p197 = scmp.lt.s32.totalorder %s196, 2
        // Predicated region
        $region41: #{tpu_custom_call.1} parent=27 // pred_check
          %p198 = pneg %p197
        $region42: #{tpu_custom_call.1} parent=27 // pred_check_branch
          %200 = sbr.rel (%p198) target = $region44
        $region43: #{tpu_custom_call.1} parent=27 // pred_region
          %s201 = ssub.s32 1, %s165
          %s202 = smul.u32 %s196, 8
          %s203 = smul.u32 %s202, 4
          %s204 = smul.u32 %s22, 72
          %s205 = sadd.s32 %s203, %s204
          %s206 = smul.addr %s205, 64
          %s207 = scalar_lea.hbm %s0, %s206
          %s208 = smul.u32 %s201, 22
          %s209 = smul.addr %s208, 8
          %s210 = scalar_lea.vmem [#allocation2], %s209
          %s211 = scalar_lea.sflag [#allocation3], %s201
          // Predicated region
          $region45: #{tpu_custom_call.1} parent=43 // pred_check
            _
          $region46: #{tpu_custom_call.1} parent=43 // pred_check_branch
            %213 = sbr.rel target = $region48
          $region47: #{tpu_custom_call.1} parent=43 // pred_region
            %214 = sst [smem:[#allocation10]] [#allocation13]
            %215 = sst [smem:[#allocation11]] [#allocation12]
          $region48: #{tpu_custom_call.1} parent=43 // pred_fallthru
            _
          %217 = shalt.err (0)
          %s219 = sshll.u32 %s210, 4
          %s220 = int_to_ptr.vmem [resolvable:$true] %s219
          %222 = dma.hbm_to_vmem [thread:$0]  %s207, 2560, %s220, %s211
        $region44: #{tpu_custom_call.1} parent=27 // pred_fallthru
          _
        %s223 = smul.u32 %s165, 22
        %s224 = smul.addr %s223, 8
        %s225 = scalar_lea.vmem [#allocation2], %s224
        %v226 = vld [vmem:[%s225] sm:$0xff]
        %v227 = vld [vmem:[%s225 + $0x8] sm:$0xff]
        %v228 = vld [vmem:[%s225 + $0x10] sm:$0xff]
        %v229 = vld [vmem:[%s225 + $0x18] sm:$0xff]
        %v230 = vld [vmem:[%s225 + $0x20] sm:$0xff]
        %v231 = vld [vmem:[%s225 + $0x28] sm:$0xff]
        %v232 = vld [vmem:[%s225 + $0x30] sm:$0xff]
        %v233 = vld [vmem:[%s225 + $0x38] sm:$0xff]
        %v234 = vld [vmem:[%s225 + $0x40] sm:$0xff]
        %v235 = vld [vmem:[%s225 + $0x48] sm:$0xff]
        %v236 = vld [vmem:[%s225 + $0x50] sm:$0xff]
        %v237 = vld [vmem:[%s225 + $0x58] sm:$0xff]
        %v238 = vld [vmem:[%s225 + $0x60] sm:$0xff]
        %v239 = vld [vmem:[%s225 + $0x68] sm:$0xff]
        %v240 = vld [vmem:[%s225 + $0x70] sm:$0xff]
        %v241 = vld [vmem:[%s225 + $0x78] sm:$0xff]
        %v242 = vld [vmem:[%s225 + $0x80] sm:$0xff]
        %v243 = vld [vmem:[%s225 + $0x88] sm:$0xff]
        %v244 = vld [vmem:[%s225 + $0x90] sm:$0xff]
        %v245 = vld [vmem:[%s225 + $0x98] sm:$0xff]
        %v246 = vld [vmem:[%s225 + $0xa0] sm:$0xff]
        %v247 = vld [vmem:[#allocation4] sm:$0xf]
        %v248 = vld [vmem:[#allocation4 + $0x4] sm:$0xf]
        %v249 = vld [vmem:[#allocation4 + $0x8] sm:$0xf]
        %v250 = vld [vmem:[#allocation4 + $0xc] sm:$0xf]
        %v251 = vld [vmem:[#allocation4 + $0x10] sm:$0xf]
        %v252 = vld [vmem:[#allocation4 + $0x14] sm:$0xf]
        %v253 = vld [vmem:[#allocation4 + $0x18] sm:$0xf]
        %v254 = vld [vmem:[#allocation4 + $0x1c] sm:$0xf]
        %v255 = vld [vmem:[#allocation4 + $0x20] sm:$0xf]
        %v256 = vld [vmem:[#allocation4 + $0x24] sm:$0xf]
        %v257 = vld [vmem:[#allocation4 + $0x28] sm:$0xf]
        %v258 = vld [vmem:[#allocation4 + $0x2c] sm:$0xf]
        %v259 = vld [vmem:[#allocation4 + $0x30] sm:$0xf]
        %v260 = vld [vmem:[#allocation4 + $0x34] sm:$0xf]
        %v261 = vld [vmem:[#allocation4 + $0x38] sm:$0xf]
        %v262 = vld [vmem:[#allocation4 + $0x3c] sm:$0xf]
        %s263 = scalar_lea.vmem [#allocation4], 64
        %v264 = vld [vmem:[%s263] sm:$0xf]
        %v265 = vld [vmem:[%s263 + $0x4] sm:$0xf]
        %v266 = vld [vmem:[%s263 + $0x8] sm:$0xf]
        %v267 = vld [vmem:[%s263 + $0xc] sm:$0xf]
        %v268 = vld [vmem:[%s263 + $0x10] sm:$0xf]
        %v269 = vld [vmem:[%s263 + $0x14] sm:$0xf]
        %v270 = vld [vmem:[%s263 + $0x18] sm:$0xf]
        %v271 = vld [vmem:[%s263 + $0x1c] sm:$0xf]
        %v272 = vld [vmem:[%s263 + $0x20] sm:$0xf]
        %v273 = vld [vmem:[%s263 + $0x24] sm:$0xf]
        %v274 = vld [vmem:[%s263 + $0x28] sm:$0xf]
        %v275 = vld [vmem:[%s263 + $0x2c] sm:$0xf]
        %v276 = vld [vmem:[%s263 + $0x30] sm:$0xf]
        %v277 = vld [vmem:[%s263 + $0x34] sm:$0xf]
        %v278 = vld [vmem:[%s263 + $0x38] sm:$0xf]
        %v279 = vld [vmem:[%s263 + $0x3c] sm:$0xf]
        %vm280 = vsmask.f32 7424
        %v282 = vshrl.u32 %v226, 16
        %v284 = vshll.u32 %v226, 16
        %v286 = vrot.slane %v284, 1
        %v287 = vor.u32 %v282, %v286
        %v289 = vshll.u32 %v227, 16
        %v291 = vrot.slane %v289, 1
        %v292 = vsel %vm280, %v287, %v291
        %v293 = vshrl.u32 %v227, 16
        %v295 = vor.u32 %v293, %v291
        %v297 = vshll.u32 %v228, 16
        %v299 = vrot.slane %v297, 1
        %v300 = vsel %vm280, %v295, %v299
        %v301 = vshrl.u32 %v228, 16
        %v303 = vor.u32 %v301, %v299
        %v305 = vshll.u32 %v229, 16
        %v307 = vrot.slane %v305, 1
        %v308 = vsel %vm280, %v303, %v307
        %v309 = vshrl.u32 %v229, 16
        %v311 = vor.u32 %v309, %v307
        %v313 = vshll.u32 %v230, 16
        %v315 = vrot.slane %v313, 1
        %v316 = vsel %vm280, %v311, %v315
        %v317 = vshrl.u32 %v230, 16
        %v319 = vor.u32 %v317, %v315
        %v321 = vshll.u32 %v231, 16
        %v323 = vrot.slane %v321, 1
        %v324 = vsel %vm280, %v319, %v323
        %v325 = vshrl.u32 %v231, 16
        %v327 = vor.u32 %v325, %v323
        %v329 = vshll.u32 %v232, 16
        %v331 = vrot.slane %v329, 1
        %v332 = vsel %vm280, %v327, %v331
        %v333 = vshrl.u32 %v232, 16
        %v335 = vor.u32 %v333, %v331
        %v337 = vshll.u32 %v233, 16
        %v339 = vrot.slane %v337, 1
        %v340 = vsel %vm280, %v335, %v339
        %v341 = vshrl.u32 %v233, 16
        %v343 = vor.u32 %v341, %v339
        %v345 = vshll.u32 %v234, 16
        %v347 = vrot.slane %v345, 1
        %v348 = vsel %vm280, %v343, %v347
        %v349 = vshrl.u32 %v234, 16
        %v351 = vor.u32 %v349, %v347
        %v353 = vshll.u32 %v235, 16
        %v355 = vrot.slane %v353, 1
        %v356 = vsel %vm280, %v351, %v355
        %v357 = vshrl.u32 %v235, 16
        %v359 = vor.u32 %v357, %v355
        %v361 = vshll.u32 %v236, 16
        %v363 = vrot.slane %v361, 1
        %v364 = vsel %vm280, %v359, %v363
        %v365 = vshrl.u32 %v236, 16
        %v367 = vor.u32 %v365, %v363
        %v369 = vshll.u32 %v237, 16
        %v371 = vrot.slane %v369, 1
        %v372 = vsel %vm280, %v367, %v371
        %v373 = vshrl.u32 %v237, 16
        %v375 = vor.u32 %v373, %v371
        %v377 = vshll.u32 %v238, 16
        %v379 = vrot.slane %v377, 1
        %v380 = vsel %vm280, %v375, %v379
        %v381 = vshrl.u32 %v238, 16
        %v383 = vor.u32 %v381, %v379
        %v385 = vshll.u32 %v239, 16
        %v387 = vrot.slane %v385, 1
        %v388 = vsel %vm280, %v383, %v387
        %v389 = vshrl.u32 %v239, 16
        %v391 = vor.u32 %v389, %v387
        %v393 = vshll.u32 %v240, 16
        %v395 = vrot.slane %v393, 1
        %v396 = vsel %vm280, %v391, %v395
        %v397 = vshrl.u32 %v240, 16
        %v399 = vor.u32 %v397, %v395
        %v401 = vshll.u32 %v241, 16
        %v403 = vrot.slane %v401, 1
        %v404 = vsel %vm280, %v399, %v403
        %v405 = vshrl.u32 %v241, 16
        %v407 = vor.u32 %v405, %v403
        %v409 = vshll.u32 %v242, 16
        %v411 = vrot.slane %v409, 1
        %v412 = vsel %vm280, %v407, %v411
        %v445 = vunpack.c.l.b16 %v264
        %v446 = vunpack.c.l.b16 %v265
        %v447 = vunpack.c.l.b16 %v266
        %v448 = vunpack.c.l.b16 %v267
        %v449 = vunpack.c.l.b16 %v268
        %v450 = vunpack.c.l.b16 %v269
        %v451 = vunpack.c.l.b16 %v270
        %v452 = vunpack.c.l.b16 %v271
        %v453 = vunpack.c.l.b16 %v272
        %v454 = vunpack.c.l.b16 %v273
        %v455 = vunpack.c.l.b16 %v274
        %v456 = vunpack.c.l.b16 %v275
        %v457 = vunpack.c.l.b16 %v276
        %v458 = vunpack.c.l.b16 %v277
        %v459 = vunpack.c.l.b16 %v278
        %v460 = vunpack.c.l.b16 %v279
        %v461 = vpack.c.b16 %v446, %v445
        %v462 = vpack.c.b16 %v448, %v447
        %v463 = vpack.c.b16 %v450, %v449
        %v464 = vpack.c.b16 %v452, %v451
        %v465 = vpack.c.b16 %v454, %v453
        %v466 = vpack.c.b16 %v456, %v455
        %v467 = vpack.c.b16 %v458, %v457
        %v468 = vpack.c.b16 %v460, %v459
        %477 = vmatprep.subr.bf16.mxu0 0
        %478 = vmatpush1.bf16.msra.mxu0 %v461
        %479 = vmatprep.subr.bf16.mxu0 0
        %480 = vmatpush1.bf16.msra.mxu0 %v462
        %481 = vmatprep.subr.bf16.mxu0 0
        %482 = vmatpush1.bf16.msra.mxu0 %v463
        %483 = vmatprep.subr.bf16.mxu0 0
        %484 = vmatpush1.bf16.msra.mxu0 %v464
        %485 = vmatprep.subr.bf16.mxu0 0
        %486 = vmatpush1.bf16.msra.mxu0 %v465
        %487 = vmatprep.subr.bf16.mxu0 0
        %488 = vmatpush1.bf16.msra.mxu0 %v466
        %489 = vmatprep.subr.bf16.mxu0 0
        %490 = vmatpush1.bf16.msra.mxu0 %v467
        %491 = vmatprep.subr.bf16.mxu0 0
        %492 = vmatpush1.bf16.msra.mxu0 %v468
        %493 = vmatprep.subr.bf16.mxu0 0
        %494 = vmatpush1.bf16.msra.mxu0 0
        %495 = vmatprep.subr.bf16.mxu0 0
        %496 = vmatpush1.bf16.msra.mxu0 0
        %497 = vmatprep.subr.bf16.mxu0 0
        %498 = vmatpush1.bf16.msra.mxu0 0
        %499 = vmatprep.subr.bf16.mxu0 0
        %500 = vmatpush1.bf16.msra.mxu0 0
        %501 = vmatprep.subr.bf16.mxu0 0
        %502 = vmatpush1.bf16.msra.mxu0 0
        %503 = vmatprep.subr.bf16.mxu0 0
        %504 = vmatpush1.bf16.msra.mxu0 0
        %505 = vmatprep.subr.bf16.mxu0 0
        %506 = vmatpush1.bf16.msra.mxu0 0
        %507 = vmatprep.subr.bf16.mxu0 0
        %508 = vmatpush1.bf16.msra.mxu0 0
        %509 = vmatprep.mubr.bf16.mxu0 0
        %510 = vmatmul.mubr.bf16.gmra.mrb[0].mxu0 %v292
        %v511 = vpop.f32.mrb[0].mxu0
        %v512 = vadd.f32 0.0, %v511
        %v513 = vpop.f32.mrb[0].mxu0
        %v514 = vpop.f32.mrb[0].mxu0
        %v515 = vadd.f32 0.0, %v514
        %v516 = vpop.f32.mrb[0].mxu0
        %517 = vmatprep.mubr.bf16.mxu0 0
        %518 = vmatmul.mubr.bf16.gmra.mrb[0].mxu0 %v300
        %v519 = vpop.f32.mrb[0].mxu0
        %v520 = vadd.f32 0.0, %v519
        %v521 = vpop.f32.mrb[0].mxu0
        %v522 = vpop.f32.mrb[0].mxu0
        %v523 = vadd.f32 0.0, %v522
        %v524 = vpop.f32.mrb[0].mxu0
        %525 = vmatprep.mubr.bf16.mxu0 0
        %526 = vmatmul.mubr.bf16.gmra.mrb[0].mxu0 %v308
        %v527 = vpop.f32.mrb[0].mxu0
        %v528 = vadd.f32 0.0, %v527
        %v529 = vpop.f32.mrb[0].mxu0
        %v530 = vpop.f32.mrb[0].mxu0
        %v531 = vadd.f32 0.0, %v530
        %v532 = vpop.f32.mrb[0].mxu0
        %533 = vmatprep.mubr.bf16.mxu0 0
        %534 = vmatmul.mubr.bf16.gmra.mrb[0].mxu0 %v316
        %v535 = vpop.f32.mrb[0].mxu0
        %v536 = vadd.f32 0.0, %v535
        %v537 = vpop.f32.mrb[0].mxu0
        %v538 = vpop.f32.mrb[0].mxu0
        %v539 = vadd.f32 0.0, %v538
        %v540 = vpop.f32.mrb[0].mxu0
        %541 = vmatprep.mubr.bf16.mxu0 0
        %542 = vmatmul.mubr.bf16.gmra.mrb[0].mxu0 %v324
        %v543 = vpop.f32.mrb[0].mxu0
        %v544 = vadd.f32 0.0, %v543
        %v545 = vpop.f32.mrb[0].mxu0
        %v546 = vpop.f32.mrb[0].mxu0
        %v547 = vadd.f32 0.0, %v546
        %v548 = vpop.f32.mrb[0].mxu0
        %549 = vmatprep.mubr.bf16.mxu0 0
        %550 = vmatmul.mubr.bf16.gmra.mrb[0].mxu0 %v332
        %v551 = vpop.f32.mrb[0].mxu0
        %v552 = vadd.f32 0.0, %v551
        %v553 = vpop.f32.mrb[0].mxu0
        %v554 = vpop.f32.mrb[0].mxu0
        %v555 = vadd.f32 0.0, %v554
        %v556 = vpop.f32.mrb[0].mxu0
        %557 = vmatprep.mubr.bf16.mxu0 0
        %558 = vmatmul.mubr.bf16.gmra.mrb[0].mxu0 %v340
        %v559 = vpop.f32.mrb[0].mxu0
        %v560 = vadd.f32 0.0, %v559
        %v561 = vpop.f32.mrb[0].mxu0
        %v562 = vpop.f32.mrb[0].mxu0
        %v563 = vadd.f32 0.0, %v562
        %v564 = vpop.f32.mrb[0].mxu0
        %565 = vmatprep.mubr.bf16.mxu0 0
        %566 = vmatmul.mubr.bf16.gmra.mrb[0].mxu0 %v348
        %v567 = vpop.f32.mrb[0].mxu0
        %v568 = vadd.f32 0.0, %v567
        %v569 = vpop.f32.mrb[0].mxu0
        %v570 = vpop.f32.mrb[0].mxu0
        %v571 = vadd.f32 0.0, %v570
        %v572 = vpop.f32.mrb[0].mxu0
        %573 = vmatprep.mubr.bf16.mxu0 0
        %574 = vmatmul.mubr.bf16.gmra.mrb[0].mxu0 %v356
        %v575 = vpop.f32.mrb[0].mxu0
        %v576 = vadd.f32 0.0, %v575
        %v577 = vpop.f32.mrb[0].mxu0
        %v578 = vpop.f32.mrb[0].mxu0
        %v579 = vadd.f32 0.0, %v578
        %v580 = vpop.f32.mrb[0].mxu0
        %581 = vmatprep.mubr.bf16.mxu0 0
        %582 = vmatmul.mubr.bf16.gmra.mrb[0].mxu0 %v364
        %v583 = vpop.f32.mrb[0].mxu0
        %v584 = vadd.f32 0.0, %v583
        %v585 = vpop.f32.mrb[0].mxu0
        %v586 = vpop.f32.mrb[0].mxu0
        %v587 = vadd.f32 0.0, %v586
        %v588 = vpop.f32.mrb[0].mxu0
        %589 = vmatprep.mubr.bf16.mxu0 0
        %590 = vmatmul.mubr.bf16.gmra.mrb[0].mxu0 %v372
        %v591 = vpop.f32.mrb[0].mxu0
        %v592 = vadd.f32 0.0, %v591
        %v593 = vpop.f32.mrb[0].mxu0
        %v594 = vpop.f32.mrb[0].mxu0
        %v595 = vadd.f32 0.0, %v594
        %v596 = vpop.f32.mrb[0].mxu0
        %597 = vmatprep.mubr.bf16.mxu0 0
        %598 = vmatmul.mubr.bf16.gmra.mrb[0].mxu0 %v380
        %v599 = vpop.f32.mrb[0].mxu0
        %v600 = vadd.f32 0.0, %v599
        %v601 = vpop.f32.mrb[0].mxu0
        %v602 = vpop.f32.mrb[0].mxu0
        %v603 = vadd.f32 0.0, %v602
        %v604 = vpop.f32.mrb[0].mxu0
        %605 = vmatprep.mubr.bf16.mxu0 0
        %606 = vmatmul.mubr.bf16.gmra.mrb[0].mxu0 %v388
        %v607 = vpop.f32.mrb[0].mxu0
        %v608 = vadd.f32 0.0, %v607
        %v609 = vpop.f32.mrb[0].mxu0
        %v610 = vpop.f32.mrb[0].mxu0
        %v611 = vadd.f32 0.0, %v610
        %v612 = vpop.f32.mrb[0].mxu0
        %613 = vmatprep.mubr.bf16.mxu0 0
        %614 = vmatmul.mubr.bf16.gmra.mrb[0].mxu0 %v396
        %v615 = vpop.f32.mrb[0].mxu0
        %v616 = vadd.f32 0.0, %v615
        %v617 = vpop.f32.mrb[0].mxu0
        %v618 = vpop.f32.mrb[0].mxu0
        %v619 = vadd.f32 0.0, %v618
        %v620 = vpop.f32.mrb[0].mxu0
        %621 = vmatprep.mubr.bf16.mxu0 0
        %622 = vmatmul.mubr.bf16.gmra.mrb[0].mxu0 %v404
        %v623 = vpop.f32.mrb[0].mxu0
        %v624 = vadd.f32 0.0, %v623
        %v625 = vpop.f32.mrb[0].mxu0
        %v626 = vpop.f32.mrb[0].mxu0
        %v627 = vadd.f32 0.0, %v626
        %v628 = vpop.f32.mrb[0].mxu0
        %629 = vmatprep.mubr.bf16.mxu0 0
        %630 = vmatmul.mubr.bf16.gmra.mrb[0].mxu0 %v412
        %v631 = vpop.f32.mrb[0].mxu0
        %v632 = vadd.f32 0.0, %v631
        %v633 = vpop.f32.mrb[0].mxu0
        %v634 = vpop.f32.mrb[0].mxu0
        %v635 = vadd.f32 0.0, %v634
        %v636 = vpop.f32.mrb[0].mxu0
        %637 = vdwg.mxu0
        %v654 = vunpack.c.l.b16 %v247
        %v655 = vunpack.c.l.b16 %v248
        %v656 = vunpack.c.l.b16 %v249
        %v657 = vunpack.c.l.b16 %v250
        %v658 = vunpack.c.l.b16 %v251
        %v659 = vunpack.c.l.b16 %v252
        %v660 = vunpack.c.l.b16 %v253
        %v661 = vunpack.c.l.b16 %v254
        %v662 = vunpack.c.l.b16 %v255
        %v663 = vunpack.c.l.b16 %v256
        %v664 = vunpack.c.l.b16 %v257
        %v665 = vunpack.c.l.b16 %v258
        %v666 = vunpack.c.l.b16 %v259
        %v667 = vunpack.c.l.b16 %v260
        %v668 = vunpack.c.l.b16 %v261
        %v669 = vunpack.c.l.b16 %v262
        %v670 = vpack.c.b16 %v655, %v654
        %v671 = vpack.c.b16 %v657, %v656
        %v672 = vpack.c.b16 %v659, %v658
        %v673 = vpack.c.b16 %v661, %v660
        %v674 = vpack.c.b16 %v663, %v662
        %v675 = vpack.c.b16 %v665, %v664
        %v676 = vpack.c.b16 %v667, %v666
        %v677 = vpack.c.b16 %v669, %v668
        %686 = vmatprep.subr.bf16.mxu0 0
        %687 = vmatpush1.bf16.msra.mxu0 %v670
        %688 = vmatprep.subr.bf16.mxu0 0
        %689 = vmatpush1.bf16.msra.mxu0 %v671
        %690 = vmatprep.subr.bf16.mxu0 0
        %691 = vmatpush1.bf16.msra.mxu0 %v672
        %692 = vmatprep.subr.bf16.mxu0 0
        %693 = vmatpush1.bf16.msra.mxu0 %v673
        %694 = vmatprep.subr.bf16.mxu0 0
        %695 = vmatpush1.bf16.msra.mxu0 %v674
        %696 = vmatprep.subr.bf16.mxu0 0
        %697 = vmatpush1.bf16.msra.mxu0 %v675
        %698 = vmatprep.subr.bf16.mxu0 0
        %699 = vmatpush1.bf16.msra.mxu0 %v676
        %700 = vmatprep.subr.bf16.mxu0 0
        %701 = vmatpush1.bf16.msra.mxu0 %v677
        %702 = vmatprep.subr.bf16.mxu0 0
        %703 = vmatpush1.bf16.msra.mxu0 0
        %704 = vmatprep.subr.bf16.mxu0 0
        %705 = vmatpush1.bf16.msra.mxu0 0
        %706 = vmatprep.subr.bf16.mxu0 0
        %707 = vmatpush1.bf16.msra.mxu0 0
        %708 = vmatprep.subr.bf16.mxu0 0
        %709 = vmatpush1.bf16.msra.mxu0 0
        %710 = vmatprep.subr.bf16.mxu0 0
        %711 = vmatpush1.bf16.msra.mxu0 0
        %712 = vmatprep.subr.bf16.mxu0 0
        %713 = vmatpush1.bf16.msra.mxu0 0
        %714 = vmatprep.subr.bf16.mxu0 0
        %715 = vmatpush1.bf16.msra.mxu0 0
        %716 = vmatprep.subr.bf16.mxu0 0
        %717 = vmatpush1.bf16.msra.mxu0 0
        %718 = vmatprep.mubr.bf16.mxu0 0
        %719 = vmatmul.mubr.bf16.gmra.mrb[0].mxu0 %v226
        %v720 = vpop.f32.mrb[0].mxu0
        %v721 = vadd.f32 %v512, %v720
        %v722 = vpop.f32.mrb[0].mxu0
        %v723 = vpop.f32.mrb[0].mxu0
        %v724 = vadd.f32 %v515, %v723
        %v725 = vpop.f32.mrb[0].mxu0
        %726 = vmatprep.mubr.bf16.mxu0 0
        %727 = vmatmul.mubr.bf16.gmra.mrb[0].mxu0 %v227
        %v728 = vpop.f32.mrb[0].mxu0
        %v729 = vadd.f32 %v520, %v728
        %v730 = vpop.f32.mrb[0].mxu0
        %v731 = vpop.f32.mrb[0].mxu0
        %v732 = vadd.f32 %v523, %v731
        %v733 = vpop.f32.mrb[0].mxu0
        %734 = vmatprep.mubr.bf16.mxu0 0
        %735 = vmatmul.mubr.bf16.gmra.mrb[0].mxu0 %v228
        %v736 = vpop.f32.mrb[0].mxu0
        %v737 = vadd.f32 %v528, %v736
        %v738 = vpop.f32.mrb[0].mxu0
        %v739 = vpop.f32.mrb[0].mxu0
        %v740 = vadd.f32 %v531, %v739
        %v741 = vpop.f32.mrb[0].mxu0
        %742 = vmatprep.mubr.bf16.mxu0 0
        %743 = vmatmul.mubr.bf16.gmra.mrb[0].mxu0 %v229
        %v744 = vpop.f32.mrb[0].mxu0
        %v745 = vadd.f32 %v536, %v744
        %v746 = vpop.f32.mrb[0].mxu0
        %v747 = vpop.f32.mrb[0].mxu0
        %v748 = vadd.f32 %v539, %v747
        %v749 = vpop.f32.mrb[0].mxu0
        %750 = vmatprep.mubr.bf16.mxu0 0
        %751 = vmatmul.mubr.bf16.gmra.mrb[0].mxu0 %v230
        %v752 = vpop.f32.mrb[0].mxu0
        %v753 = vadd.f32 %v544, %v752
        %v754 = vpop.f32.mrb[0].mxu0
        %v755 = vpop.f32.mrb[0].mxu0
        %v756 = vadd.f32 %v547, %v755
        %v757 = vpop.f32.mrb[0].mxu0
        %758 = vmatprep.mubr.bf16.mxu0 0
        %759 = vmatmul.mubr.bf16.gmra.mrb[0].mxu0 %v231
        %v760 = vpop.f32.mrb[0].mxu0
        %v761 = vadd.f32 %v552, %v760
        %v762 = vpop.f32.mrb[0].mxu0
        %v763 = vpop.f32.mrb[0].mxu0
        %v764 = vadd.f32 %v555, %v763
        %v765 = vpop.f32.mrb[0].mxu0
        %766 = vmatprep.mubr.bf16.mxu0 0
        %767 = vmatmul.mubr.bf16.gmra.mrb[0].mxu0 %v232
        %v768 = vpop.f32.mrb[0].mxu0
        %v769 = vadd.f32 %v560, %v768
        %v770 = vpop.f32.mrb[0].mxu0
        %v771 = vpop.f32.mrb[0].mxu0
        %v772 = vadd.f32 %v563, %v771
        %v773 = vpop.f32.mrb[0].mxu0
        %774 = vmatprep.mubr.bf16.mxu0 0
        %775 = vmatmul.mubr.bf16.gmra.mrb[0].mxu0 %v233
        %v776 = vpop.f32.mrb[0].mxu0
        %v777 = vadd.f32 %v568, %v776
        %v778 = vpop.f32.mrb[0].mxu0
        %v779 = vpop.f32.mrb[0].mxu0
        %v780 = vadd.f32 %v571, %v779
        %v781 = vpop.f32.mrb[0].mxu0
        %782 = vmatprep.mubr.bf16.mxu0 0
        %783 = vmatmul.mubr.bf16.gmra.mrb[0].mxu0 %v234
        %v784 = vpop.f32.mrb[0].mxu0
        %v785 = vadd.f32 %v576, %v784
        %v786 = vpop.f32.mrb[0].mxu0
        %v787 = vpop.f32.mrb[0].mxu0
        %v788 = vadd.f32 %v579, %v787
        %v789 = vpop.f32.mrb[0].mxu0
        %790 = vmatprep.mubr.bf16.mxu0 0
        %791 = vmatmul.mubr.bf16.gmra.mrb[0].mxu0 %v235
        %v792 = vpop.f32.mrb[0].mxu0
        %v793 = vadd.f32 %v584, %v792
        %v794 = vpop.f32.mrb[0].mxu0
        %v795 = vpop.f32.mrb[0].mxu0
        %v796 = vadd.f32 %v587, %v795
        %v797 = vpop.f32.mrb[0].mxu0
        %798 = vmatprep.mubr.bf16.mxu0 0
        %799 = vmatmul.mubr.bf16.gmra.mrb[0].mxu0 %v236
        %v800 = vpop.f32.mrb[0].mxu0
        %v801 = vadd.f32 %v592, %v800
        %v802 = vpop.f32.mrb[0].mxu0
        %v803 = vpop.f32.mrb[0].mxu0
        %v804 = vadd.f32 %v595, %v803
        %v805 = vpop.f32.mrb[0].mxu0
        %806 = vmatprep.mubr.bf16.mxu0 0
        %807 = vmatmul.mubr.bf16.gmra.mrb[0].mxu0 %v237
        %v808 = vpop.f32.mrb[0].mxu0
        %v809 = vadd.f32 %v600, %v808
        %v810 = vpop.f32.mrb[0].mxu0
        %v811 = vpop.f32.mrb[0].mxu0
        %v812 = vadd.f32 %v603, %v811
        %v813 = vpop.f32.mrb[0].mxu0
        %814 = vmatprep.mubr.bf16.mxu0 0
        %815 = vmatmul.mubr.bf16.gmra.mrb[0].mxu0 %v238
        %v816 = vpop.f32.mrb[0].mxu0
        %v817 = vadd.f32 %v608, %v816
        %v818 = vpop.f32.mrb[0].mxu0
        %v819 = vpop.f32.mrb[0].mxu0
        %v820 = vadd.f32 %v611, %v819
        %v821 = vpop.f32.mrb[0].mxu0
        %822 = vmatprep.mubr.bf16.mxu0 0
        %823 = vmatmul.mubr.bf16.gmra.mrb[0].mxu0 %v239
        %v824 = vpop.f32.mrb[0].mxu0
        %v825 = vadd.f32 %v616, %v824
        %v826 = vpop.f32.mrb[0].mxu0
        %v827 = vpop.f32.mrb[0].mxu0
        %v828 = vadd.f32 %v619, %v827
        %v829 = vpop.f32.mrb[0].mxu0
        %830 = vmatprep.mubr.bf16.mxu0 0
        %831 = vmatmul.mubr.bf16.gmra.mrb[0].mxu0 %v240
        %v832 = vpop.f32.mrb[0].mxu0
        %v833 = vadd.f32 %v624, %v832
        %v834 = vpop.f32.mrb[0].mxu0
        %v835 = vpop.f32.mrb[0].mxu0
        %v836 = vadd.f32 %v627, %v835
        %v837 = vpop.f32.mrb[0].mxu0
        %838 = vmatprep.mubr.bf16.mxu0 0
        %839 = vmatmul.mubr.bf16.gmra.mrb[0].mxu0 %v241
        %v840 = vpop.f32.mrb[0].mxu0
        %v841 = vadd.f32 %v632, %v840
        %v842 = vpop.f32.mrb[0].mxu0
        %v843 = vpop.f32.mrb[0].mxu0
        %v844 = vadd.f32 %v635, %v843
        %v845 = vpop.f32.mrb[0].mxu0
        %846 = vdwg.mxu0
        %s847 = scalar_lea.vmem [#allocation4], 128
        %v848 = vld [vmem:[%s847] sm:$0xf]
        %v849 = vld [vmem:[%s847 + $0x4] sm:$0xf]
        %v850 = vld [vmem:[%s847 + $0x8] sm:$0xf]
        %v851 = vld [vmem:[%s847 + $0xc] sm:$0xf]
        %v852 = vld [vmem:[%s847 + $0x10] sm:$0xf]
        %v853 = vld [vmem:[%s847 + $0x14] sm:$0xf]
        %v854 = vld [vmem:[%s847 + $0x18] sm:$0xf]
        %v855 = vld [vmem:[%s847 + $0x1c] sm:$0xf]
        %v856 = vld [vmem:[%s847 + $0x20] sm:$0xf]
        %v857 = vld [vmem:[%s847 + $0x24] sm:$0xf]
        %v858 = vld [vmem:[%s847 + $0x28] sm:$0xf]
        %v859 = vld [vmem:[%s847 + $0x2c] sm:$0xf]
        %v860 = vld [vmem:[%s847 + $0x30] sm:$0xf]
        %v861 = vld [vmem:[%s847 + $0x34] sm:$0xf]
        %v862 = vld [vmem:[%s847 + $0x38] sm:$0xf]
        %v863 = vld [vmem:[%s847 + $0x3c] sm:$0xf]
        %vm881 = vcmask 1046528
        %v882 = vrot.slane %v226, 1
        %v883 = vrot.slane %v227, 1
        %v884 = vsel %vm881, %v882, %v883
        %v885 = vrot.slane %v228, 1
        %v886 = vsel %vm881, %v883, %v885
        %v887 = vrot.slane %v229, 1
        %v888 = vsel %vm881, %v885, %v887
        %v889 = vrot.slane %v230, 1
        %v890 = vsel %vm881, %v887, %v889
        %v891 = vrot.slane %v231, 1
        %v892 = vsel %vm881, %v889, %v891
        %v893 = vrot.slane %v232, 1
        %v894 = vsel %vm881, %v891, %v893
        %v895 = vrot.slane %v233, 1
        %v896 = vsel %vm881, %v893, %v895
        %v897 = vrot.slane %v234, 1
        %v898 = vsel %vm881, %v895, %v897
        %v899 = vrot.slane %v235, 1
        %v900 = vsel %vm881, %v897, %v899
        %v901 = vrot.slane %v236, 1
        %v902 = vsel %vm881, %v899, %v901
        %v903 = vrot.slane %v237, 1
        %v904 = vsel %vm881, %v901, %v903
        %v905 = vrot.slane %v238, 1
        %v906 = vsel %vm881, %v903, %v905
        %v907 = vrot.slane %v239, 1
        %v908 = vsel %vm881, %v905, %v907
        %v909 = vrot.slane %v240, 1
        %v910 = vsel %vm881, %v907, %v909
        %v911 = vrot.slane %v241, 1
        %v912 = vsel %vm881, %v909, %v911
        %v913 = vrot.slane %v242, 1
        %v914 = vsel %vm881, %v911, %v913
        %v947 = vunpack.c.l.b16 %v848
        %v948 = vunpack.c.l.b16 %v849
        %v949 = vunpack.c.l.b16 %v850
        %v950 = vunpack.c.l.b16 %v851
        %v951 = vunpack.c.l.b16 %v852
        %v952 = vunpack.c.l.b16 %v853
        %v953 = vunpack.c.l.b16 %v854
        %v954 = vunpack.c.l.b16 %v855
        %v955 = vunpack.c.l.b16 %v856
        %v956 = vunpack.c.l.b16 %v857
        %v957 = vunpack.c.l.b16 %v858
        %v958 = vunpack.c.l.b16 %v859
        %v959 = vunpack.c.l.b16 %v860
        %v960 = vunpack.c.l.b16 %v861
        %v961 = vunpack.c.l.b16 %v862
        %v962 = vunpack.c.l.b16 %v863
        %v963 = vpack.c.b16 %v948, %v947
        %v964 = vpack.c.b16 %v950, %v949
        %v965 = vpack.c.b16 %v952, %v951
        %v966 = vpack.c.b16 %v954, %v953
        %v967 = vpack.c.b16 %v956, %v955
        %v968 = vpack.c.b16 %v958, %v957
        %v969 = vpack.c.b16 %v960, %v959
        %v970 = vpack.c.b16 %v962, %v961
        %979 = vmatprep.subr.bf16.mxu0 0
        %980 = vmatpush1.bf16.msra.mxu0 %v963
        %981 = vmatprep.subr.bf16.mxu0 0
        %982 = vmatpush1.bf16.msra.mxu0 %v964
        %983 = vmatprep.subr.bf16.mxu0 0
        %984 = vmatpush1.bf16.msra.mxu0 %v965
        %985 = vmatprep.subr.bf16.mxu0 0
        %986 = vmatpush1.bf16.msra.mxu0 %v966
        %987 = vmatprep.subr.bf16.mxu0 0
        %988 = vmatpush1.bf16.msra.mxu0 %v967
        %989 = vmatprep.subr.bf16.mxu0 0
        %990 = vmatpush1.bf16.msra.mxu0 %v968
        %991 = vmatprep.subr.bf16.mxu0 0
        %992 = vmatpush1.bf16.msra.mxu0 %v969
        %993 = vmatprep.subr.bf16.mxu0 0
        %994 = vmatpush1.bf16.msra.mxu0 %v970
        %995 = vmatprep.subr.bf16.mxu0 0
        %996 = vmatpush1.bf16.msra.mxu0 0
        %997 = vmatprep.subr.bf16.mxu0 0
        %998 = vmatpush1.bf16.msra.mxu0 0
        %999 = vmatprep.subr.bf16.mxu0 0
        %1000 = vmatpush1.bf16.msra.mxu0 0
        %1001 = vmatprep.subr.bf16.mxu0 0
        %1002 = vmatpush1.bf16.msra.mxu0 0
        %1003 = vmatprep.subr.bf16.mxu0 0
        %1004 = vmatpush1.bf16.msra.mxu0 0
        %1005 = vmatprep.subr.bf16.mxu0 0
        %1006 = vmatpush1.bf16.msra.mxu0 0
        %1007 = vmatprep.subr.bf16.mxu0 0
        %1008 = vmatpush1.bf16.msra.mxu0 0
        %1009 = vmatprep.subr.bf16.mxu0 0
        %1010 = vmatpush1.bf16.msra.mxu0 0
        %1011 = vmatprep.mubr.bf16.mxu0 0
        %1012 = vmatmul.mubr.bf16.gmra.mrb[0].mxu0 %v884
        %v1013 = vpop.f32.mrb[0].mxu0
        %v1014 = vadd.f32 0.0, %v1013
        %v1015 = vpop.f32.mrb[0].mxu0
        %v1016 = vpop.f32.mrb[0].mxu0
        %v1017 = vadd.f32 0.0, %v1016
        %v1018 = vpop.f32.mrb[0].mxu0
        %1019 = vmatprep.mubr.bf16.mxu0 0
        %1020 = vmatmul.mubr.bf16.gmra.mrb[0].mxu0 %v886
        %v1021 = vpop.f32.mrb[0].mxu0
        %v1022 = vadd.f32 0.0, %v1021
        %v1023 = vpop.f32.mrb[0].mxu0
        %v1024 = vpop.f32.mrb[0].mxu0
        %v1025 = vadd.f32 0.0, %v1024
        %v1026 = vpop.f32.mrb[0].mxu0
        %1027 = vmatprep.mubr.bf16.mxu0 0
        %1028 = vmatmul.mubr.bf16.gmra.mrb[0].mxu0 %v888
        %v1029 = vpop.f32.mrb[0].mxu0
        %v1030 = vadd.f32 0.0, %v1029
        %v1031 = vpop.f32.mrb[0].mxu0
        %v1032 = vpop.f32.mrb[0].mxu0
        %v1033 = vadd.f32 0.0, %v1032
        %v1034 = vpop.f32.mrb[0].mxu0
        %1035 = vmatprep.mubr.bf16.mxu0 0
        %1036 = vmatmul.mubr.bf16.gmra.mrb[0].mxu0 %v890
        %v1037 = vpop.f32.mrb[0].mxu0
        %v1038 = vadd.f32 0.0, %v1037
        %v1039 = vpop.f32.mrb[0].mxu0
        %v1040 = vpop.f32.mrb[0].mxu0
        %v1041 = vadd.f32 0.0, %v1040
        %v1042 = vpop.f32.mrb[0].mxu0
        %1043 = vmatprep.mubr.bf16.mxu0 0
        %1044 = vmatmul.mubr.bf16.gmra.mrb[0].mxu0 %v892
        %v1045 = vpop.f32.mrb[0].mxu0
        %v1046 = vadd.f32 0.0, %v1045
        %v1047 = vpop.f32.mrb[0].mxu0
        %v1048 = vpop.f32.mrb[0].mxu0
        %v1049 = vadd.f32 0.0, %v1048
        %v1050 = vpop.f32.mrb[0].mxu0
        %1051 = vmatprep.mubr.bf16.mxu0 0
        %1052 = vmatmul.mubr.bf16.gmra.mrb[0].mxu0 %v894
        %v1053 = vpop.f32.mrb[0].mxu0
        %v1054 = vadd.f32 0.0, %v1053
        %v1055 = vpop.f32.mrb[0].mxu0
        %v1056 = vpop.f32.mrb[0].mxu0
        %v1057 = vadd.f32 0.0, %v1056
        %v1058 = vpop.f32.mrb[0].mxu0
        %1059 = vmatprep.mubr.bf16.mxu0 0
        %1060 = vmatmul.mubr.bf16.gmra.mrb[0].mxu0 %v896
        %v1061 = vpop.f32.mrb[0].mxu0
        %v1062 = vadd.f32 0.0, %v1061
        %v1063 = vpop.f32.mrb[0].mxu0
        %v1064 = vpop.f32.mrb[0].mxu0
        %v1065 = vadd.f32 0.0, %v1064
        %v1066 = vpop.f32.mrb[0].mxu0
        %1067 = vmatprep.mubr.bf16.mxu0 0
        %1068 = vmatmul.mubr.bf16.gmra.mrb[0].mxu0 %v898
        %v1069 = vpop.f32.mrb[0].mxu0
        %v1070 = vadd.f32 0.0, %v1069
        %v1071 = vpop.f32.mrb[0].mxu0
        %v1072 = vpop.f32.mrb[0].mxu0
        %v1073 = vadd.f32 0.0, %v1072
        %v1074 = vpop.f32.mrb[0].mxu0
        %1075 = vmatprep.mubr.bf16.mxu0 0
        %1076 = vmatmul.mubr.bf16.gmra.mrb[0].mxu0 %v900
        %v1077 = vpop.f32.mrb[0].mxu0
        %v1078 = vadd.f32 0.0, %v1077
        %v1079 = vpop.f32.mrb[0].mxu0
        %v1080 = vpop.f32.mrb[0].mxu0
        %v1081 = vadd.f32 0.0, %v1080
        %v1082 = vpop.f32.mrb[0].mxu0
        %1083 = vmatprep.mubr.bf16.mxu0 0
        %1084 = vmatmul.mubr.bf16.gmra.mrb[0].mxu0 %v902
        %v1085 = vpop.f32.mrb[0].mxu0
        %v1086 = vadd.f32 0.0, %v1085
        %v1087 = vpop.f32.mrb[0].mxu0
        %v1088 = vpop.f32.mrb[0].mxu0
        %v1089 = vadd.f32 0.0, %v1088
        %v1090 = vpop.f32.mrb[0].mxu0
        %1091 = vmatprep.mubr.bf16.mxu0 0
        %1092 = vmatmul.mubr.bf16.gmra.mrb[0].mxu0 %v904
        %v1093 = vpop.f32.mrb[0].mxu0
        %v1094 = vadd.f32 0.0, %v1093
        %v1095 = vpop.f32.mrb[0].mxu0
        %v1096 = vpop.f32.mrb[0].mxu0
        %v1097 = vadd.f32 0.0, %v1096
        %v1098 = vpop.f32.mrb[0].mxu0
        %1099 = vmatprep.mubr.bf16.mxu0 0
        %1100 = vmatmul.mubr.bf16.gmra.mrb[0].mxu0 %v906
        %v1101 = vpop.f32.mrb[0].mxu0
        %v1102 = vadd.f32 0.0, %v1101
        %v1103 = vpop.f32.mrb[0].mxu0
        %v1104 = vpop.f32.mrb[0].mxu0
        %v1105 = vadd.f32 0.0, %v1104
        %v1106 = vpop.f32.mrb[0].mxu0
        %1107 = vmatprep.mubr.bf16.mxu0 0
        %1108 = vmatmul.mubr.bf16.gmra.mrb[0].mxu0 %v908
        %v1109 = vpop.f32.mrb[0].mxu0
        %v1110 = vadd.f32 0.0, %v1109
        %v1111 = vpop.f32.mrb[0].mxu0
        %v1112 = vpop.f32.mrb[0].mxu0
        %v1113 = vadd.f32 0.0, %v1112
        %v1114 = vpop.f32.mrb[0].mxu0
        %1115 = vmatprep.mubr.bf16.mxu0 0
        %1116 = vmatmul.mubr.bf16.gmra.mrb[0].mxu0 %v910
        %v1117 = vpop.f32.mrb[0].mxu0
        %v1118 = vadd.f32 0.0, %v1117
        %v1119 = vpop.f32.mrb[0].mxu0
        %v1120 = vpop.f32.mrb[0].mxu0
        %v1121 = vadd.f32 0.0, %v1120
        %v1122 = vpop.f32.mrb[0].mxu0
        %1123 = vmatprep.mubr.bf16.mxu0 0
        %1124 = vmatmul.mubr.bf16.gmra.mrb[0].mxu0 %v912
        %v1125 = vpop.f32.mrb[0].mxu0
        %v1126 = vadd.f32 0.0, %v1125
        %v1127 = vpop.f32.mrb[0].mxu0
        %v1128 = vpop.f32.mrb[0].mxu0
        %v1129 = vadd.f32 0.0, %v1128
        %v1130 = vpop.f32.mrb[0].mxu0
        %1131 = vmatprep.mubr.bf16.mxu0 0
        %1132 = vmatmul.mubr.bf16.gmra.mrb[0].mxu0 %v914
        %v1133 = vpop.f32.mrb[0].mxu0
        %v1134 = vadd.f32 0.0, %v1133
        %v1135 = vpop.f32.mrb[0].mxu0
        %v1136 = vpop.f32.mrb[0].mxu0
        %v1137 = vadd.f32 0.0, %v1136
        %v1138 = vpop.f32.mrb[0].mxu0
        %1139 = vdwg.mxu0
        %v1140 = vadd.f32 %v721, %v1014
        %v1141 = vadd.f32 %v724, %v1017
        %v1142 = vadd.f32 %v729, %v1022
        %v1143 = vadd.f32 %v732, %v1025
        %v1144 = vadd.f32 %v737, %v1030
        %v1145 = vadd.f32 %v740, %v1033
        %v1146 = vadd.f32 %v745, %v1038
        %v1147 = vadd.f32 %v748, %v1041
        %v1148 = vadd.f32 %v753, %v1046
        %v1149 = vadd.f32 %v756, %v1049
        %v1150 = vadd.f32 %v761, %v1054
        %v1151 = vadd.f32 %v764, %v1057
        %v1152 = vadd.f32 %v769, %v1062
        %v1153 = vadd.f32 %v772, %v1065
        %v1154 = vadd.f32 %v777, %v1070
        %v1155 = vadd.f32 %v780, %v1073
        %v1156 = vadd.f32 %v785, %v1078
        %v1157 = vadd.f32 %v788, %v1081
        %v1158 = vadd.f32 %v793, %v1086
        %v1159 = vadd.f32 %v796, %v1089
        %v1160 = vadd.f32 %v801, %v1094
        %v1161 = vadd.f32 %v804, %v1097
        %v1162 = vadd.f32 %v809, %v1102
        %v1163 = vadd.f32 %v812, %v1105
        %v1164 = vadd.f32 %v817, %v1110
        %v1165 = vadd.f32 %v820, %v1113
        %v1166 = vadd.f32 %v825, %v1118
        %v1167 = vadd.f32 %v828, %v1121
        %v1168 = vadd.f32 %v833, %v1126
        %v1169 = vadd.f32 %v836, %v1129
        %v1170 = vadd.f32 %v841, %v1134
        %v1171 = vadd.f32 %v844, %v1137
        %s1172 = scalar_lea.vmem [#allocation4], 192
        %v1173 = vld [vmem:[%s1172] sm:$0xf]
        %v1174 = vld [vmem:[%s1172 + $0x4] sm:$0xf]
        %v1175 = vld [vmem:[%s1172 + $0x8] sm:$0xf]
        %v1176 = vld [vmem:[%s1172 + $0xc] sm:$0xf]
        %v1177 = vld [vmem:[%s1172 + $0x10] sm:$0xf]
        %v1178 = vld [vmem:[%s1172 + $0x14] sm:$0xf]
        %v1179 = vld [vmem:[%s1172 + $0x18] sm:$0xf]
        %v1180 = vld [vmem:[%s1172 + $0x1c] sm:$0xf]
        %v1181 = vld [vmem:[%s1172 + $0x20] sm:$0xf]
        %v1182 = vld [vmem:[%s1172 + $0x24] sm:$0xf]
        %v1183 = vld [vmem:[%s1172 + $0x28] sm:$0xf]
        %v1184 = vld [vmem:[%s1172 + $0x2c] sm:$0xf]
        %v1185 = vld [vmem:[%s1172 + $0x30] sm:$0xf]
        %v1186 = vld [vmem:[%s1172 + $0x34] sm:$0xf]
        %v1187 = vld [vmem:[%s1172 + $0x38] sm:$0xf]
        %v1188 = vld [vmem:[%s1172 + $0x3c] sm:$0xf]
        %v1205 = vunpack.c.l.b16 %v1173
        %v1206 = vunpack.c.l.b16 %v1174
        %v1207 = vunpack.c.l.b16 %v1175
        %v1208 = vunpack.c.l.b16 %v1176
        %v1209 = vunpack.c.l.b16 %v1177
        %v1210 = vunpack.c.l.b16 %v1178
        %v1211 = vunpack.c.l.b16 %v1179
        %v1212 = vunpack.c.l.b16 %v1180
        %v1213 = vunpack.c.l.b16 %v1181
        %v1214 = vunpack.c.l.b16 %v1182
        %v1215 = vunpack.c.l.b16 %v1183
        %v1216 = vunpack.c.l.b16 %v1184
        %v1217 = vunpack.c.l.b16 %v1185
        %v1218 = vunpack.c.l.b16 %v1186
        %v1219 = vunpack.c.l.b16 %v1187
        %v1220 = vunpack.c.l.b16 %v1188
        %v1221 = vpack.c.b16 %v1206, %v1205
        %v1222 = vpack.c.b16 %v1208, %v1207
        %v1223 = vpack.c.b16 %v1210, %v1209
        %v1224 = vpack.c.b16 %v1212, %v1211
        %v1225 = vpack.c.b16 %v1214, %v1213
        %v1226 = vpack.c.b16 %v1216, %v1215
        %v1227 = vpack.c.b16 %v1218, %v1217
        %v1228 = vpack.c.b16 %v1220, %v1219
        %1237 = vmatprep.subr.bf16.mxu0 0
        %1238 = vmatpush1.bf16.msra.mxu0 %v1221
        %1239 = vmatprep.subr.bf16.mxu0 0
        %1240 = vmatpush1.bf16.msra.mxu0 %v1222
        %1241 = vmatprep.subr.bf16.mxu0 0
        %1242 = vmatpush1.bf16.msra.mxu0 %v1223
        %1243 = vmatprep.subr.bf16.mxu0 0
        %1244 = vmatpush1.bf16.msra.mxu0 %v1224
        %1245 = vmatprep.subr.bf16.mxu0 0
        %1246 = vmatpush1.bf16.msra.mxu0 %v1225
        %1247 = vmatprep.subr.bf16.mxu0 0
        %1248 = vmatpush1.bf16.msra.mxu0 %v1226
        %1249 = vmatprep.subr.bf16.mxu0 0
        %1250 = vmatpush1.bf16.msra.mxu0 %v1227
        %1251 = vmatprep.subr.bf16.mxu0 0
        %1252 = vmatpush1.bf16.msra.mxu0 %v1228
        %1253 = vmatprep.subr.bf16.mxu0 0
        %1254 = vmatpush1.bf16.msra.mxu0 0
        %1255 = vmatprep.subr.bf16.mxu0 0
        %1256 = vmatpush1.bf16.msra.mxu0 0
        %1257 = vmatprep.subr.bf16.mxu0 0
        %1258 = vmatpush1.bf16.msra.mxu0 0
        %1259 = vmatprep.subr.bf16.mxu0 0
        %1260 = vmatpush1.bf16.msra.mxu0 0
        %1261 = vmatprep.subr.bf16.mxu0 0
        %1262 = vmatpush1.bf16.msra.mxu0 0
        %1263 = vmatprep.subr.bf16.mxu0 0
        %1264 = vmatpush1.bf16.msra.mxu0 0
        %1265 = vmatprep.subr.bf16.mxu0 0
        %1266 = vmatpush1.bf16.msra.mxu0 0
        %1267 = vmatprep.subr.bf16.mxu0 0
        %1268 = vmatpush1.bf16.msra.mxu0 0
        %1269 = vmatprep.mubr.bf16.mxu0 0
        %1270 = vmatmul.mubr.bf16.gmra.mrb[0].mxu0 %v228
        %v1271 = vpop.f32.mrb[0].mxu0
        %v1272 = vadd.f32 0.0, %v1271
        %v1273 = vpop.f32.mrb[0].mxu0
        %v1274 = vpop.f32.mrb[0].mxu0
        %v1275 = vadd.f32 0.0, %v1274
        %v1276 = vpop.f32.mrb[0].mxu0
        %1277 = vmatprep.mubr.bf16.mxu0 0
        %1278 = vmatmul.mubr.bf16.gmra.mrb[0].mxu0 %v229
        %v1279 = vpop.f32.mrb[0].mxu0
        %v1280 = vadd.f32 0.0, %v1279
        %v1281 = vpop.f32.mrb[0].mxu0
        %v1282 = vpop.f32.mrb[0].mxu0
        %v1283 = vadd.f32 0.0, %v1282
        %v1284 = vpop.f32.mrb[0].mxu0
        %1285 = vmatprep.mubr.bf16.mxu0 0
        %1286 = vmatmul.mubr.bf16.gmra.mrb[0].mxu0 %v230
        %v1287 = vpop.f32.mrb[0].mxu0
        %v1288 = vadd.f32 0.0, %v1287
        %v1289 = vpop.f32.mrb[0].mxu0
        %v1290 = vpop.f32.mrb[0].mxu0
        %v1291 = vadd.f32 0.0, %v1290
        %v1292 = vpop.f32.mrb[0].mxu0
        %1293 = vmatprep.mubr.bf16.mxu0 0
        %1294 = vmatmul.mubr.bf16.gmra.mrb[0].mxu0 %v231
        %v1295 = vpop.f32.mrb[0].mxu0
        %v1296 = vadd.f32 0.0, %v1295
        %v1297 = vpop.f32.mrb[0].mxu0
        %v1298 = vpop.f32.mrb[0].mxu0
        %v1299 = vadd.f32 0.0, %v1298
        %v1300 = vpop.f32.mrb[0].mxu0
        %1301 = vmatprep.mubr.bf16.mxu0 0
        %1302 = vmatmul.mubr.bf16.gmra.mrb[0].mxu0 %v232
        %v1303 = vpop.f32.mrb[0].mxu0
        %v1304 = vadd.f32 0.0, %v1303
        %v1305 = vpop.f32.mrb[0].mxu0
        %v1306 = vpop.f32.mrb[0].mxu0
        %v1307 = vadd.f32 0.0, %v1306
        %v1308 = vpop.f32.mrb[0].mxu0
        %1309 = vmatprep.mubr.bf16.mxu0 0
        %1310 = vmatmul.mubr.bf16.gmra.mrb[0].mxu0 %v233
        %v1311 = vpop.f32.mrb[0].mxu0
        %v1312 = vadd.f32 0.0, %v1311
        %v1313 = vpop.f32.mrb[0].mxu0
        %v1314 = vpop.f32.mrb[0].mxu0
        %v1315 = vadd.f32 0.0, %v1314
        %v1316 = vpop.f32.mrb[0].mxu0
        %1317 = vmatprep.mubr.bf16.mxu0 0
        %1318 = vmatmul.mubr.bf16.gmra.mrb[0].mxu0 %v234
        %v1319 = vpop.f32.mrb[0].mxu0
        %v1320 = vadd.f32 0.0, %v1319
        %v1321 = vpop.f32.mrb[0].mxu0
        %v1322 = vpop.f32.mrb[0].mxu0
        %v1323 = vadd.f32 0.0, %v1322
        %v1324 = vpop.f32.mrb[0].mxu0
        %1325 = vmatprep.mubr.bf16.mxu0 0
        %1326 = vmatmul.mubr.bf16.gmra.mrb[0].mxu0 %v235
        %v1327 = vpop.f32.mrb[0].mxu0
        %v1328 = vadd.f32 0.0, %v1327
        %v1329 = vpop.f32.mrb[0].mxu0
        %v1330 = vpop.f32.mrb[0].mxu0
        %v1331 = vadd.f32 0.0, %v1330
        %v1332 = vpop.f32.mrb[0].mxu0
        %1333 = vmatprep.mubr.bf16.mxu0 0
        %1334 = vmatmul.mubr.bf16.gmra.mrb[0].mxu0 %v236
        %v1335 = vpop.f32.mrb[0].mxu0
        %v1336 = vadd.f32 0.0, %v1335
        %v1337 = vpop.f32.mrb[0].mxu0
        %v1338 = vpop.f32.mrb[0].mxu0
        %v1339 = vadd.f32 0.0, %v1338
        %v1340 = vpop.f32.mrb[0].mxu0
        %1341 = vmatprep.mubr.bf16.mxu0 0
        %1342 = vmatmul.mubr.bf16.gmra.mrb[0].mxu0 %v237
        %v1343 = vpop.f32.mrb[0].mxu0
        %v1344 = vadd.f32 0.0, %v1343
        %v1345 = vpop.f32.mrb[0].mxu0
        %v1346 = vpop.f32.mrb[0].mxu0
        %v1347 = vadd.f32 0.0, %v1346
        %v1348 = vpop.f32.mrb[0].mxu0
        %1349 = vmatprep.mubr.bf16.mxu0 0
        %1350 = vmatmul.mubr.bf16.gmra.mrb[0].mxu0 %v238
        %v1351 = vpop.f32.mrb[0].mxu0
        %v1352 = vadd.f32 0.0, %v1351
        %v1353 = vpop.f32.mrb[0].mxu0
        %v1354 = vpop.f32.mrb[0].mxu0
        %v1355 = vadd.f32 0.0, %v1354
        %v1356 = vpop.f32.mrb[0].mxu0
        %1357 = vmatprep.mubr.bf16.mxu0 0
        %1358 = vmatmul.mubr.bf16.gmra.mrb[0].mxu0 %v239
        %v1359 = vpop.f32.mrb[0].mxu0
        %v1360 = vadd.f32 0.0, %v1359
        %v1361 = vpop.f32.mrb[0].mxu0
        %v1362 = vpop.f32.mrb[0].mxu0
        %v1363 = vadd.f32 0.0, %v1362
        %v1364 = vpop.f32.mrb[0].mxu0
        %1365 = vmatprep.mubr.bf16.mxu0 0
        %1366 = vmatmul.mubr.bf16.gmra.mrb[0].mxu0 %v240
        %v1367 = vpop.f32.mrb[0].mxu0
        %v1368 = vadd.f32 0.0, %v1367
        %v1369 = vpop.f32.mrb[0].mxu0
        %v1370 = vpop.f32.mrb[0].mxu0
        %v1371 = vadd.f32 0.0, %v1370
        %v1372 = vpop.f32.mrb[0].mxu0
        %1373 = vmatprep.mubr.bf16.mxu0 0
        %1374 = vmatmul.mubr.bf16.gmra.mrb[0].mxu0 %v241
        %v1375 = vpop.f32.mrb[0].mxu0
        %v1376 = vadd.f32 0.0, %v1375
        %v1377 = vpop.f32.mrb[0].mxu0
        %v1378 = vpop.f32.mrb[0].mxu0
        %v1379 = vadd.f32 0.0, %v1378
        %v1380 = vpop.f32.mrb[0].mxu0
        %1381 = vmatprep.mubr.bf16.mxu0 0
        %1382 = vmatmul.mubr.bf16.gmra.mrb[0].mxu0 %v242
        %v1383 = vpop.f32.mrb[0].mxu0
        %v1384 = vadd.f32 0.0, %v1383
        %v1385 = vpop.f32.mrb[0].mxu0
        %v1386 = vpop.f32.mrb[0].mxu0
        %v1387 = vadd.f32 0.0, %v1386
        %v1388 = vpop.f32.mrb[0].mxu0
        %1389 = vmatprep.mubr.bf16.mxu0 0
        %1390 = vmatmul.mubr.bf16.gmra.mrb[0].mxu0 %v243
        %v1391 = vpop.f32.mrb[0].mxu0
        %v1392 = vadd.f32 0.0, %v1391
        %v1393 = vpop.f32.mrb[0].mxu0
        %v1394 = vpop.f32.mrb[0].mxu0
        %v1395 = vadd.f32 0.0, %v1394
        %v1396 = vpop.f32.mrb[0].mxu0
        %1397 = vdwg.mxu0
        %v1398 = vadd.f32 %v1140, %v1272
        %v1399 = vadd.f32 %v1141, %v1275
        %v1400 = vadd.f32 %v1142, %v1280
        %v1401 = vadd.f32 %v1143, %v1283
        %v1402 = vadd.f32 %v1144, %v1288
        %v1403 = vadd.f32 %v1145, %v1291
        %v1404 = vadd.f32 %v1146, %v1296
        %v1405 = vadd.f32 %v1147, %v1299
        %v1406 = vadd.f32 %v1148, %v1304
        %v1407 = vadd.f32 %v1149, %v1307
        %v1408 = vadd.f32 %v1150, %v1312
        %v1409 = vadd.f32 %v1151, %v1315
        %v1410 = vadd.f32 %v1152, %v1320
        %v1411 = vadd.f32 %v1153, %v1323
        %v1412 = vadd.f32 %v1154, %v1328
        %v1413 = vadd.f32 %v1155, %v1331
        %v1414 = vadd.f32 %v1156, %v1336
        %v1415 = vadd.f32 %v1157, %v1339
        %v1416 = vadd.f32 %v1158, %v1344
        %v1417 = vadd.f32 %v1159, %v1347
        %v1418 = vadd.f32 %v1160, %v1352
        %v1419 = vadd.f32 %v1161, %v1355
        %v1420 = vadd.f32 %v1162, %v1360
        %v1421 = vadd.f32 %v1163, %v1363
        %v1422 = vadd.f32 %v1164, %v1368
        %v1423 = vadd.f32 %v1165, %v1371
        %v1424 = vadd.f32 %v1166, %v1376
        %v1425 = vadd.f32 %v1167, %v1379
        %v1426 = vadd.f32 %v1168, %v1384
        %v1427 = vadd.f32 %v1169, %v1387
        %v1428 = vadd.f32 %v1170, %v1392
        %v1429 = vadd.f32 %v1171, %v1395
        %s1430 = scalar_lea.vmem [#allocation4], 256
        %v1431 = vld [vmem:[%s1430] sm:$0xf]
        %v1432 = vld [vmem:[%s1430 + $0x4] sm:$0xf]
        %v1433 = vld [vmem:[%s1430 + $0x8] sm:$0xf]
        %v1434 = vld [vmem:[%s1430 + $0xc] sm:$0xf]
        %v1435 = vld [vmem:[%s1430 + $0x10] sm:$0xf]
        %v1436 = vld [vmem:[%s1430 + $0x14] sm:$0xf]
        %v1437 = vld [vmem:[%s1430 + $0x18] sm:$0xf]
        %v1438 = vld [vmem:[%s1430 + $0x1c] sm:$0xf]
        %v1439 = vld [vmem:[%s1430 + $0x20] sm:$0xf]
        %v1440 = vld [vmem:[%s1430 + $0x24] sm:$0xf]
        %v1441 = vld [vmem:[%s1430 + $0x28] sm:$0xf]
        %v1442 = vld [vmem:[%s1430 + $0x2c] sm:$0xf]
        %v1443 = vld [vmem:[%s1430 + $0x30] sm:$0xf]
        %v1444 = vld [vmem:[%s1430 + $0x34] sm:$0xf]
        %v1445 = vld [vmem:[%s1430 + $0x38] sm:$0xf]
        %v1446 = vld [vmem:[%s1430 + $0x3c] sm:$0xf]
        %v1447 = vshrl.u32 %v242, 16
        %v1449 = vor.u32 %v1447, %v411
        %v1451 = vshll.u32 %v243, 16
        %v1453 = vrot.slane %v1451, 1
        %v1454 = vsel %vm280, %v1449, %v1453
        %v1455 = vshrl.u32 %v243, 16
        %v1457 = vor.u32 %v1455, %v1453
        %v1459 = vshll.u32 %v244, 16
        %v1461 = vrot.slane %v1459, 1
        %v1462 = vsel %vm280, %v1457, %v1461
        %v1481 = vunpack.c.l.b16 %v1431
        %v1482 = vunpack.c.l.b16 %v1432
        %v1483 = vunpack.c.l.b16 %v1433
        %v1484 = vunpack.c.l.b16 %v1434
        %v1485 = vunpack.c.l.b16 %v1435
        %v1486 = vunpack.c.l.b16 %v1436
        %v1487 = vunpack.c.l.b16 %v1437
        %v1488 = vunpack.c.l.b16 %v1438
        %v1489 = vunpack.c.l.b16 %v1439
        %v1490 = vunpack.c.l.b16 %v1440
        %v1491 = vunpack.c.l.b16 %v1441
        %v1492 = vunpack.c.l.b16 %v1442
        %v1493 = vunpack.c.l.b16 %v1443
        %v1494 = vunpack.c.l.b16 %v1444
        %v1495 = vunpack.c.l.b16 %v1445
        %v1496 = vunpack.c.l.b16 %v1446
        %v1497 = vpack.c.b16 %v1482, %v1481
        %v1498 = vpack.c.b16 %v1484, %v1483
        %v1499 = vpack.c.b16 %v1486, %v1485
        %v1500 = vpack.c.b16 %v1488, %v1487
        %v1501 = vpack.c.b16 %v1490, %v1489
        %v1502 = vpack.c.b16 %v1492, %v1491
        %v1503 = vpack.c.b16 %v1494, %v1493
        %v1504 = vpack.c.b16 %v1496, %v1495
        %1513 = vmatprep.subr.bf16.mxu0 0
        %1514 = vmatpush1.bf16.msra.mxu0 %v1497
        %1515 = vmatprep.subr.bf16.mxu0 0
        %1516 = vmatpush1.bf16.msra.mxu0 %v1498
        %1517 = vmatprep.subr.bf16.mxu0 0
        %1518 = vmatpush1.bf16.msra.mxu0 %v1499
        %1519 = vmatprep.subr.bf16.mxu0 0
        %1520 = vmatpush1.bf16.msra.mxu0 %v1500
        %1521 = vmatprep.subr.bf16.mxu0 0
        %1522 = vmatpush1.bf16.msra.mxu0 %v1501
        %1523 = vmatprep.subr.bf16.mxu0 0
        %1524 = vmatpush1.bf16.msra.mxu0 %v1502
        %1525 = vmatprep.subr.bf16.mxu0 0
        %1526 = vmatpush1.bf16.msra.mxu0 %v1503
        %1527 = vmatprep.subr.bf16.mxu0 0
        %1528 = vmatpush1.bf16.msra.mxu0 %v1504
        %1529 = vmatprep.subr.bf16.mxu0 0
        %1530 = vmatpush1.bf16.msra.mxu0 0
        %1531 = vmatprep.subr.bf16.mxu0 0
        %1532 = vmatpush1.bf16.msra.mxu0 0
        %1533 = vmatprep.subr.bf16.mxu0 0
        %1534 = vmatpush1.bf16.msra.mxu0 0
        %1535 = vmatprep.subr.bf16.mxu0 0
        %1536 = vmatpush1.bf16.msra.mxu0 0
        %1537 = vmatprep.subr.bf16.mxu0 0
        %1538 = vmatpush1.bf16.msra.mxu0 0
        %1539 = vmatprep.subr.bf16.mxu0 0
        %1540 = vmatpush1.bf16.msra.mxu0 0
        %1541 = vmatprep.subr.bf16.mxu0 0
        %1542 = vmatpush1.bf16.msra.mxu0 0
        %1543 = vmatprep.subr.bf16.mxu0 0
        %1544 = vmatpush1.bf16.msra.mxu0 0
        %1545 = vmatprep.mubr.bf16.mxu0 0
        %1546 = vmatmul.mubr.bf16.gmra.mrb[0].mxu0 %v308
        %v1547 = vpop.f32.mrb[0].mxu0
        %v1548 = vadd.f32 0.0, %v1547
        %v1549 = vpop.f32.mrb[0].mxu0
        %v1550 = vpop.f32.mrb[0].mxu0
        %v1551 = vadd.f32 0.0, %v1550
        %v1552 = vpop.f32.mrb[0].mxu0
        %1553 = vmatprep.mubr.bf16.mxu0 0
        %1554 = vmatmul.mubr.bf16.gmra.mrb[0].mxu0 %v316
        %v1555 = vpop.f32.mrb[0].mxu0
        %v1556 = vadd.f32 0.0, %v1555
        %v1557 = vpop.f32.mrb[0].mxu0
        %v1558 = vpop.f32.mrb[0].mxu0
        %v1559 = vadd.f32 0.0, %v1558
        %v1560 = vpop.f32.mrb[0].mxu0
        %1561 = vmatprep.mubr.bf16.mxu0 0
        %1562 = vmatmul.mubr.bf16.gmra.mrb[0].mxu0 %v324
        %v1563 = vpop.f32.mrb[0].mxu0
        %v1564 = vadd.f32 0.0, %v1563
        %v1565 = vpop.f32.mrb[0].mxu0
        %v1566 = vpop.f32.mrb[0].mxu0
        %v1567 = vadd.f32 0.0, %v1566
        %v1568 = vpop.f32.mrb[0].mxu0
        %1569 = vmatprep.mubr.bf16.mxu0 0
        %1570 = vmatmul.mubr.bf16.gmra.mrb[0].mxu0 %v332
        %v1571 = vpop.f32.mrb[0].mxu0
        %v1572 = vadd.f32 0.0, %v1571
        %v1573 = vpop.f32.mrb[0].mxu0
        %v1574 = vpop.f32.mrb[0].mxu0
        %v1575 = vadd.f32 0.0, %v1574
        %v1576 = vpop.f32.mrb[0].mxu0
        %1577 = vmatprep.mubr.bf16.mxu0 0
        %1578 = vmatmul.mubr.bf16.gmra.mrb[0].mxu0 %v340
        %v1579 = vpop.f32.mrb[0].mxu0
        %v1580 = vadd.f32 0.0, %v1579
        %v1581 = vpop.f32.mrb[0].mxu0
        %v1582 = vpop.f32.mrb[0].mxu0
        %v1583 = vadd.f32 0.0, %v1582
        %v1584 = vpop.f32.mrb[0].mxu0
        %1585 = vmatprep.mubr.bf16.mxu0 0
        %1586 = vmatmul.mubr.bf16.gmra.mrb[0].mxu0 %v348
        %v1587 = vpop.f32.mrb[0].mxu0
        %v1588 = vadd.f32 0.0, %v1587
        %v1589 = vpop.f32.mrb[0].mxu0
        %v1590 = vpop.f32.mrb[0].mxu0
        %v1591 = vadd.f32 0.0, %v1590
        %v1592 = vpop.f32.mrb[0].mxu0
        %1593 = vmatprep.mubr.bf16.mxu0 0
        %1594 = vmatmul.mubr.bf16.gmra.mrb[0].mxu0 %v356
        %v1595 = vpop.f32.mrb[0].mxu0
        %v1596 = vadd.f32 0.0, %v1595
        %v1597 = vpop.f32.mrb[0].mxu0
        %v1598 = vpop.f32.mrb[0].mxu0
        %v1599 = vadd.f32 0.0, %v1598
        %v1600 = vpop.f32.mrb[0].mxu0
        %1601 = vmatprep.mubr.bf16.mxu0 0
        %1602 = vmatmul.mubr.bf16.gmra.mrb[0].mxu0 %v364
        %v1603 = vpop.f32.mrb[0].mxu0
        %v1604 = vadd.f32 0.0, %v1603
        %v1605 = vpop.f32.mrb[0].mxu0
        %v1606 = vpop.f32.mrb[0].mxu0
        %v1607 = vadd.f32 0.0, %v1606
        %v1608 = vpop.f32.mrb[0].mxu0
        %1609 = vmatprep.mubr.bf16.mxu0 0
        %1610 = vmatmul.mubr.bf16.gmra.mrb[0].mxu0 %v372
        %v1611 = vpop.f32.mrb[0].mxu0
        %v1612 = vadd.f32 0.0, %v1611
        %v1613 = vpop.f32.mrb[0].mxu0
        %v1614 = vpop.f32.mrb[0].mxu0
        %v1615 = vadd.f32 0.0, %v1614
        %v1616 = vpop.f32.mrb[0].mxu0
        %1617 = vmatprep.mubr.bf16.mxu0 0
        %1618 = vmatmul.mubr.bf16.gmra.mrb[0].mxu0 %v380
        %v1619 = vpop.f32.mrb[0].mxu0
        %v1620 = vadd.f32 0.0, %v1619
        %v1621 = vpop.f32.mrb[0].mxu0
        %v1622 = vpop.f32.mrb[0].mxu0
        %v1623 = vadd.f32 0.0, %v1622
        %v1624 = vpop.f32.mrb[0].mxu0
        %1625 = vmatprep.mubr.bf16.mxu0 0
        %1626 = vmatmul.mubr.bf16.gmra.mrb[0].mxu0 %v388
        %v1627 = vpop.f32.mrb[0].mxu0
        %v1628 = vadd.f32 0.0, %v1627
        %v1629 = vpop.f32.mrb[0].mxu0
        %v1630 = vpop.f32.mrb[0].mxu0
        %v1631 = vadd.f32 0.0, %v1630
        %v1632 = vpop.f32.mrb[0].mxu0
        %1633 = vmatprep.mubr.bf16.mxu0 0
        %1634 = vmatmul.mubr.bf16.gmra.mrb[0].mxu0 %v396
        %v1635 = vpop.f32.mrb[0].mxu0
        %v1636 = vadd.f32 0.0, %v1635
        %v1637 = vpop.f32.mrb[0].mxu0
        %v1638 = vpop.f32.mrb[0].mxu0
        %v1639 = vadd.f32 0.0, %v1638
        %v1640 = vpop.f32.mrb[0].mxu0
        %1641 = vmatprep.mubr.bf16.mxu0 0
        %1642 = vmatmul.mubr.bf16.gmra.mrb[0].mxu0 %v404
        %v1643 = vpop.f32.mrb[0].mxu0
        %v1644 = vadd.f32 0.0, %v1643
        %v1645 = vpop.f32.mrb[0].mxu0
        %v1646 = vpop.f32.mrb[0].mxu0
        %v1647 = vadd.f32 0.0, %v1646
        %v1648 = vpop.f32.mrb[0].mxu0
        %1649 = vmatprep.mubr.bf16.mxu0 0
        %1650 = vmatmul.mubr.bf16.gmra.mrb[0].mxu0 %v412
        %v1651 = vpop.f32.mrb[0].mxu0
        %v1652 = vadd.f32 0.0, %v1651
        %v1653 = vpop.f32.mrb[0].mxu0
        %v1654 = vpop.f32.mrb[0].mxu0
        %v1655 = vadd.f32 0.0, %v1654
        %v1656 = vpop.f32.mrb[0].mxu0
        %1657 = vmatprep.mubr.bf16.mxu0 0
        %1658 = vmatmul.mubr.bf16.gmra.mrb[0].mxu0 %v1454
        %v1659 = vpop.f32.mrb[0].mxu0
        %v1660 = vadd.f32 0.0, %v1659
        %v1661 = vpop.f32.mrb[0].mxu0
        %v1662 = vpop.f32.mrb[0].mxu0
        %v1663 = vadd.f32 0.0, %v1662
        %v1664 = vpop.f32.mrb[0].mxu0
        %1665 = vmatprep.mubr.bf16.mxu0 0
        %1666 = vmatmul.mubr.bf16.gmra.mrb[0].mxu0 %v1462
        %v1667 = vpop.f32.mrb[0].mxu0
        %v1668 = vadd.f32 0.0, %v1667
        %v1669 = vpop.f32.mrb[0].mxu0
        %v1670 = vpop.f32.mrb[0].mxu0
        %v1671 = vadd.f32 0.0, %v1670
        %v1672 = vpop.f32.mrb[0].mxu0
        %1673 = vdwg.mxu0
        %v1674 = vadd.f32 %v1398, %v1548
        %v1675 = vadd.f32 %v1399, %v1551
        %v1676 = vadd.f32 %v1400, %v1556
        %v1677 = vadd.f32 %v1401, %v1559
        %v1678 = vadd.f32 %v1402, %v1564
        %v1679 = vadd.f32 %v1403, %v1567
        %v1680 = vadd.f32 %v1404, %v1572
        %v1681 = vadd.f32 %v1405, %v1575
        %v1682 = vadd.f32 %v1406, %v1580
        %v1683 = vadd.f32 %v1407, %v1583
        %v1684 = vadd.f32 %v1408, %v1588
        %v1685 = vadd.f32 %v1409, %v1591
        %v1686 = vadd.f32 %v1410, %v1596
        %v1687 = vadd.f32 %v1411, %v1599
        %v1688 = vadd.f32 %v1412, %v1604
        %v1689 = vadd.f32 %v1413, %v1607
        %v1690 = vadd.f32 %v1414, %v1612
        %v1691 = vadd.f32 %v1415, %v1615
        %v1692 = vadd.f32 %v1416, %v1620
        %v1693 = vadd.f32 %v1417, %v1623
        %v1694 = vadd.f32 %v1418, %v1628
        %v1695 = vadd.f32 %v1419, %v1631
        %v1696 = vadd.f32 %v1420, %v1636
        %v1697 = vadd.f32 %v1421, %v1639
        %v1698 = vadd.f32 %v1422, %v1644
        %v1699 = vadd.f32 %v1423, %v1647
        %v1700 = vadd.f32 %v1424, %v1652
        %v1701 = vadd.f32 %v1425, %v1655
        %v1702 = vadd.f32 %v1426, %v1660
        %v1703 = vadd.f32 %v1427, %v1663
        %v1704 = vadd.f32 %v1428, %v1668
        %v1705 = vadd.f32 %v1429, %v1671
        %s1706 = scalar_lea.vmem [#allocation4], 320
        %v1707 = vld [vmem:[%s1706] sm:$0xf]
        %v1708 = vld [vmem:[%s1706 + $0x4] sm:$0xf]
        %v1709 = vld [vmem:[%s1706 + $0x8] sm:$0xf]
        %v1710 = vld [vmem:[%s1706 + $0xc] sm:$0xf]
        %v1711 = vld [vmem:[%s1706 + $0x10] sm:$0xf]
        %v1712 = vld [vmem:[%s1706 + $0x14] sm:$0xf]
        %v1713 = vld [vmem:[%s1706 + $0x18] sm:$0xf]
        %v1714 = vld [vmem:[%s1706 + $0x1c] sm:$0xf]
        %v1715 = vld [vmem:[%s1706 + $0x20] sm:$0xf]
        %v1716 = vld [vmem:[%s1706 + $0x24] sm:$0xf]
        %v1717 = vld [vmem:[%s1706 + $0x28] sm:$0xf]
        %v1718 = vld [vmem:[%s1706 + $0x2c] sm:$0xf]
        %v1719 = vld [vmem:[%s1706 + $0x30] sm:$0xf]
        %v1720 = vld [vmem:[%s1706 + $0x34] sm:$0xf]
        %v1721 = vld [vmem:[%s1706 + $0x38] sm:$0xf]
        %v1722 = vld [vmem:[%s1706 + $0x3c] sm:$0xf]
        %v1725 = vrot.slane %v243, 1
        %v1726 = vsel %vm881, %v913, %v1725
        %v1727 = vrot.slane %v244, 1
        %v1728 = vsel %vm881, %v1725, %v1727
        %v1747 = vunpack.c.l.b16 %v1707
        %v1748 = vunpack.c.l.b16 %v1708
        %v1749 = vunpack.c.l.b16 %v1709
        %v1750 = vunpack.c.l.b16 %v1710
        %v1751 = vunpack.c.l.b16 %v1711
        %v1752 = vunpack.c.l.b16 %v1712
        %v1753 = vunpack.c.l.b16 %v1713
        %v1754 = vunpack.c.l.b16 %v1714
        %v1755 = vunpack.c.l.b16 %v1715
        %v1756 = vunpack.c.l.b16 %v1716
        %v1757 = vunpack.c.l.b16 %v1717
        %v1758 = vunpack.c.l.b16 %v1718
        %v1759 = vunpack.c.l.b16 %v1719
        %v1760 = vunpack.c.l.b16 %v1720
        %v1761 = vunpack.c.l.b16 %v1721
        %v1762 = vunpack.c.l.b16 %v1722
        %v1763 = vpack.c.b16 %v1748, %v1747
        %v1764 = vpack.c.b16 %v1750, %v1749
        %v1765 = vpack.c.b16 %v1752, %v1751
        %v1766 = vpack.c.b16 %v1754, %v1753
        %v1767 = vpack.c.b16 %v1756, %v1755
        %v1768 = vpack.c.b16 %v1758, %v1757
        %v1769 = vpack.c.b16 %v1760, %v1759
        %v1770 = vpack.c.b16 %v1762, %v1761
        %1779 = vmatprep.subr.bf16.mxu0 0
        %1780 = vmatpush1.bf16.msra.mxu0 %v1763
        %1781 = vmatprep.subr.bf16.mxu0 0
        %1782 = vmatpush1.bf16.msra.mxu0 %v1764
        %1783 = vmatprep.subr.bf16.mxu0 0
        %1784 = vmatpush1.bf16.msra.mxu0 %v1765
        %1785 = vmatprep.subr.bf16.mxu0 0
        %1786 = vmatpush1.bf16.msra.mxu0 %v1766
        %1787 = vmatprep.subr.bf16.mxu0 0
        %1788 = vmatpush1.bf16.msra.mxu0 %v1767
        %1789 = vmatprep.subr.bf16.mxu0 0
        %1790 = vmatpush1.bf16.msra.mxu0 %v1768
        %1791 = vmatprep.subr.bf16.mxu0 0
        %1792 = vmatpush1.bf16.msra.mxu0 %v1769
        %1793 = vmatprep.subr.bf16.mxu0 0
        %1794 = vmatpush1.bf16.msra.mxu0 %v1770
        %1795 = vmatprep.subr.bf16.mxu0 0
        %1796 = vmatpush1.bf16.msra.mxu0 0
        %1797 = vmatprep.subr.bf16.mxu0 0
        %1798 = vmatpush1.bf16.msra.mxu0 0
        %1799 = vmatprep.subr.bf16.mxu0 0
        %1800 = vmatpush1.bf16.msra.mxu0 0
        %1801 = vmatprep.subr.bf16.mxu0 0
        %1802 = vmatpush1.bf16.msra.mxu0 0
        %1803 = vmatprep.subr.bf16.mxu0 0
        %1804 = vmatpush1.bf16.msra.mxu0 0
        %1805 = vmatprep.subr.bf16.mxu0 0
        %1806 = vmatpush1.bf16.msra.mxu0 0
        %1807 = vmatprep.subr.bf16.mxu0 0
        %1808 = vmatpush1.bf16.msra.mxu0 0
        %1809 = vmatprep.subr.bf16.mxu0 0
        %1810 = vmatpush1.bf16.msra.mxu0 0
        %1811 = vmatprep.mubr.bf16.mxu0 0
        %1812 = vmatmul.mubr.bf16.gmra.mrb[0].mxu0 %v888
        %v1813 = vpop.f32.mrb[0].mxu0
        %v1814 = vadd.f32 0.0, %v1813
        %v1815 = vpop.f32.mrb[0].mxu0
        %v1816 = vpop.f32.mrb[0].mxu0
        %v1817 = vadd.f32 0.0, %v1816
        %v1818 = vpop.f32.mrb[0].mxu0
        %1819 = vmatprep.mubr.bf16.mxu0 0
        %1820 = vmatmul.mubr.bf16.gmra.mrb[0].mxu0 %v890
        %v1821 = vpop.f32.mrb[0].mxu0
        %v1822 = vadd.f32 0.0, %v1821
        %v1823 = vpop.f32.mrb[0].mxu0
        %v1824 = vpop.f32.mrb[0].mxu0
        %v1825 = vadd.f32 0.0, %v1824
        %v1826 = vpop.f32.mrb[0].mxu0
        %1827 = vmatprep.mubr.bf16.mxu0 0
        %1828 = vmatmul.mubr.bf16.gmra.mrb[0].mxu0 %v892
        %v1829 = vpop.f32.mrb[0].mxu0
        %v1830 = vadd.f32 0.0, %v1829
        %v1831 = vpop.f32.mrb[0].mxu0
        %v1832 = vpop.f32.mrb[0].mxu0
        %v1833 = vadd.f32 0.0, %v1832
        %v1834 = vpop.f32.mrb[0].mxu0
        %1835 = vmatprep.mubr.bf16.mxu0 0
        %1836 = vmatmul.mubr.bf16.gmra.mrb[0].mxu0 %v894
        %v1837 = vpop.f32.mrb[0].mxu0
        %v1838 = vadd.f32 0.0, %v1837
        %v1839 = vpop.f32.mrb[0].mxu0
        %v1840 = vpop.f32.mrb[0].mxu0
        %v1841 = vadd.f32 0.0, %v1840
        %v1842 = vpop.f32.mrb[0].mxu0
        %1843 = vmatprep.mubr.bf16.mxu0 0
        %1844 = vmatmul.mubr.bf16.gmra.mrb[0].mxu0 %v896
        %v1845 = vpop.f32.mrb[0].mxu0
        %v1846 = vadd.f32 0.0, %v1845
        %v1847 = vpop.f32.mrb[0].mxu0
        %v1848 = vpop.f32.mrb[0].mxu0
        %v1849 = vadd.f32 0.0, %v1848
        %v1850 = vpop.f32.mrb[0].mxu0
        %1851 = vmatprep.mubr.bf16.mxu0 0
        %1852 = vmatmul.mubr.bf16.gmra.mrb[0].mxu0 %v898
        %v1853 = vpop.f32.mrb[0].mxu0
        %v1854 = vadd.f32 0.0, %v1853
        %v1855 = vpop.f32.mrb[0].mxu0
        %v1856 = vpop.f32.mrb[0].mxu0
        %v1857 = vadd.f32 0.0, %v1856
        %v1858 = vpop.f32.mrb[0].mxu0
        %1859 = vmatprep.mubr.bf16.mxu0 0
        %1860 = vmatmul.mubr.bf16.gmra.mrb[0].mxu0 %v900
        %v1861 = vpop.f32.mrb[0].mxu0
        %v1862 = vadd.f32 0.0, %v1861
        %v1863 = vpop.f32.mrb[0].mxu0
        %v1864 = vpop.f32.mrb[0].mxu0
        %v1865 = vadd.f32 0.0, %v1864
        %v1866 = vpop.f32.mrb[0].mxu0
        %1867 = vmatprep.mubr.bf16.mxu0 0
        %1868 = vmatmul.mubr.bf16.gmra.mrb[0].mxu0 %v902
        %v1869 = vpop.f32.mrb[0].mxu0
        %v1870 = vadd.f32 0.0, %v1869
        %v1871 = vpop.f32.mrb[0].mxu0
        %v1872 = vpop.f32.mrb[0].mxu0
        %v1873 = vadd.f32 0.0, %v1872
        %v1874 = vpop.f32.mrb[0].mxu0
        %1875 = vmatprep.mubr.bf16.mxu0 0
        %1876 = vmatmul.mubr.bf16.gmra.mrb[0].mxu0 %v904
        %v1877 = vpop.f32.mrb[0].mxu0
        %v1878 = vadd.f32 0.0, %v1877
        %v1879 = vpop.f32.mrb[0].mxu0
        %v1880 = vpop.f32.mrb[0].mxu0
        %v1881 = vadd.f32 0.0, %v1880
        %v1882 = vpop.f32.mrb[0].mxu0
        %1883 = vmatprep.mubr.bf16.mxu0 0
        %1884 = vmatmul.mubr.bf16.gmra.mrb[0].mxu0 %v906
        %v1885 = vpop.f32.mrb[0].mxu0
        %v1886 = vadd.f32 0.0, %v1885
        %v1887 = vpop.f32.mrb[0].mxu0
        %v1888 = vpop.f32.mrb[0].mxu0
        %v1889 = vadd.f32 0.0, %v1888
        %v1890 = vpop.f32.mrb[0].mxu0
        %1891 = vmatprep.mubr.bf16.mxu0 0
        %1892 = vmatmul.mubr.bf16.gmra.mrb[0].mxu0 %v908
        %v1893 = vpop.f32.mrb[0].mxu0
        %v1894 = vadd.f32 0.0, %v1893
        %v1895 = vpop.f32.mrb[0].mxu0
        %v1896 = vpop.f32.mrb[0].mxu0
        %v1897 = vadd.f32 0.0, %v1896
        %v1898 = vpop.f32.mrb[0].mxu0
        %1899 = vmatprep.mubr.bf16.mxu0 0
        %1900 = vmatmul.mubr.bf16.gmra.mrb[0].mxu0 %v910
        %v1901 = vpop.f32.mrb[0].mxu0
        %v1902 = vadd.f32 0.0, %v1901
        %v1903 = vpop.f32.mrb[0].mxu0
        %v1904 = vpop.f32.mrb[0].mxu0
        %v1905 = vadd.f32 0.0, %v1904
        %v1906 = vpop.f32.mrb[0].mxu0
        %1907 = vmatprep.mubr.bf16.mxu0 0
        %1908 = vmatmul.mubr.bf16.gmra.mrb[0].mxu0 %v912
        %v1909 = vpop.f32.mrb[0].mxu0
        %v1910 = vadd.f32 0.0, %v1909
        %v1911 = vpop.f32.mrb[0].mxu0
        %v1912 = vpop.f32.mrb[0].mxu0
        %v1913 = vadd.f32 0.0, %v1912
        %v1914 = vpop.f32.mrb[0].mxu0
        %1915 = vmatprep.mubr.bf16.mxu0 0
        %1916 = vmatmul.mubr.bf16.gmra.mrb[0].mxu0 %v914
        %v1917 = vpop.f32.mrb[0].mxu0
        %v1918 = vadd.f32 0.0, %v1917
        %v1919 = vpop.f32.mrb[0].mxu0
        %v1920 = vpop.f32.mrb[0].mxu0
        %v1921 = vadd.f32 0.0, %v1920
        %v1922 = vpop.f32.mrb[0].mxu0
        %1923 = vmatprep.mubr.bf16.mxu0 0
        %1924 = vmatmul.mubr.bf16.gmra.mrb[0].mxu0 %v1726
        %v1925 = vpop.f32.mrb[0].mxu0
        %v1926 = vadd.f32 0.0, %v1925
        %v1927 = vpop.f32.mrb[0].mxu0
        %v1928 = vpop.f32.mrb[0].mxu0
        %v1929 = vadd.f32 0.0, %v1928
        %v1930 = vpop.f32.mrb[0].mxu0
        %1931 = vmatprep.mubr.bf16.mxu0 0
        %1932 = vmatmul.mubr.bf16.gmra.mrb[0].mxu0 %v1728
        %v1933 = vpop.f32.mrb[0].mxu0
        %v1934 = vadd.f32 0.0, %v1933
        %v1935 = vpop.f32.mrb[0].mxu0
        %v1936 = vpop.f32.mrb[0].mxu0
        %v1937 = vadd.f32 0.0, %v1936
        %v1938 = vpop.f32.mrb[0].mxu0
        %1939 = vdwg.mxu0
        %v1940 = vadd.f32 %v1674, %v1814
        %v1941 = vadd.f32 %v1675, %v1817
        %v1942 = vadd.f32 %v1676, %v1822
        %v1943 = vadd.f32 %v1677, %v1825
        %v1944 = vadd.f32 %v1678, %v1830
        %v1945 = vadd.f32 %v1679, %v1833
        %v1946 = vadd.f32 %v1680, %v1838
        %v1947 = vadd.f32 %v1681, %v1841
        %v1948 = vadd.f32 %v1682, %v1846
        %v1949 = vadd.f32 %v1683, %v1849
        %v1950 = vadd.f32 %v1684, %v1854
        %v1951 = vadd.f32 %v1685, %v1857
        %v1952 = vadd.f32 %v1686, %v1862
        %v1953 = vadd.f32 %v1687, %v1865
        %v1954 = vadd.f32 %v1688, %v1870
        %v1955 = vadd.f32 %v1689, %v1873
        %v1956 = vadd.f32 %v1690, %v1878
        %v1957 = vadd.f32 %v1691, %v1881
        %v1958 = vadd.f32 %v1692, %v1886
        %v1959 = vadd.f32 %v1693, %v1889
        %v1960 = vadd.f32 %v1694, %v1894
        %v1961 = vadd.f32 %v1695, %v1897
        %v1962 = vadd.f32 %v1696, %v1902
        %v1963 = vadd.f32 %v1697, %v1905
        %v1964 = vadd.f32 %v1698, %v1910
        %v1965 = vadd.f32 %v1699, %v1913
        %v1966 = vadd.f32 %v1700, %v1918
        %v1967 = vadd.f32 %v1701, %v1921
        %v1968 = vadd.f32 %v1702, %v1926
        %v1969 = vadd.f32 %v1703, %v1929
        %v1970 = vadd.f32 %v1704, %v1934
        %v1971 = vadd.f32 %v1705, %v1937
        %s1972 = scalar_lea.vmem [#allocation4], 384
        %v1973 = vld [vmem:[%s1972] sm:$0xf]
        %v1974 = vld [vmem:[%s1972 + $0x4] sm:$0xf]
        %v1975 = vld [vmem:[%s1972 + $0x8] sm:$0xf]
        %v1976 = vld [vmem:[%s1972 + $0xc] sm:$0xf]
        %v1977 = vld [vmem:[%s1972 + $0x10] sm:$0xf]
        %v1978 = vld [vmem:[%s1972 + $0x14] sm:$0xf]
        %v1979 = vld [vmem:[%s1972 + $0x18] sm:$0xf]
        %v1980 = vld [vmem:[%s1972 + $0x1c] sm:$0xf]
        %v1981 = vld [vmem:[%s1972 + $0x20] sm:$0xf]
        %v1982 = vld [vmem:[%s1972 + $0x24] sm:$0xf]
        %v1983 = vld [vmem:[%s1972 + $0x28] sm:$0xf]
        %v1984 = vld [vmem:[%s1972 + $0x2c] sm:$0xf]
        %v1985 = vld [vmem:[%s1972 + $0x30] sm:$0xf]
        %v1986 = vld [vmem:[%s1972 + $0x34] sm:$0xf]
        %v1987 = vld [vmem:[%s1972 + $0x38] sm:$0xf]
        %v1988 = vld [vmem:[%s1972 + $0x3c] sm:$0xf]
        %v2005 = vunpack.c.l.b16 %v1973
        %v2006 = vunpack.c.l.b16 %v1974
        %v2007 = vunpack.c.l.b16 %v1975
        %v2008 = vunpack.c.l.b16 %v1976
        %v2009 = vunpack.c.l.b16 %v1977
        %v2010 = vunpack.c.l.b16 %v1978
        %v2011 = vunpack.c.l.b16 %v1979
        %v2012 = vunpack.c.l.b16 %v1980
        %v2013 = vunpack.c.l.b16 %v1981
        %v2014 = vunpack.c.l.b16 %v1982
        %v2015 = vunpack.c.l.b16 %v1983
        %v2016 = vunpack.c.l.b16 %v1984
        %v2017 = vunpack.c.l.b16 %v1985
        %v2018 = vunpack.c.l.b16 %v1986
        %v2019 = vunpack.c.l.b16 %v1987
        %v2020 = vunpack.c.l.b16 %v1988
        %v2021 = vpack.c.b16 %v2006, %v2005
        %v2022 = vpack.c.b16 %v2008, %v2007
        %v2023 = vpack.c.b16 %v2010, %v2009
        %v2024 = vpack.c.b16 %v2012, %v2011
        %v2025 = vpack.c.b16 %v2014, %v2013
        %v2026 = vpack.c.b16 %v2016, %v2015
        %v2027 = vpack.c.b16 %v2018, %v2017
        %v2028 = vpack.c.b16 %v2020, %v2019
        %2037 = vmatprep.subr.bf16.mxu0 0
        %2038 = vmatpush1.bf16.msra.mxu0 %v2021
        %2039 = vmatprep.subr.bf16.mxu0 0
        %2040 = vmatpush1.bf16.msra.mxu0 %v2022
        %2041 = vmatprep.subr.bf16.mxu0 0
        %2042 = vmatpush1.bf16.msra.mxu0 %v2023
        %2043 = vmatprep.subr.bf16.mxu0 0
        %2044 = vmatpush1.bf16.msra.mxu0 %v2024
        %2045 = vmatprep.subr.bf16.mxu0 0
        %2046 = vmatpush1.bf16.msra.mxu0 %v2025
        %2047 = vmatprep.subr.bf16.mxu0 0
        %2048 = vmatpush1.bf16.msra.mxu0 %v2026
        %2049 = vmatprep.subr.bf16.mxu0 0
        %2050 = vmatpush1.bf16.msra.mxu0 %v2027
        %2051 = vmatprep.subr.bf16.mxu0 0
        %2052 = vmatpush1.bf16.msra.mxu0 %v2028
        %2053 = vmatprep.subr.bf16.mxu0 0
        %2054 = vmatpush1.bf16.msra.mxu0 0
        %2055 = vmatprep.subr.bf16.mxu0 0
        %2056 = vmatpush1.bf16.msra.mxu0 0
        %2057 = vmatprep.subr.bf16.mxu0 0
        %2058 = vmatpush1.bf16.msra.mxu0 0
        %2059 = vmatprep.subr.bf16.mxu0 0
        %2060 = vmatpush1.bf16.msra.mxu0 0
        %2061 = vmatprep.subr.bf16.mxu0 0
        %2062 = vmatpush1.bf16.msra.mxu0 0
        %2063 = vmatprep.subr.bf16.mxu0 0
        %2064 = vmatpush1.bf16.msra.mxu0 0
        %2065 = vmatprep.subr.bf16.mxu0 0
        %2066 = vmatpush1.bf16.msra.mxu0 0
        %2067 = vmatprep.subr.bf16.mxu0 0
        %2068 = vmatpush1.bf16.msra.mxu0 0
        %2069 = vmatprep.mubr.bf16.mxu0 0
        %2070 = vmatmul.mubr.bf16.gmra.mrb[0].mxu0 %v230
        %v2071 = vpop.f32.mrb[0].mxu0
        %v2072 = vadd.f32 0.0, %v2071
        %v2073 = vpop.f32.mrb[0].mxu0
        %v2074 = vpop.f32.mrb[0].mxu0
        %v2075 = vadd.f32 0.0, %v2074
        %v2076 = vpop.f32.mrb[0].mxu0
        %2077 = vmatprep.mubr.bf16.mxu0 0
        %2078 = vmatmul.mubr.bf16.gmra.mrb[0].mxu0 %v231
        %v2079 = vpop.f32.mrb[0].mxu0
        %v2080 = vadd.f32 0.0, %v2079
        %v2081 = vpop.f32.mrb[0].mxu0
        %v2082 = vpop.f32.mrb[0].mxu0
        %v2083 = vadd.f32 0.0, %v2082
        %v2084 = vpop.f32.mrb[0].mxu0
        %2085 = vmatprep.mubr.bf16.mxu0 0
        %2086 = vmatmul.mubr.bf16.gmra.mrb[0].mxu0 %v232
        %v2087 = vpop.f32.mrb[0].mxu0
        %v2088 = vadd.f32 0.0, %v2087
        %v2089 = vpop.f32.mrb[0].mxu0
        %v2090 = vpop.f32.mrb[0].mxu0
        %v2091 = vadd.f32 0.0, %v2090
        %v2092 = vpop.f32.mrb[0].mxu0
        %2093 = vmatprep.mubr.bf16.mxu0 0
        %2094 = vmatmul.mubr.bf16.gmra.mrb[0].mxu0 %v233
        %v2095 = vpop.f32.mrb[0].mxu0
        %v2096 = vadd.f32 0.0, %v2095
        %v2097 = vpop.f32.mrb[0].mxu0
        %v2098 = vpop.f32.mrb[0].mxu0
        %v2099 = vadd.f32 0.0, %v2098
        %v2100 = vpop.f32.mrb[0].mxu0
        %2101 = vmatprep.mubr.bf16.mxu0 0
        %2102 = vmatmul.mubr.bf16.gmra.mrb[0].mxu0 %v234
        %v2103 = vpop.f32.mrb[0].mxu0
        %v2104 = vadd.f32 0.0, %v2103
        %v2105 = vpop.f32.mrb[0].mxu0
        %v2106 = vpop.f32.mrb[0].mxu0
        %v2107 = vadd.f32 0.0, %v2106
        %v2108 = vpop.f32.mrb[0].mxu0
        %2109 = vmatprep.mubr.bf16.mxu0 0
        %2110 = vmatmul.mubr.bf16.gmra.mrb[0].mxu0 %v235
        %v2111 = vpop.f32.mrb[0].mxu0
        %v2112 = vadd.f32 0.0, %v2111
        %v2113 = vpop.f32.mrb[0].mxu0
        %v2114 = vpop.f32.mrb[0].mxu0
        %v2115 = vadd.f32 0.0, %v2114
        %v2116 = vpop.f32.mrb[0].mxu0
        %2117 = vmatprep.mubr.bf16.mxu0 0
        %2118 = vmatmul.mubr.bf16.gmra.mrb[0].mxu0 %v236
        %v2119 = vpop.f32.mrb[0].mxu0
        %v2120 = vadd.f32 0.0, %v2119
        %v2121 = vpop.f32.mrb[0].mxu0
        %v2122 = vpop.f32.mrb[0].mxu0
        %v2123 = vadd.f32 0.0, %v2122
        %v2124 = vpop.f32.mrb[0].mxu0
        %2125 = vmatprep.mubr.bf16.mxu0 0
        %2126 = vmatmul.mubr.bf16.gmra.mrb[0].mxu0 %v237
        %v2127 = vpop.f32.mrb[0].mxu0
        %v2128 = vadd.f32 0.0, %v2127
        %v2129 = vpop.f32.mrb[0].mxu0
        %v2130 = vpop.f32.mrb[0].mxu0
        %v2131 = vadd.f32 0.0, %v2130
        %v2132 = vpop.f32.mrb[0].mxu0
        %2133 = vmatprep.mubr.bf16.mxu0 0
        %2134 = vmatmul.mubr.bf16.gmra.mrb[0].mxu0 %v238
        %v2135 = vpop.f32.mrb[0].mxu0
        %v2136 = vadd.f32 0.0, %v2135
        %v2137 = vpop.f32.mrb[0].mxu0
        %v2138 = vpop.f32.mrb[0].mxu0
        %v2139 = vadd.f32 0.0, %v2138
        %v2140 = vpop.f32.mrb[0].mxu0
        %2141 = vmatprep.mubr.bf16.mxu0 0
        %2142 = vmatmul.mubr.bf16.gmra.mrb[0].mxu0 %v239
        %v2143 = vpop.f32.mrb[0].mxu0
        %v2144 = vadd.f32 0.0, %v2143
        %v2145 = vpop.f32.mrb[0].mxu0
        %v2146 = vpop.f32.mrb[0].mxu0
        %v2147 = vadd.f32 0.0, %v2146
        %v2148 = vpop.f32.mrb[0].mxu0
        %2149 = vmatprep.mubr.bf16.mxu0 0
        %2150 = vmatmul.mubr.bf16.gmra.mrb[0].mxu0 %v240
        %v2151 = vpop.f32.mrb[0].mxu0
        %v2152 = vadd.f32 0.0, %v2151
        %v2153 = vpop.f32.mrb[0].mxu0
        %v2154 = vpop.f32.mrb[0].mxu0
        %v2155 = vadd.f32 0.0, %v2154
        %v2156 = vpop.f32.mrb[0].mxu0
        %2157 = vmatprep.mubr.bf16.mxu0 0
        %2158 = vmatmul.mubr.bf16.gmra.mrb[0].mxu0 %v241
        %v2159 = vpop.f32.mrb[0].mxu0
        %v2160 = vadd.f32 0.0, %v2159
        %v2161 = vpop.f32.mrb[0].mxu0
        %v2162 = vpop.f32.mrb[0].mxu0
        %v2163 = vadd.f32 0.0, %v2162
        %v2164 = vpop.f32.mrb[0].mxu0
        %2165 = vmatprep.mubr.bf16.mxu0 0
        %2166 = vmatmul.mubr.bf16.gmra.mrb[0].mxu0 %v242
        %v2167 = vpop.f32.mrb[0].mxu0
        %v2168 = vadd.f32 0.0, %v2167
        %v2169 = vpop.f32.mrb[0].mxu0
        %v2170 = vpop.f32.mrb[0].mxu0
        %v2171 = vadd.f32 0.0, %v2170
        %v2172 = vpop.f32.mrb[0].mxu0
        %2173 = vmatprep.mubr.bf16.mxu0 0
        %2174 = vmatmul.mubr.bf16.gmra.mrb[0].mxu0 %v243
        %v2175 = vpop.f32.mrb[0].mxu0
        %v2176 = vadd.f32 0.0, %v2175
        %v2177 = vpop.f32.mrb[0].mxu0
        %v2178 = vpop.f32.mrb[0].mxu0
        %v2179 = vadd.f32 0.0, %v2178
        %v2180 = vpop.f32.mrb[0].mxu0
        %2181 = vmatprep.mubr.bf16.mxu0 0
        %2182 = vmatmul.mubr.bf16.gmra.mrb[0].mxu0 %v244
        %v2183 = vpop.f32.mrb[0].mxu0
        %v2184 = vadd.f32 0.0, %v2183
        %v2185 = vpop.f32.mrb[0].mxu0
        %v2186 = vpop.f32.mrb[0].mxu0
        %v2187 = vadd.f32 0.0, %v2186
        %v2188 = vpop.f32.mrb[0].mxu0
        %2189 = vmatprep.mubr.bf16.mxu0 0
        %2190 = vmatmul.mubr.bf16.gmra.mrb[0].mxu0 %v245
        %v2191 = vpop.f32.mrb[0].mxu0
        %v2192 = vadd.f32 0.0, %v2191
        %v2193 = vpop.f32.mrb[0].mxu0
        %v2194 = vpop.f32.mrb[0].mxu0
        %v2195 = vadd.f32 0.0, %v2194
        %v2196 = vpop.f32.mrb[0].mxu0
        %2197 = vdwg.mxu0
        %v2198 = vadd.f32 %v1940, %v2072
        %v2199 = vadd.f32 %v1941, %v2075
        %v2200 = vadd.f32 %v1942, %v2080
        %v2201 = vadd.f32 %v1943, %v2083
        %v2202 = vadd.f32 %v1944, %v2088
        %v2203 = vadd.f32 %v1945, %v2091
        %v2204 = vadd.f32 %v1946, %v2096
        %v2205 = vadd.f32 %v1947, %v2099
        %v2206 = vadd.f32 %v1948, %v2104
        %v2207 = vadd.f32 %v1949, %v2107
        %v2208 = vadd.f32 %v1950, %v2112
        %v2209 = vadd.f32 %v1951, %v2115
        %v2210 = vadd.f32 %v1952, %v2120
        %v2211 = vadd.f32 %v1953, %v2123
        %v2212 = vadd.f32 %v1954, %v2128
        %v2213 = vadd.f32 %v1955, %v2131
        %v2214 = vadd.f32 %v1956, %v2136
        %v2215 = vadd.f32 %v1957, %v2139
        %v2216 = vadd.f32 %v1958, %v2144
        %v2217 = vadd.f32 %v1959, %v2147
        %v2218 = vadd.f32 %v1960, %v2152
        %v2219 = vadd.f32 %v1961, %v2155
        %v2220 = vadd.f32 %v1962, %v2160
        %v2221 = vadd.f32 %v1963, %v2163
        %v2222 = vadd.f32 %v1964, %v2168
        %v2223 = vadd.f32 %v1965, %v2171
        %v2224 = vadd.f32 %v1966, %v2176
        %v2225 = vadd.f32 %v1967, %v2179
        %v2226 = vadd.f32 %v1968, %v2184
        %v2227 = vadd.f32 %v1969, %v2187
        %v2228 = vadd.f32 %v1970, %v2192
        %v2229 = vadd.f32 %v1971, %v2195
        %s2230 = scalar_lea.vmem [#allocation4], 448
        %v2231 = vld [vmem:[%s2230] sm:$0xf]
        %v2232 = vld [vmem:[%s2230 + $0x4] sm:$0xf]
        %v2233 = vld [vmem:[%s2230 + $0x8] sm:$0xf]
        %v2234 = vld [vmem:[%s2230 + $0xc] sm:$0xf]
        %v2235 = vld [vmem:[%s2230 + $0x10] sm:$0xf]
        %v2236 = vld [vmem:[%s2230 + $0x14] sm:$0xf]
        %v2237 = vld [vmem:[%s2230 + $0x18] sm:$0xf]
        %v2238 = vld [vmem:[%s2230 + $0x1c] sm:$0xf]
        %v2239 = vld [vmem:[%s2230 + $0x20] sm:$0xf]
        %v2240 = vld [vmem:[%s2230 + $0x24] sm:$0xf]
        %v2241 = vld [vmem:[%s2230 + $0x28] sm:$0xf]
        %v2242 = vld [vmem:[%s2230 + $0x2c] sm:$0xf]
        %v2243 = vld [vmem:[%s2230 + $0x30] sm:$0xf]
        %v2244 = vld [vmem:[%s2230 + $0x34] sm:$0xf]
        %v2245 = vld [vmem:[%s2230 + $0x38] sm:$0xf]
        %v2246 = vld [vmem:[%s2230 + $0x3c] sm:$0xf]
        %v2247 = vshrl.u32 %v244, 16
        %v2249 = vor.u32 %v2247, %v1461
        %v2251 = vshll.u32 %v245, 16
        %v2253 = vrot.slane %v2251, 1
        %v2254 = vsel %vm280, %v2249, %v2253
        %v2255 = vshrl.u32 %v245, 16
        %v2257 = vor.u32 %v2255, %v2253
        %v2259 = vshll.u32 %v246, 16
        %v2261 = vrot.slane %v2259, 1
        %v2262 = vsel %vm280, %v2257, %v2261
        %v2281 = vunpack.c.l.b16 %v2231
        %v2282 = vunpack.c.l.b16 %v2232
        %v2283 = vunpack.c.l.b16 %v2233
        %v2284 = vunpack.c.l.b16 %v2234
        %v2285 = vunpack.c.l.b16 %v2235
        %v2286 = vunpack.c.l.b16 %v2236
        %v2287 = vunpack.c.l.b16 %v2237
        %v2288 = vunpack.c.l.b16 %v2238
        %v2289 = vunpack.c.l.b16 %v2239
        %v2290 = vunpack.c.l.b16 %v2240
        %v2291 = vunpack.c.l.b16 %v2241
        %v2292 = vunpack.c.l.b16 %v2242
        %v2293 = vunpack.c.l.b16 %v2243
        %v2294 = vunpack.c.l.b16 %v2244
        %v2295 = vunpack.c.l.b16 %v2245
        %v2296 = vunpack.c.l.b16 %v2246
        %v2297 = vpack.c.b16 %v2282, %v2281
        %v2298 = vpack.c.b16 %v2284, %v2283
        %v2299 = vpack.c.b16 %v2286, %v2285
        %v2300 = vpack.c.b16 %v2288, %v2287
        %v2301 = vpack.c.b16 %v2290, %v2289
        %v2302 = vpack.c.b16 %v2292, %v2291
        %v2303 = vpack.c.b16 %v2294, %v2293
        %v2304 = vpack.c.b16 %v2296, %v2295
        %2313 = vmatprep.subr.bf16.mxu0 0
        %2314 = vmatpush1.bf16.msra.mxu0 %v2297
        %2315 = vmatprep.subr.bf16.mxu0 0
        %2316 = vmatpush1.bf16.msra.mxu0 %v2298
        %2317 = vmatprep.subr.bf16.mxu0 0
        %2318 = vmatpush1.bf16.msra.mxu0 %v2299
        %2319 = vmatprep.subr.bf16.mxu0 0
        %2320 = vmatpush1.bf16.msra.mxu0 %v2300
        %2321 = vmatprep.subr.bf16.mxu0 0
        %2322 = vmatpush1.bf16.msra.mxu0 %v2301
        %2323 = vmatprep.subr.bf16.mxu0 0
        %2324 = vmatpush1.bf16.msra.mxu0 %v2302
        %2325 = vmatprep.subr.bf16.mxu0 0
        %2326 = vmatpush1.bf16.msra.mxu0 %v2303
        %2327 = vmatprep.subr.bf16.mxu0 0
        %2328 = vmatpush1.bf16.msra.mxu0 %v2304
        %2329 = vmatprep.subr.bf16.mxu0 0
        %2330 = vmatpush1.bf16.msra.mxu0 0
        %2331 = vmatprep.subr.bf16.mxu0 0
        %2332 = vmatpush1.bf16.msra.mxu0 0
        %2333 = vmatprep.subr.bf16.mxu0 0
        %2334 = vmatpush1.bf16.msra.mxu0 0
        %2335 = vmatprep.subr.bf16.mxu0 0
        %2336 = vmatpush1.bf16.msra.mxu0 0
        %2337 = vmatprep.subr.bf16.mxu0 0
        %2338 = vmatpush1.bf16.msra.mxu0 0
        %2339 = vmatprep.subr.bf16.mxu0 0
        %2340 = vmatpush1.bf16.msra.mxu0 0
        %2341 = vmatprep.subr.bf16.mxu0 0
        %2342 = vmatpush1.bf16.msra.mxu0 0
        %2343 = vmatprep.subr.bf16.mxu0 0
        %2344 = vmatpush1.bf16.msra.mxu0 0
        %2345 = vmatprep.mubr.bf16.mxu0 0
        %2346 = vmatmul.mubr.bf16.gmra.mrb[0].mxu0 %v324
        %v2347 = vpop.f32.mrb[0].mxu0
        %v2348 = vadd.f32 0.0, %v2347
        %v2349 = vpop.f32.mrb[0].mxu0
        %v2350 = vpop.f32.mrb[0].mxu0
        %v2351 = vadd.f32 0.0, %v2350
        %v2352 = vpop.f32.mrb[0].mxu0
        %2353 = vmatprep.mubr.bf16.mxu0 0
        %2354 = vmatmul.mubr.bf16.gmra.mrb[0].mxu0 %v332
        %v2355 = vpop.f32.mrb[0].mxu0
        %v2356 = vadd.f32 0.0, %v2355
        %v2357 = vpop.f32.mrb[0].mxu0
        %v2358 = vpop.f32.mrb[0].mxu0
        %v2359 = vadd.f32 0.0, %v2358
        %v2360 = vpop.f32.mrb[0].mxu0
        %2361 = vmatprep.mubr.bf16.mxu0 0
        %2362 = vmatmul.mubr.bf16.gmra.mrb[0].mxu0 %v340
        %v2363 = vpop.f32.mrb[0].mxu0
        %v2364 = vadd.f32 0.0, %v2363
        %v2365 = vpop.f32.mrb[0].mxu0
        %v2366 = vpop.f32.mrb[0].mxu0
        %v2367 = vadd.f32 0.0, %v2366
        %v2368 = vpop.f32.mrb[0].mxu0
        %2369 = vmatprep.mubr.bf16.mxu0 0
        %2370 = vmatmul.mubr.bf16.gmra.mrb[0].mxu0 %v348
        %v2371 = vpop.f32.mrb[0].mxu0
        %v2372 = vadd.f32 0.0, %v2371
        %v2373 = vpop.f32.mrb[0].mxu0
        %v2374 = vpop.f32.mrb[0].mxu0
        %v2375 = vadd.f32 0.0, %v2374
        %v2376 = vpop.f32.mrb[0].mxu0
        %2377 = vmatprep.mubr.bf16.mxu0 0
        %2378 = vmatmul.mubr.bf16.gmra.mrb[0].mxu0 %v356
        %v2379 = vpop.f32.mrb[0].mxu0
        %v2380 = vadd.f32 0.0, %v2379
        %v2381 = vpop.f32.mrb[0].mxu0
        %v2382 = vpop.f32.mrb[0].mxu0
        %v2383 = vadd.f32 0.0, %v2382
        %v2384 = vpop.f32.mrb[0].mxu0
        %2385 = vmatprep.mubr.bf16.mxu0 0
        %2386 = vmatmul.mubr.bf16.gmra.mrb[0].mxu0 %v364
        %v2387 = vpop.f32.mrb[0].mxu0
        %v2388 = vadd.f32 0.0, %v2387
        %v2389 = vpop.f32.mrb[0].mxu0
        %v2390 = vpop.f32.mrb[0].mxu0
        %v2391 = vadd.f32 0.0, %v2390
        %v2392 = vpop.f32.mrb[0].mxu0
        %2393 = vmatprep.mubr.bf16.mxu0 0
        %2394 = vmatmul.mubr.bf16.gmra.mrb[0].mxu0 %v372
        %v2395 = vpop.f32.mrb[0].mxu0
        %v2396 = vadd.f32 0.0, %v2395
        %v2397 = vpop.f32.mrb[0].mxu0
        %v2398 = vpop.f32.mrb[0].mxu0
        %v2399 = vadd.f32 0.0, %v2398
        %v2400 = vpop.f32.mrb[0].mxu0
        %2401 = vmatprep.mubr.bf16.mxu0 0
        %2402 = vmatmul.mubr.bf16.gmra.mrb[0].mxu0 %v380
        %v2403 = vpop.f32.mrb[0].mxu0
        %v2404 = vadd.f32 0.0, %v2403
        %v2405 = vpop.f32.mrb[0].mxu0
        %v2406 = vpop.f32.mrb[0].mxu0
        %v2407 = vadd.f32 0.0, %v2406
        %v2408 = vpop.f32.mrb[0].mxu0
        %2409 = vmatprep.mubr.bf16.mxu0 0
        %2410 = vmatmul.mubr.bf16.gmra.mrb[0].mxu0 %v388
        %v2411 = vpop.f32.mrb[0].mxu0
        %v2412 = vadd.f32 0.0, %v2411
        %v2413 = vpop.f32.mrb[0].mxu0
        %v2414 = vpop.f32.mrb[0].mxu0
        %v2415 = vadd.f32 0.0, %v2414
        %v2416 = vpop.f32.mrb[0].mxu0
        %2417 = vmatprep.mubr.bf16.mxu0 0
        %2418 = vmatmul.mubr.bf16.gmra.mrb[0].mxu0 %v396
        %v2419 = vpop.f32.mrb[0].mxu0
        %v2420 = vadd.f32 0.0, %v2419
        %v2421 = vpop.f32.mrb[0].mxu0
        %v2422 = vpop.f32.mrb[0].mxu0
        %v2423 = vadd.f32 0.0, %v2422
        %v2424 = vpop.f32.mrb[0].mxu0
        %2425 = vmatprep.mubr.bf16.mxu0 0
        %2426 = vmatmul.mubr.bf16.gmra.mrb[0].mxu0 %v404
        %v2427 = vpop.f32.mrb[0].mxu0
        %v2428 = vadd.f32 0.0, %v2427
        %v2429 = vpop.f32.mrb[0].mxu0
        %v2430 = vpop.f32.mrb[0].mxu0
        %v2431 = vadd.f32 0.0, %v2430
        %v2432 = vpop.f32.mrb[0].mxu0
        %2433 = vmatprep.mubr.bf16.mxu0 0
        %2434 = vmatmul.mubr.bf16.gmra.mrb[0].mxu0 %v412
        %v2435 = vpop.f32.mrb[0].mxu0
        %v2436 = vadd.f32 0.0, %v2435
        %v2437 = vpop.f32.mrb[0].mxu0
        %v2438 = vpop.f32.mrb[0].mxu0
        %v2439 = vadd.f32 0.0, %v2438
        %v2440 = vpop.f32.mrb[0].mxu0
        %2441 = vmatprep.mubr.bf16.mxu0 0
        %2442 = vmatmul.mubr.bf16.gmra.mrb[0].mxu0 %v1454
        %v2443 = vpop.f32.mrb[0].mxu0
        %v2444 = vadd.f32 0.0, %v2443
        %v2445 = vpop.f32.mrb[0].mxu0
        %v2446 = vpop.f32.mrb[0].mxu0
        %v2447 = vadd.f32 0.0, %v2446
        %v2448 = vpop.f32.mrb[0].mxu0
        %2449 = vmatprep.mubr.bf16.mxu0 0
        %2450 = vmatmul.mubr.bf16.gmra.mrb[0].mxu0 %v1462
        %v2451 = vpop.f32.mrb[0].mxu0
        %v2452 = vadd.f32 0.0, %v2451
        %v2453 = vpop.f32.mrb[0].mxu0
        %v2454 = vpop.f32.mrb[0].mxu0
        %v2455 = vadd.f32 0.0, %v2454
        %v2456 = vpop.f32.mrb[0].mxu0
        %2457 = vmatprep.mubr.bf16.mxu0 0
        %2458 = vmatmul.mubr.bf16.gmra.mrb[0].mxu0 %v2254
        %v2459 = vpop.f32.mrb[0].mxu0
        %v2460 = vadd.f32 0.0, %v2459
        %v2461 = vpop.f32.mrb[0].mxu0
        %v2462 = vpop.f32.mrb[0].mxu0
        %v2463 = vadd.f32 0.0, %v2462
        %v2464 = vpop.f32.mrb[0].mxu0
        %2465 = vmatprep.mubr.bf16.mxu0 0
        %2466 = vmatmul.mubr.bf16.gmra.mrb[0].mxu0 %v2262
        %v2467 = vpop.f32.mrb[0].mxu0
        %v2468 = vadd.f32 0.0, %v2467
        %v2469 = vpop.f32.mrb[0].mxu0
        %v2470 = vpop.f32.mrb[0].mxu0
        %v2471 = vadd.f32 0.0, %v2470
        %v2472 = vpop.f32.mrb[0].mxu0
        %2473 = vdwg.mxu0
        %v2474 = vadd.f32 %v2198, %v2348
        %v2475 = vadd.f32 %v2199, %v2351
        %v2476 = vadd.f32 %v2200, %v2356
        %v2477 = vadd.f32 %v2201, %v2359
        %v2478 = vadd.f32 %v2202, %v2364
        %v2479 = vadd.f32 %v2203, %v2367
        %v2480 = vadd.f32 %v2204, %v2372
        %v2481 = vadd.f32 %v2205, %v2375
        %v2482 = vadd.f32 %v2206, %v2380
        %v2483 = vadd.f32 %v2207, %v2383
        %v2484 = vadd.f32 %v2208, %v2388
        %v2485 = vadd.f32 %v2209, %v2391
        %v2486 = vadd.f32 %v2210, %v2396
        %v2487 = vadd.f32 %v2211, %v2399
        %v2488 = vadd.f32 %v2212, %v2404
        %v2489 = vadd.f32 %v2213, %v2407
        %v2490 = vadd.f32 %v2214, %v2412
        %v2491 = vadd.f32 %v2215, %v2415
        %v2492 = vadd.f32 %v2216, %v2420
        %v2493 = vadd.f32 %v2217, %v2423
        %v2494 = vadd.f32 %v2218, %v2428
        %v2495 = vadd.f32 %v2219, %v2431
        %v2496 = vadd.f32 %v2220, %v2436
        %v2497 = vadd.f32 %v2221, %v2439
        %v2498 = vadd.f32 %v2222, %v2444
        %v2499 = vadd.f32 %v2223, %v2447
        %v2500 = vadd.f32 %v2224, %v2452
        %v2501 = vadd.f32 %v2225, %v2455
        %v2502 = vadd.f32 %v2226, %v2460
        %v2503 = vadd.f32 %v2227, %v2463
        %v2504 = vadd.f32 %v2228, %v2468
        %v2505 = vadd.f32 %v2229, %v2471
        %s2506 = scalar_lea.vmem [#allocation4], 512
        %v2507 = vld [vmem:[%s2506] sm:$0xf]
        %v2508 = vld [vmem:[%s2506 + $0x4] sm:$0xf]
        %v2509 = vld [vmem:[%s2506 + $0x8] sm:$0xf]
        %v2510 = vld [vmem:[%s2506 + $0xc] sm:$0xf]
        %v2511 = vld [vmem:[%s2506 + $0x10] sm:$0xf]
        %v2512 = vld [vmem:[%s2506 + $0x14] sm:$0xf]
        %v2513 = vld [vmem:[%s2506 + $0x18] sm:$0xf]
        %v2514 = vld [vmem:[%s2506 + $0x1c] sm:$0xf]
        %v2515 = vld [vmem:[%s2506 + $0x20] sm:$0xf]
        %v2516 = vld [vmem:[%s2506 + $0x24] sm:$0xf]
        %v2517 = vld [vmem:[%s2506 + $0x28] sm:$0xf]
        %v2518 = vld [vmem:[%s2506 + $0x2c] sm:$0xf]
        %v2519 = vld [vmem:[%s2506 + $0x30] sm:$0xf]
        %v2520 = vld [vmem:[%s2506 + $0x34] sm:$0xf]
        %v2521 = vld [vmem:[%s2506 + $0x38] sm:$0xf]
        %v2522 = vld [vmem:[%s2506 + $0x3c] sm:$0xf]
        %v2525 = vrot.slane %v245, 1
        %v2526 = vsel %vm881, %v1727, %v2525
        %v2527 = vrot.slane %v246, 1
        %v2528 = vsel %vm881, %v2525, %v2527
        %v2547 = vunpack.c.l.b16 %v2507
        %v2548 = vunpack.c.l.b16 %v2508
        %v2549 = vunpack.c.l.b16 %v2509
        %v2550 = vunpack.c.l.b16 %v2510
        %v2551 = vunpack.c.l.b16 %v2511
        %v2552 = vunpack.c.l.b16 %v2512
        %v2553 = vunpack.c.l.b16 %v2513
        %v2554 = vunpack.c.l.b16 %v2514
        %v2555 = vunpack.c.l.b16 %v2515
        %v2556 = vunpack.c.l.b16 %v2516
        %v2557 = vunpack.c.l.b16 %v2517
        %v2558 = vunpack.c.l.b16 %v2518
        %v2559 = vunpack.c.l.b16 %v2519
        %v2560 = vunpack.c.l.b16 %v2520
        %v2561 = vunpack.c.l.b16 %v2521
        %v2562 = vunpack.c.l.b16 %v2522
        %v2563 = vpack.c.b16 %v2548, %v2547
        %v2564 = vpack.c.b16 %v2550, %v2549
        %v2565 = vpack.c.b16 %v2552, %v2551
        %v2566 = vpack.c.b16 %v2554, %v2553
        %v2567 = vpack.c.b16 %v2556, %v2555
        %v2568 = vpack.c.b16 %v2558, %v2557
        %v2569 = vpack.c.b16 %v2560, %v2559
        %v2570 = vpack.c.b16 %v2562, %v2561
        %2579 = vmatprep.subr.bf16.mxu0 0
        %2580 = vmatpush1.bf16.msra.mxu0 %v2563
        %2581 = vmatprep.subr.bf16.mxu0 0
        %2582 = vmatpush1.bf16.msra.mxu0 %v2564
        %2583 = vmatprep.subr.bf16.mxu0 0
        %2584 = vmatpush1.bf16.msra.mxu0 %v2565
        %2585 = vmatprep.subr.bf16.mxu0 0
        %2586 = vmatpush1.bf16.msra.mxu0 %v2566
        %2587 = vmatprep.subr.bf16.mxu0 0
        %2588 = vmatpush1.bf16.msra.mxu0 %v2567
        %2589 = vmatprep.subr.bf16.mxu0 0
        %2590 = vmatpush1.bf16.msra.mxu0 %v2568
        %2591 = vmatprep.subr.bf16.mxu0 0
        %2592 = vmatpush1.bf16.msra.mxu0 %v2569
        %2593 = vmatprep.subr.bf16.mxu0 0
        %2594 = vmatpush1.bf16.msra.mxu0 %v2570
        %2595 = vmatprep.subr.bf16.mxu0 0
        %2596 = vmatpush1.bf16.msra.mxu0 0
        %2597 = vmatprep.subr.bf16.mxu0 0
        %2598 = vmatpush1.bf16.msra.mxu0 0
        %2599 = vmatprep.subr.bf16.mxu0 0
        %2600 = vmatpush1.bf16.msra.mxu0 0
        %2601 = vmatprep.subr.bf16.mxu0 0
        %2602 = vmatpush1.bf16.msra.mxu0 0
        %2603 = vmatprep.subr.bf16.mxu0 0
        %2604 = vmatpush1.bf16.msra.mxu0 0
        %2605 = vmatprep.subr.bf16.mxu0 0
        %2606 = vmatpush1.bf16.msra.mxu0 0
        %2607 = vmatprep.subr.bf16.mxu0 0
        %2608 = vmatpush1.bf16.msra.mxu0 0
        %2609 = vmatprep.subr.bf16.mxu0 0
        %2610 = vmatpush1.bf16.msra.mxu0 0
        %2611 = vmatprep.mubr.bf16.mxu0 0
        %2612 = vmatmul.mubr.bf16.gmra.mrb[0].mxu0 %v892
        %v2613 = vpop.f32.mrb[0].mxu0
        %v2614 = vadd.f32 0.0, %v2613
        %v2615 = vpop.f32.mrb[0].mxu0
        %v2616 = vpop.f32.mrb[0].mxu0
        %v2617 = vadd.f32 0.0, %v2616
        %v2618 = vpop.f32.mrb[0].mxu0
        %2619 = vmatprep.mubr.bf16.mxu0 0
        %2620 = vmatmul.mubr.bf16.gmra.mrb[0].mxu0 %v894
        %v2621 = vpop.f32.mrb[0].mxu0
        %v2622 = vadd.f32 0.0, %v2621
        %v2623 = vpop.f32.mrb[0].mxu0
        %v2624 = vpop.f32.mrb[0].mxu0
        %v2625 = vadd.f32 0.0, %v2624
        %v2626 = vpop.f32.mrb[0].mxu0
        %2627 = vmatprep.mubr.bf16.mxu0 0
        %2628 = vmatmul.mubr.bf16.gmra.mrb[0].mxu0 %v896
        %v2629 = vpop.f32.mrb[0].mxu0
        %v2630 = vadd.f32 0.0, %v2629
        %v2631 = vpop.f32.mrb[0].mxu0
        %v2632 = vpop.f32.mrb[0].mxu0
        %v2633 = vadd.f32 0.0, %v2632
        %v2634 = vpop.f32.mrb[0].mxu0
        %2635 = vmatprep.mubr.bf16.mxu0 0
        %2636 = vmatmul.mubr.bf16.gmra.mrb[0].mxu0 %v898
        %v2637 = vpop.f32.mrb[0].mxu0
        %v2638 = vadd.f32 0.0, %v2637
        %v2639 = vpop.f32.mrb[0].mxu0
        %v2640 = vpop.f32.mrb[0].mxu0
        %v2641 = vadd.f32 0.0, %v2640
        %v2642 = vpop.f32.mrb[0].mxu0
        %2643 = vmatprep.mubr.bf16.mxu0 0
        %2644 = vmatmul.mubr.bf16.gmra.mrb[0].mxu0 %v900
        %v2645 = vpop.f32.mrb[0].mxu0
        %v2646 = vadd.f32 0.0, %v2645
        %v2647 = vpop.f32.mrb[0].mxu0
        %v2648 = vpop.f32.mrb[0].mxu0
        %v2649 = vadd.f32 0.0, %v2648
        %v2650 = vpop.f32.mrb[0].mxu0
        %2651 = vmatprep.mubr.bf16.mxu0 0
        %2652 = vmatmul.mubr.bf16.gmra.mrb[0].mxu0 %v902
        %v2653 = vpop.f32.mrb[0].mxu0
        %v2654 = vadd.f32 0.0, %v2653
        %v2655 = vpop.f32.mrb[0].mxu0
        %v2656 = vpop.f32.mrb[0].mxu0
        %v2657 = vadd.f32 0.0, %v2656
        %v2658 = vpop.f32.mrb[0].mxu0
        %2659 = vmatprep.mubr.bf16.mxu0 0
        %2660 = vmatmul.mubr.bf16.gmra.mrb[0].mxu0 %v904
        %v2661 = vpop.f32.mrb[0].mxu0
        %v2662 = vadd.f32 0.0, %v2661
        %v2663 = vpop.f32.mrb[0].mxu0
        %v2664 = vpop.f32.mrb[0].mxu0
        %v2665 = vadd.f32 0.0, %v2664
        %v2666 = vpop.f32.mrb[0].mxu0
        %2667 = vmatprep.mubr.bf16.mxu0 0
        %2668 = vmatmul.mubr.bf16.gmra.mrb[0].mxu0 %v906
        %v2669 = vpop.f32.mrb[0].mxu0
        %v2670 = vadd.f32 0.0, %v2669
        %v2671 = vpop.f32.mrb[0].mxu0
        %v2672 = vpop.f32.mrb[0].mxu0
        %v2673 = vadd.f32 0.0, %v2672
        %v2674 = vpop.f32.mrb[0].mxu0
        %2675 = vmatprep.mubr.bf16.mxu0 0
        %2676 = vmatmul.mubr.bf16.gmra.mrb[0].mxu0 %v908
        %v2677 = vpop.f32.mrb[0].mxu0
        %v2678 = vadd.f32 0.0, %v2677
        %v2679 = vpop.f32.mrb[0].mxu0
        %v2680 = vpop.f32.mrb[0].mxu0
        %v2681 = vadd.f32 0.0, %v2680
        %v2682 = vpop.f32.mrb[0].mxu0
        %2683 = vmatprep.mubr.bf16.mxu0 0
        %2684 = vmatmul.mubr.bf16.gmra.mrb[0].mxu0 %v910
        %v2685 = vpop.f32.mrb[0].mxu0
        %v2686 = vadd.f32 0.0, %v2685
        %v2687 = vpop.f32.mrb[0].mxu0
        %v2688 = vpop.f32.mrb[0].mxu0
        %v2689 = vadd.f32 0.0, %v2688
        %v2690 = vpop.f32.mrb[0].mxu0
        %2691 = vmatprep.mubr.bf16.mxu0 0
        %2692 = vmatmul.mubr.bf16.gmra.mrb[0].mxu0 %v912
        %v2693 = vpop.f32.mrb[0].mxu0
        %v2694 = vadd.f32 0.0, %v2693
        %v2695 = vpop.f32.mrb[0].mxu0
        %v2696 = vpop.f32.mrb[0].mxu0
        %v2697 = vadd.f32 0.0, %v2696
        %v2698 = vpop.f32.mrb[0].mxu0
        %2699 = vmatprep.mubr.bf16.mxu0 0
        %2700 = vmatmul.mubr.bf16.gmra.mrb[0].mxu0 %v914
        %v2701 = vpop.f32.mrb[0].mxu0
        %v2702 = vadd.f32 0.0, %v2701
        %v2703 = vpop.f32.mrb[0].mxu0
        %v2704 = vpop.f32.mrb[0].mxu0
        %v2705 = vadd.f32 0.0, %v2704
        %v2706 = vpop.f32.mrb[0].mxu0
        %2707 = vmatprep.mubr.bf16.mxu0 0
        %2708 = vmatmul.mubr.bf16.gmra.mrb[0].mxu0 %v1726
        %v2709 = vpop.f32.mrb[0].mxu0
        %v2710 = vadd.f32 0.0, %v2709
        %v2711 = vpop.f32.mrb[0].mxu0
        %v2712 = vpop.f32.mrb[0].mxu0
        %v2713 = vadd.f32 0.0, %v2712
        %v2714 = vpop.f32.mrb[0].mxu0
        %2715 = vmatprep.mubr.bf16.mxu0 0
        %2716 = vmatmul.mubr.bf16.gmra.mrb[0].mxu0 %v1728
        %v2717 = vpop.f32.mrb[0].mxu0
        %v2718 = vadd.f32 0.0, %v2717
        %v2719 = vpop.f32.mrb[0].mxu0
        %v2720 = vpop.f32.mrb[0].mxu0
        %v2721 = vadd.f32 0.0, %v2720
        %v2722 = vpop.f32.mrb[0].mxu0
        %2723 = vmatprep.mubr.bf16.mxu0 0
        %2724 = vmatmul.mubr.bf16.gmra.mrb[0].mxu0 %v2526
        %v2725 = vpop.f32.mrb[0].mxu0
        %v2726 = vadd.f32 0.0, %v2725
        %v2727 = vpop.f32.mrb[0].mxu0
        %v2728 = vpop.f32.mrb[0].mxu0
        %v2729 = vadd.f32 0.0, %v2728
        %v2730 = vpop.f32.mrb[0].mxu0
        %2731 = vmatprep.mubr.bf16.mxu0 0
        %2732 = vmatmul.mubr.bf16.gmra.mrb[0].mxu0 %v2528
        %v2733 = vpop.f32.mrb[0].mxu0
        %v2734 = vadd.f32 0.0, %v2733
        %v2735 = vpop.f32.mrb[0].mxu0
        %v2736 = vpop.f32.mrb[0].mxu0
        %v2737 = vadd.f32 0.0, %v2736
        %v2738 = vpop.f32.mrb[0].mxu0
        %2739 = vdwg.mxu0
        %v2740 = vadd.f32 %v2474, %v2614
        %v2741 = vadd.f32 %v2475, %v2617
        %v2742 = vadd.f32 %v2476, %v2622
        %v2743 = vadd.f32 %v2477, %v2625
        %v2744 = vadd.f32 %v2478, %v2630
        %v2745 = vadd.f32 %v2479, %v2633
        %v2746 = vadd.f32 %v2480, %v2638
        %v2747 = vadd.f32 %v2481, %v2641
        %v2748 = vadd.f32 %v2482, %v2646
        %v2749 = vadd.f32 %v2483, %v2649
        %v2750 = vadd.f32 %v2484, %v2654
        %v2751 = vadd.f32 %v2485, %v2657
        %v2752 = vadd.f32 %v2486, %v2662
        %v2753 = vadd.f32 %v2487, %v2665
        %v2754 = vadd.f32 %v2488, %v2670
        %v2755 = vadd.f32 %v2489, %v2673
        %v2756 = vadd.f32 %v2490, %v2678
        %v2757 = vadd.f32 %v2491, %v2681
        %v2758 = vadd.f32 %v2492, %v2686
        %v2759 = vadd.f32 %v2493, %v2689
        %v2760 = vadd.f32 %v2494, %v2694
        %v2761 = vadd.f32 %v2495, %v2697
        %v2762 = vadd.f32 %v2496, %v2702
        %v2763 = vadd.f32 %v2497, %v2705
        %v2764 = vadd.f32 %v2498, %v2710
        %v2765 = vadd.f32 %v2499, %v2713
        %v2766 = vadd.f32 %v2500, %v2718
        %v2767 = vadd.f32 %v2501, %v2721
        %v2768 = vadd.f32 %v2502, %v2726
        %v2769 = vadd.f32 %v2503, %v2729
        %v2770 = vadd.f32 %v2504, %v2734
        %v2771 = vadd.f32 %v2505, %v2737
        %v2772 = vld [vmem:[%s2] sm:$0x1]
        %v2774 = vlaneseq
        %v2775 = vshrl.u32 %v2774, 7
        %v2776 = vsub.s32 0, %v2775
        %v2777 = vrot.slane %v2772, %v2776
        %v2779 = vadd.f32 %v2740, %v2777
        %v2780 = vadd.f32 %v2741, %v2777
        %v2781 = vadd.f32 %v2742, %v2777
        %v2782 = vadd.f32 %v2743, %v2777
        %v2783 = vadd.f32 %v2744, %v2777
        %v2784 = vadd.f32 %v2745, %v2777
        %v2785 = vadd.f32 %v2746, %v2777
        %v2786 = vadd.f32 %v2747, %v2777
        %v2787 = vadd.f32 %v2748, %v2777
        %v2788 = vadd.f32 %v2749, %v2777
        %v2789 = vadd.f32 %v2750, %v2777
        %v2790 = vadd.f32 %v2751, %v2777
        %v2791 = vadd.f32 %v2752, %v2777
        %v2792 = vadd.f32 %v2753, %v2777
        %v2793 = vadd.f32 %v2754, %v2777
        %v2794 = vadd.f32 %v2755, %v2777
        %v2795 = vadd.f32 %v2756, %v2777
        %v2796 = vadd.f32 %v2757, %v2777
        %v2797 = vadd.f32 %v2758, %v2777
        %v2798 = vadd.f32 %v2759, %v2777
        %v2799 = vadd.f32 %v2760, %v2777
        %v2800 = vadd.f32 %v2761, %v2777
        %v2801 = vadd.f32 %v2762, %v2777
        %v2802 = vadd.f32 %v2763, %v2777
        %v2803 = vadd.f32 %v2764, %v2777
        %v2804 = vadd.f32 %v2765, %v2777
        %v2805 = vadd.f32 %v2766, %v2777
        %v2806 = vadd.f32 %v2767, %v2777
        %v2807 = vadd.f32 %v2768, %v2777
        %v2808 = vadd.f32 %v2769, %v2777
        %v2809 = vadd.f32 %v2770, %v2777
        %v2810 = vadd.f32 %v2771, %v2777
        %v2811 = vxor.u32 %v2779, 2147483648
        %v2812 = vxor.u32 %v2780, 2147483648
        %v2813 = vxor.u32 %v2781, 2147483648
        %v2814 = vxor.u32 %v2782, 2147483648
        %v2815 = vxor.u32 %v2783, 2147483648
        %v2816 = vxor.u32 %v2784, 2147483648
        %v2817 = vxor.u32 %v2785, 2147483648
        %v2818 = vxor.u32 %v2786, 2147483648
        %v2819 = vxor.u32 %v2787, 2147483648
        %v2820 = vxor.u32 %v2788, 2147483648
        %v2821 = vxor.u32 %v2789, 2147483648
        %v2822 = vxor.u32 %v2790, 2147483648
        %v2823 = vxor.u32 %v2791, 2147483648
        %v2824 = vxor.u32 %v2792, 2147483648
        %v2825 = vxor.u32 %v2793, 2147483648
        %v2826 = vxor.u32 %v2794, 2147483648
        %v2827 = vxor.u32 %v2795, 2147483648
        %v2828 = vxor.u32 %v2796, 2147483648
        %v2829 = vxor.u32 %v2797, 2147483648
        %v2830 = vxor.u32 %v2798, 2147483648
        %v2831 = vxor.u32 %v2799, 2147483648
        %v2832 = vxor.u32 %v2800, 2147483648
        %v2833 = vxor.u32 %v2801, 2147483648
        %v2834 = vxor.u32 %v2802, 2147483648
        %v2835 = vxor.u32 %v2803, 2147483648
        %v2836 = vxor.u32 %v2804, 2147483648
        %v2837 = vxor.u32 %v2805, 2147483648
        %v2838 = vxor.u32 %v2806, 2147483648
        %v2839 = vxor.u32 %v2807, 2147483648
        %v2840 = vxor.u32 %v2808, 2147483648
        %v2841 = vxor.u32 %v2809, 2147483648
        %v2842 = vxor.u32 %v2810, 2147483648
        %v2843 = vmul.f32 %v2811, 1.442695
        %v2844 = vpow.pop %v2843
        %v2845 = vmul.f32 %v2812, 1.442695
        %v2846 = vpow.pop %v2845
        %v2847 = vmul.f32 %v2813, 1.442695
        %v2848 = vpow.pop %v2847
        %v2849 = vmul.f32 %v2814, 1.442695
        %v2850 = vpow.pop %v2849
        %v2851 = vmul.f32 %v2815, 1.442695
        %v2852 = vpow.pop %v2851
        %v2853 = vmul.f32 %v2816, 1.442695
        %v2854 = vpow.pop %v2853
        %v2855 = vmul.f32 %v2817, 1.442695
        %v2856 = vpow.pop %v2855
        %v2857 = vmul.f32 %v2818, 1.442695
        %v2858 = vpow.pop %v2857
        %v2859 = vmul.f32 %v2819, 1.442695
        %v2860 = vpow.pop %v2859
        %v2861 = vmul.f32 %v2820, 1.442695
        %v2862 = vpow.pop %v2861
        %v2863 = vmul.f32 %v2821, 1.442695
        %v2864 = vpow.pop %v2863
        %v2865 = vmul.f32 %v2822, 1.442695
        %v2866 = vpow.pop %v2865
        %v2867 = vmul.f32 %v2823, 1.442695
        %v2868 = vpow.pop %v2867
        %v2869 = vmul.f32 %v2824, 1.442695
        %v2870 = vpow.pop %v2869
        %v2871 = vmul.f32 %v2825, 1.442695
        %v2872 = vpow.pop %v2871
        %v2873 = vmul.f32 %v2826, 1.442695
        %v2874 = vpow.pop %v2873
        %v2875 = vmul.f32 %v2827, 1.442695
        %v2876 = vpow.pop %v2875
        %v2877 = vmul.f32 %v2828, 1.442695
        %v2878 = vpow.pop %v2877
        %v2879 = vmul.f32 %v2829, 1.442695
        %v2880 = vpow.pop %v2879
        %v2881 = vmul.f32 %v2830, 1.442695
        %v2882 = vpow.pop %v2881
        %v2883 = vmul.f32 %v2831, 1.442695
        %v2884 = vpow.pop %v2883
        %v2885 = vmul.f32 %v2832, 1.442695
        %v2886 = vpow.pop %v2885
        %v2887 = vmul.f32 %v2833, 1.442695
        %v2888 = vpow.pop %v2887
        %v2889 = vmul.f32 %v2834, 1.442695
        %v2890 = vpow.pop %v2889
        %v2891 = vmul.f32 %v2835, 1.442695
        %v2892 = vpow.pop %v2891
        %v2893 = vmul.f32 %v2836, 1.442695
        %v2894 = vpow.pop %v2893
        %v2895 = vmul.f32 %v2837, 1.442695
        %v2896 = vpow.pop %v2895
        %v2897 = vmul.f32 %v2838, 1.442695
        %v2898 = vpow.pop %v2897
        %v2899 = vmul.f32 %v2839, 1.442695
        %v2900 = vpow.pop %v2899
        %v2901 = vmul.f32 %v2840, 1.442695
        %v2902 = vpow.pop %v2901
        %v2903 = vmul.f32 %v2841, 1.442695
        %v2904 = vpow.pop %v2903
        %v2905 = vmul.f32 %v2842, 1.442695
        %v2906 = vpow.pop %v2905
        %v2907 = vadd.f32 %v2844, 1.0
        %v2908 = vadd.f32 %v2846, 1.0
        %v2909 = vadd.f32 %v2848, 1.0
        %v2910 = vadd.f32 %v2850, 1.0
        %v2911 = vadd.f32 %v2852, 1.0
        %v2912 = vadd.f32 %v2854, 1.0
        %v2913 = vadd.f32 %v2856, 1.0
        %v2914 = vadd.f32 %v2858, 1.0
        %v2915 = vadd.f32 %v2860, 1.0
        %v2916 = vadd.f32 %v2862, 1.0
        %v2917 = vadd.f32 %v2864, 1.0
        %v2918 = vadd.f32 %v2866, 1.0
        %v2919 = vadd.f32 %v2868, 1.0
        %v2920 = vadd.f32 %v2870, 1.0
        %v2921 = vadd.f32 %v2872, 1.0
        %v2922 = vadd.f32 %v2874, 1.0
        %v2923 = vadd.f32 %v2876, 1.0
        %v2924 = vadd.f32 %v2878, 1.0
        %v2925 = vadd.f32 %v2880, 1.0
        %v2926 = vadd.f32 %v2882, 1.0
        %v2927 = vadd.f32 %v2884, 1.0
        %v2928 = vadd.f32 %v2886, 1.0
        %v2929 = vadd.f32 %v2888, 1.0
        %v2930 = vadd.f32 %v2890, 1.0
        %v2931 = vadd.f32 %v2892, 1.0
        %v2932 = vadd.f32 %v2894, 1.0
        %v2933 = vadd.f32 %v2896, 1.0
        %v2934 = vadd.f32 %v2898, 1.0
        %v2935 = vadd.f32 %v2900, 1.0
        %v2936 = vadd.f32 %v2902, 1.0
        %v2937 = vadd.f32 %v2904, 1.0
        %v2938 = vadd.f32 %v2906, 1.0
        %v2939 = vrcp.pop %v2907
        %v2940 = vmul.f32 1.0, %v2939
        %v2941 = vrcp.pop %v2908
        %v2942 = vmul.f32 1.0, %v2941
        %v2943 = vrcp.pop %v2909
        %v2944 = vmul.f32 1.0, %v2943
        %v2945 = vrcp.pop %v2910
        %v2946 = vmul.f32 1.0, %v2945
        %v2947 = vrcp.pop %v2911
        %v2948 = vmul.f32 1.0, %v2947
        %v2949 = vrcp.pop %v2912
        %v2950 = vmul.f32 1.0, %v2949
        %v2951 = vrcp.pop %v2913
        %v2952 = vmul.f32 1.0, %v2951
        %v2953 = vrcp.pop %v2914
        %v2954 = vmul.f32 1.0, %v2953
        %v2955 = vrcp.pop %v2915
        %v2956 = vmul.f32 1.0, %v2955
        %v2957 = vrcp.pop %v2916
        %v2958 = vmul.f32 1.0, %v2957
        %v2959 = vrcp.pop %v2917
        %v2960 = vmul.f32 1.0, %v2959
        %v2961 = vrcp.pop %v2918
        %v2962 = vmul.f32 1.0, %v2961
        %v2963 = vrcp.pop %v2919
        %v2964 = vmul.f32 1.0, %v2963
        %v2965 = vrcp.pop %v2920
        %v2966 = vmul.f32 1.0, %v2965
        %v2967 = vrcp.pop %v2921
        %v2968 = vmul.f32 1.0, %v2967
        %v2969 = vrcp.pop %v2922
        %v2970 = vmul.f32 1.0, %v2969
        %v2971 = vrcp.pop %v2923
        %v2972 = vmul.f32 1.0, %v2971
        %v2973 = vrcp.pop %v2924
        %v2974 = vmul.f32 1.0, %v2973
        %v2975 = vrcp.pop %v2925
        %v2976 = vmul.f32 1.0, %v2975
        %v2977 = vrcp.pop %v2926
        %v2978 = vmul.f32 1.0, %v2977
        %v2979 = vrcp.pop %v2927
        %v2980 = vmul.f32 1.0, %v2979
        %v2981 = vrcp.pop %v2928
        %v2982 = vmul.f32 1.0, %v2981
        %v2983 = vrcp.pop %v2929
        %v2984 = vmul.f32 1.0, %v2983
        %v2985 = vrcp.pop %v2930
        %v2986 = vmul.f32 1.0, %v2985
        %v2987 = vrcp.pop %v2931
        %v2988 = vmul.f32 1.0, %v2987
        %v2989 = vrcp.pop %v2932
        %v2990 = vmul.f32 1.0, %v2989
        %v2991 = vrcp.pop %v2933
        %v2992 = vmul.f32 1.0, %v2991
        %v2993 = vrcp.pop %v2934
        %v2994 = vmul.f32 1.0, %v2993
        %v2995 = vrcp.pop %v2935
        %v2996 = vmul.f32 1.0, %v2995
        %v2997 = vrcp.pop %v2936
        %v2998 = vmul.f32 1.0, %v2997
        %v2999 = vrcp.pop %v2937
        %v3000 = vmul.f32 1.0, %v2999
        %v3001 = vrcp.pop %v2938
        %v3002 = vmul.f32 1.0, %v3001
        %v3003 = vmul.f32 %v2779, %v2940
        %v3004 = vmul.f32 %v2780, %v2942
        %v3005 = vmul.f32 %v2781, %v2944
        %v3006 = vmul.f32 %v2782, %v2946
        %v3007 = vmul.f32 %v2783, %v2948
        %v3008 = vmul.f32 %v2784, %v2950
        %v3009 = vmul.f32 %v2785, %v2952
        %v3010 = vmul.f32 %v2786, %v2954
        %v3011 = vmul.f32 %v2787, %v2956
        %v3012 = vmul.f32 %v2788, %v2958
        %v3013 = vmul.f32 %v2789, %v2960
        %v3014 = vmul.f32 %v2790, %v2962
        %v3015 = vmul.f32 %v2791, %v2964
        %v3016 = vmul.f32 %v2792, %v2966
        %v3017 = vmul.f32 %v2793, %v2968
        %v3018 = vmul.f32 %v2794, %v2970
        %v3019 = vmul.f32 %v2795, %v2972
        %v3020 = vmul.f32 %v2796, %v2974
        %v3021 = vmul.f32 %v2797, %v2976
        %v3022 = vmul.f32 %v2798, %v2978
        %v3023 = vmul.f32 %v2799, %v2980
        %v3024 = vmul.f32 %v2800, %v2982
        %v3025 = vmul.f32 %v2801, %v2984
        %v3026 = vmul.f32 %v2802, %v2986
        %v3027 = vmul.f32 %v2803, %v2988
        %v3028 = vmul.f32 %v2804, %v2990
        %v3029 = vmul.f32 %v2805, %v2992
        %v3030 = vmul.f32 %v2806, %v2994
        %v3031 = vmul.f32 %v2807, %v2996
        %v3032 = vmul.f32 %v2808, %v2998
        %v3033 = vmul.f32 %v2809, %v3000
        %v3034 = vmul.f32 %v2810, %v3002
        %3035 = vst [vmem:[%s151] sm:$0xff] %v3003
        %3036 = vst [vmem:[%s151 + $0x8] sm:$0xff] %v3004
        %3037 = vst [vmem:[%s151 + $0x10] sm:$0xff] %v3005
        %3038 = vst [vmem:[%s151 + $0x18] sm:$0xff] %v3006
        %3039 = vst [vmem:[%s151 + $0x20] sm:$0xff] %v3007
        %3040 = vst [vmem:[%s151 + $0x28] sm:$0xff] %v3008
        %3041 = vst [vmem:[%s151 + $0x30] sm:$0xff] %v3009
        %3042 = vst [vmem:[%s151 + $0x38] sm:$0xff] %v3010
        %3043 = vst [vmem:[%s151 + $0x40] sm:$0xff] %v3011
        %3044 = vst [vmem:[%s151 + $0x48] sm:$0xff] %v3012
        %3045 = vst [vmem:[%s151 + $0x50] sm:$0xff] %v3013
        %3046 = vst [vmem:[%s151 + $0x58] sm:$0xff] %v3014
        %3047 = vst [vmem:[%s151 + $0x60] sm:$0xff] %v3015
        %3048 = vst [vmem:[%s151 + $0x68] sm:$0xff] %v3016
        %3049 = vst [vmem:[%s151 + $0x70] sm:$0xff] %v3017
        %3050 = vst [vmem:[%s151 + $0x78] sm:$0xff] %v3018
        %3051 = vst [vmem:[%s151 + $0x80] sm:$0xff] %v3019
        %3052 = vst [vmem:[%s151 + $0x88] sm:$0xff] %v3020
        %3053 = vst [vmem:[%s151 + $0x90] sm:$0xff] %v3021
        %3054 = vst [vmem:[%s151 + $0x98] sm:$0xff] %v3022
        %3055 = vst [vmem:[%s151 + $0xa0] sm:$0xff] %v3023
        %3056 = vst [vmem:[%s151 + $0xa8] sm:$0xff] %v3024
        %3057 = vst [vmem:[%s151 + $0xb0] sm:$0xff] %v3025
        %3058 = vst [vmem:[%s151 + $0xb8] sm:$0xff] %v3026
        %3059 = vst [vmem:[%s151 + $0xc0] sm:$0xff] %v3027
        %3060 = vst [vmem:[%s151 + $0xc8] sm:$0xff] %v3028
        %3061 = vst [vmem:[%s151 + $0xd0] sm:$0xff] %v3029
        %3062 = vst [vmem:[%s151 + $0xd8] sm:$0xff] %v3030
        %3063 = vst [vmem:[%s151 + $0xe0] sm:$0xff] %v3031
        %3064 = vst [vmem:[%s151 + $0xe8] sm:$0xff] %v3032
        %3065 = vst [vmem:[%s151 + $0xf0] sm:$0xff] %v3033
        %3066 = vst [vmem:[%s151 + $0xf8] sm:$0xff] %v3034
        %s3067 = sand.u32 %s82, 1
        %s3068 = scalar_lea.sflag [#allocation6], %s3067
        %s3069 = sand.u32 %s82, 1
        %s3070 = smul.addr %s3069, 256
        %s3071 = scalar_lea.vmem [#allocation7], %s3070
        // Predicated region
        $region49: #{tpu_custom_call.1} parent=27 // pred_check
          %p3072 = pneg %p92
        $region50: #{tpu_custom_call.1} parent=27 // pred_check_branch
          %3074 = sbr.rel (%p3072) target = $region52
        $region51: #{tpu_custom_call.1} parent=27 // pred_region
          %s3075 = smul.u32 8, %s23
          %s3077 = ssub.s32 4096, 4096
          %3078 = vsyncadd %s3068, %s3077
          %s3079 = smul.addr %s3075, 4
          %s3080 = smul.addr %s22, 64
          %s3081 = sadd.s32 %s3079, %s3080
          %s3082 = smul.addr %s3081, 128
          %s3083 = scalar_lea.hbm %s3, %s3082
          %s3084 = sshll.u32 %s3071, 4
          %s3085 = int_to_ptr.vmem [resolvable:$true] %s3084
          %3090 = dma.vmem_to_hbm [thread:$0]  %s3085, 4096, %s3083, %s3068, 128, 128, 8
        $region52: #{tpu_custom_call.1} parent=27 // pred_fallthru
          _
      $region28: #{tpu_custom_call.1} parent=5 // pred_fallthru
        _
      %p3091 = scmp.le.s32.totalorder 2, %s13
      // Predicated region
      $region53: #{tpu_custom_call.1} parent=5 // pred_check
        %p3092 = pneg %p3091
      $region54: #{tpu_custom_call.1} parent=5 // pred_check_branch
        %3094 = sbr.rel (%p3092) target = $region56
      $region55: #{tpu_custom_call.1} parent=5 // pred_region
        %s3095 = ssub.s32 %s13, 2
        // Predicated region
        $region57: #{tpu_custom_call.1} parent=55 // pred_check
          %p3096 = pneg %p98
        $region58: #{tpu_custom_call.1} parent=55 // pred_check_branch
          %3098 = sbr.rel (%p3096) target = $region60
        $region59: #{tpu_custom_call.1} parent=55 // pred_region
          %s3099 = sand.u32 %s83, 1
          %s3100 = scalar_lea.sflag [#allocation6], %s3099
          %s3101 = sand.u32 %s83, 1
          %s3102 = smul.addr %s3101, 256
          %s3103 = scalar_lea.vmem [#allocation7], %s3102
          %3104 = dma.done %s3100, 4096
        $region60: #{tpu_custom_call.1} parent=55 // pred_fallthru
          _
      $region56: #{tpu_custom_call.1} parent=5 // pred_fallthru
        _
    $region6: #{tpu_custom_call.1} parent=1 // loop_footer
      %s17 = sadd.s32 1, %s13
    $region7: #{tpu_custom_call.1} parent=1 // loop_footer_branch
      %12 = sbr.rel target = $region3
    $region8: #{tpu_custom_call.1} parent=1 // loop_exit
      _
    %3105 = vsyncpa [#allocation5], 1
    %s3106 = scalar_lea.sflag [#allocation5], 1
    %3107 = vsyncpa %s3106, 1
    %3108 = vsyncpa [#allocation6], 1
    %s3109 = scalar_lea.sflag [#allocation6], 1
    %3110 = vsyncpa %s3109, 1
  %3111 = vsyncmov [#allocation3]
  %s3112 = vpop.sfrf %3111
  %p3113 = scmp.eq.s32.totalorder %s3112, 0
  %p3114 = pneg %p3113
  %3116 = shalt.err (%p3114)
  %s3117 = scalar_lea.sflag [#allocation3], 1
  %3118 = vsyncmov %s3117
  %s3119 = vpop.sfrf %3118
  %p3120 = scmp.eq.s32.totalorder %s3119, 0
  %p3121 = pneg %p3120
  %3123 = shalt.err (%p3121)

</llo_original>
